<compile_context>
chip_gen: v5e
topology: v5e:2x2
jax: 0.10.0
libtpu: 0.0.40
codegen_flags: <defaults>
</compile_context>

<pallas_src>
import jax
import jax.numpy as jnp
from jax.experimental import pallas as pl
from jax.experimental.pallas import tpu as pltpu

# logical sizes (match the PyTorch module)
D_IN = 784
D_H = 400
D_Z = 20

# lane-aligned (multiple-of-128) padded sizes used inside the kernel
D_IN_P = 896              # 7 * 128
D_H_P = 512               # 4 * 128
D_Z_P = 128               # 1 * 128
D_HEAD_P = 2 * D_Z_P      # fused fc21|fc22 output: lanes [0,128)=mu, [128,256)=logvar


def _round_up(x, m):
    return (x + m - 1) // m * m


def beta_vae_kernel(x_ref, eps_ref,
                    w1_ref, b1_ref,
                    whead_ref, bhead_ref,
                    w3_ref, b3_ref,
                    w4_ref, b4_ref,
                    recon_ref, mu_ref, logvar_ref):
    x = x_ref[...]                                                    # (TB, 896) bf16
    cdt = x.dtype

    # fc1 + relu (f32 accumulation on the MXU)
    h1 = jnp.dot(x, w1_ref[...], preferred_element_type=jnp.float32) + b1_ref[...]
    h1 = jnp.maximum(h1, 0.0).astype(cdt)                             # (TB, 512)

    # fused fc21|fc22 head: one MXU pass, split at a 128-lane (vreg) boundary
    head = jnp.dot(h1, whead_ref[...], preferred_element_type=jnp.float32) + bhead_ref[...]
    mu = head[:, :D_Z_P]                                              # (TB, 128) f32
    logvar = head[:, D_Z_P:]                                          # (TB, 128) f32

    # reparameterize (training branch): z = eps * exp(0.5*logvar) + mu, eps ~ U[0,1).
    # Padded columns have eps = mu = logvar = 0, so z = 0 exactly there (exp -> EUP slot).
    z = eps_ref[...] * jnp.exp(0.5 * logvar) + mu                     # (TB, 128) f32

    # decode: fc3 + relu, fc4 + sigmoid
    h3 = jnp.dot(z.astype(cdt), w3_ref[...], preferred_element_type=jnp.float32) + b3_ref[...]
    h3 = jnp.maximum(h3, 0.0).astype(cdt)                             # (TB, 512)
    logits = jnp.dot(h3, w4_ref[...], preferred_element_type=jnp.float32) + b4_ref[...]

    recon_ref[...] = jax.nn.sigmoid(logits)                           # (TB, 896) f32
    mu_ref[...] = mu
    logvar_ref[...] = logvar


def init_params(key):
    """nn.Linear-style init (U(-1/sqrt(fan_in), 1/sqrt(fan_in))).
    Weights stored as (in_features, out_features); biases as (1, out_features)."""
    def linear(k, fan_in, fan_out):
        kw, kb = jax.random.split(k)
        bound = 1.0 / jnp.sqrt(jnp.float32(fan_in))
        w = jax.random.uniform(kw, (fan_in, fan_out), jnp.float32, -bound, bound)
        b = jax.random.uniform(kb, (1, fan_out), jnp.float32, -bound, bound)
        return w, b

    k1, k21, k22, k3, k4 = jax.random.split(key, 5)
    w1, b1 = linear(k1, D_IN, D_H)      # fc1:  784 -> 400
    w21, b21 = linear(k21, D_H, D_Z)    # fc21: 400 -> 20
    w22, b22 = linear(k22, D_H, D_Z)    # fc22: 400 -> 20
    w3, b3 = linear(k3, D_Z, D_H)       # fc3:  20  -> 400
    w4, b4 = linear(k4, D_H, D_IN)      # fc4:  400 -> 784
    return dict(w1=w1, b1=b1, w21=w21, b21=b21, w22=w22, b22=b22,
                w3=w3, b3=b3, w4=w4, b4=b4)


def pack_params(params, compute_dtype=jnp.bfloat16):
    """Zero-pad every weight to 128-lane-aligned shapes, fuse fc21|fc22 into one head,
    cast weights to the compute dtype (bf16 by default); biases stay f32."""
    def padded(a, shape, dtype):
        out = jnp.zeros(shape, dtype)
        return out.at[:a.shape[0], :a.shape[1]].set(a.astype(dtype))

    w1 = padded(params["w1"], (D_IN_P, D_H_P), compute_dtype)
    b1 = padded(params["b1"], (1, D_H_P), jnp.float32)

    whead = jnp.zeros((D_H_P, D_HEAD_P), compute_dtype)
    whead = whead.at[:D_H, :D_Z].set(params["w21"].astype(compute_dtype))
    whead = whead.at[:D_H, D_Z_P:D_Z_P + D_Z].set(params["w22"].astype(compute_dtype))
    bhead = jnp.zeros((1, D_HEAD_P), jnp.float32)
    bhead = bhead.at[:, :D_Z].set(params["b21"].astype(jnp.float32))
    bhead = bhead.at[:, D_Z_P:D_Z_P + D_Z].set(params["b22"].astype(jnp.float32))

    w3 = padded(params["w3"], (D_Z_P, D_H_P), compute_dtype)
    b3 = padded(params["b3"], (1, D_H_P), jnp.float32)
    w4 = padded(params["w4"], (D_H_P, D_IN_P), compute_dtype)
    b4 = padded(params["b4"], (1, D_IN_P), jnp.float32)
    return dict(w1=w1, b1=b1, whead=whead, bhead=bhead, w3=w3, b3=b3, w4=w4, b4=b4)


def beta_vae_forward(x_nchw, eps, packed, *, tb=256):
    """x_nchw: (B, 1, 28, 28) f32.  eps: (B, 20) f32, U[0,1).
    Returns (recon (B,784), mu (B,20), logvar (B,20)), all f32."""
    B = x_nchw.shape[0]
    compute_dtype = packed["w1"].dtype
    x_flat = x_nchw.reshape(B, D_IN).astype(compute_dtype)            # == torch view(-1,784)

    # Batch tiling: TB rows per grid step (>= 8 sublanes); pad B up to a multiple of TB.
    # tb=256 keeps per-step overhead amortized on v6e/v7x while staying well inside VMEM;
    # small batches shrink the tile automatically.
    block_b = min(tb, _round_up(max(B, 8), 8))
    b_pad = _round_up(B, block_b)

    x_p = jnp.zeros((b_pad, D_IN_P), compute_dtype).at[:B, :D_IN].set(x_flat)
    eps_p = jnp.zeros((b_pad, D_Z_P), jnp.float32).at[:B, :D_Z].set(eps.astype(jnp.float32))

    grid = (b_pad // block_b,)
    batched = lambda i: (i, 0)    # x / eps / outputs: one batch tile per grid step
    resident = lambda i: (0, 0)   # weights & biases: same block every step -> fetched once

    in_specs = [
        pl.BlockSpec((block_b, D_IN_P), batched),     # x
        pl.BlockSpec((block_b, D_Z_P), batched),      # eps
        pl.BlockSpec((D_IN_P, D_H_P), resident),      # w1
        pl.BlockSpec((1, D_H_P), resident),           # b1
        pl.BlockSpec((D_H_P, D_HEAD_P), resident),    # whead (fc21|fc22)
        pl.BlockSpec((1, D_HEAD_P), resident),        # bhead
        pl.BlockSpec((D_Z_P, D_H_P), resident),       # w3
        pl.BlockSpec((1, D_H_P), resident),           # b3
        pl.BlockSpec((D_H_P, D_IN_P), resident),      # w4
        pl.BlockSpec((1, D_IN_P), resident),          # b4
    ]
    out_specs = (
        pl.BlockSpec((block_b, D_IN_P), batched),     # recon
        pl.BlockSpec((block_b, D_Z_P), batched),      # mu
        pl.BlockSpec((block_b, D_Z_P), batched),      # logvar
    )
    out_shape = (
        jax.ShapeDtypeStruct((b_pad, D_IN_P), jnp.float32),
        jax.ShapeDtypeStruct((b_pad, D_Z_P), jnp.float32),
        jax.ShapeDtypeStruct((b_pad, D_Z_P), jnp.float32),
    )

    # Advisory cost estimate so XLA schedules the custom call sensibly.
    itemsize = jnp.dtype(compute_dtype).itemsize
    mm = D_IN_P * D_H_P + D_H_P * D_HEAD_P + D_Z_P * D_H_P + D_H_P * D_IN_P
    weight_bytes = mm * itemsize + (D_H_P + D_HEAD_P + D_H_P + D_IN_P) * 4
    io_bytes = b_pad * (D_IN_P * itemsize + D_Z_P * 4 + (D_IN_P + 2 * D_Z_P) * 4)
    cost = pl.CostEstimate(
        flops=2 * b_pad * mm,
        transcendentals=b_pad * (D_Z_P + D_IN_P),
        bytes_accessed=weight_bytes + io_bytes,
    )

    recon_p, mu_p, logvar_p = pl.pallas_call(
        beta_vae_kernel,
        grid=grid,
        in_specs=in_specs,
        out_specs=out_specs,
        out_shape=out_shape,
        compiler_params=pltpu.CompilerParams(
            dimension_semantics=("parallel",),        # batch tiles split across TCs on v7x
            vmem_limit_bytes=64 * 1024 * 1024,
        ),
        cost_estimate=cost,
    )(x_p, eps_p,
      packed["w1"], packed["b1"], packed["whead"], packed["bhead"],
      packed["w3"], packed["b3"], packed["w4"], packed["b4"])

    # slice the batch / lane padding back off (padded mu/logvar cols are exactly 0 and
    # never reach real outputs)
    return recon_p[:B, :D_IN], mu_p[:B, :D_Z], logvar_p[:B, :D_Z]


def reference_forward(x_nchw, eps, p):
    """Pure-JAX f32 reference of the same forward pass."""
    x = x_nchw.reshape(x_nchw.shape[0], D_IN)
    h1 = jax.nn.relu(x @ p["w1"] + p["b1"])
    mu = h1 @ p["w21"] + p["b21"]
    logvar = h1 @ p["w22"] + p["b22"]
    z = eps * jnp.exp(0.5 * logvar) + mu
    h3 = jax.nn.relu(z @ p["w3"] + p["b3"])
    recon = jax.nn.sigmoid(h3 @ p["w4"] + p["b4"])
    return recon, mu, logvar


if __name__ == "__main__":
    key = jax.random.PRNGKey(0)
    kp, kx, ke = jax.random.split(key, 3)

    B = 2
    params = init_params(kp)
    x = jax.random.uniform(kx, (B, 1, 28, 28), jnp.float32)   # MNIST-like NCHW input
    eps = jax.random.uniform(ke, (B, D_Z), jnp.float32)       # torch.rand_like -> U[0,1)

    packed = pack_params(params, compute_dtype=jnp.bfloat16)
    recon, mu, logvar = jax.jit(beta_vae_forward)(x, eps, packed)
    jax.block_until_ready((recon, mu, logvar))

    # sanity check against the pure-JAX f32 reference (bf16 weights/activations with
    # f32 accumulation -> loose tolerance)
    r_ref, mu_ref, lv_ref = reference_forward(x, eps, params)
    assert recon.shape == (B, D_IN) and mu.shape == (B, D_Z) and logvar.shape == (B, D_Z)
    assert jnp.allclose(recon, r_ref, atol=3e-2), float(jnp.max(jnp.abs(recon - r_ref)))
    assert jnp.allclose(mu, mu_ref, atol=3e-2), float(jnp.max(jnp.abs(mu - mu_ref)))
    assert jnp.allclose(logvar, lv_ref, atol=3e-2), float(jnp.max(jnp.abs(logvar - lv_ref)))

    print("KERNEL_OK")
</pallas_src>

<mosaic_0001>
module attributes {stable_mosaic.version = 11 : i64} {
  func.func @beta_vae_kernel(%arg0: i32, %arg1: memref<8x896xbf16, #tpu.memory_space<vmem>>, %arg2: memref<8x128xf32, #tpu.memory_space<vmem>>, %arg3: memref<896x512xbf16, #tpu.memory_space<vmem>>, %arg4: memref<1x512xf32, #tpu.memory_space<vmem>>, %arg5: memref<512x256xbf16, #tpu.memory_space<vmem>>, %arg6: memref<1x256xf32, #tpu.memory_space<vmem>>, %arg7: memref<128x512xbf16, #tpu.memory_space<vmem>>, %arg8: memref<1x512xf32, #tpu.memory_space<vmem>>, %arg9: memref<512x896xbf16, #tpu.memory_space<vmem>>, %arg10: memref<1x896xf32, #tpu.memory_space<vmem>>, %arg11: memref<8x896xf32, #tpu.memory_space<vmem>>, %arg12: memref<8x128xf32, #tpu.memory_space<vmem>>, %arg13: memref<8x128xf32, #tpu.memory_space<vmem>>) attributes {dimension_semantics = [#tpu.dimension_semantics<parallel>], iteration_bounds = array<i64: 1>, scalar_prefetch = 0 : i64, scratch_operands = 0 : i64, tpu.core_type = #tpu.core_type<tc>, window_params = [{transform_indices = @transform_0, window_bounds = array<i64: 8, 896>}, {transform_indices = @transform_1, window_bounds = array<i64: 8, 128>}, {pipeline_mode = #tpu.pipeline_mode<synchronous>, transform_indices = @transform_2, window_bounds = array<i64: 896, 512>}, {pipeline_mode = #tpu.pipeline_mode<synchronous>, transform_indices = @transform_3, window_bounds = array<i64: 1, 512>}, {pipeline_mode = #tpu.pipeline_mode<synchronous>, transform_indices = @transform_4, window_bounds = array<i64: 512, 256>}, {pipeline_mode = #tpu.pipeline_mode<synchronous>, transform_indices = @transform_5, window_bounds = array<i64: 1, 256>}, {pipeline_mode = #tpu.pipeline_mode<synchronous>, transform_indices = @transform_6, window_bounds = array<i64: 128, 512>}, {pipeline_mode = #tpu.pipeline_mode<synchronous>, transform_indices = @transform_7, window_bounds = array<i64: 1, 512>}, {pipeline_mode = #tpu.pipeline_mode<synchronous>, transform_indices = @transform_8, window_bounds = array<i64: 512, 896>}, {pipeline_mode = #tpu.pipeline_mode<synchronous>, transform_indices = @transform_9, window_bounds = array<i64: 1, 896>}, {transform_indices = @transform_10, window_bounds = array<i64: 8, 896>}, {transform_indices = @transform_11, window_bounds = array<i64: 8, 128>}, {transform_indices = @transform_12, window_bounds = array<i64: 8, 128>}]} {
    %c0 = arith.constant 0 : index
    %c0_0 = arith.constant 0 : index
    %0 = vector.load %arg1[%c0, %c0_0] : memref<8x896xbf16, #tpu.memory_space<vmem>>, vector<8x896xbf16>
    %c0_1 = arith.constant 0 : index
    %c0_2 = arith.constant 0 : index
    %1 = vector.load %arg3[%c0_1, %c0_2] : memref<896x512xbf16, #tpu.memory_space<vmem>>, vector<896x512xbf16>
    %cst = arith.constant dense<0.000000e+00> : vector<8x512xf32>
    %2 = tpu.matmul %0, %1, %cst {dimension_numbers = #tpu.dot_dimension_numbers<[1], [0], [0], [1], [0, 0, 1, 1], [], []>} : vector<8x896xbf16>, vector<896x512xbf16>, vector<8x512xf32> -> vector<8x512xf32>
    %c0_3 = arith.constant 0 : index
    %c0_4 = arith.constant 0 : index
    %3 = vector.load %arg4[%c0_3, %c0_4] : memref<1x512xf32, #tpu.memory_space<vmem>>, vector<1x512xf32>
    %4 = vector.broadcast %3 : vector<1x512xf32> to vector<8x512xf32>
    %5 = arith.addf %2, %4 : vector<8x512xf32>
    %cst_5 = arith.constant 0.000000e+00 : f32
    %6 = vector.broadcast %cst_5 : f32 to vector<8x512xf32>
    %7 = arith.maximumf %5, %6 : vector<8x512xf32>
    %8 = arith.truncf %7 : vector<8x512xf32> to vector<8x512xbf16>
    %c0_6 = arith.constant 0 : index
    %c0_7 = arith.constant 0 : index
    %9 = vector.load %arg5[%c0_6, %c0_7] : memref<512x256xbf16, #tpu.memory_space<vmem>>, vector<512x256xbf16>
    %cst_8 = arith.constant dense<0.000000e+00> : vector<8x256xf32>
    %10 = tpu.matmul %8, %9, %cst_8 {dimension_numbers = #tpu.dot_dimension_numbers<[1], [0], [0], [1], [0, 0, 1, 1], [], []>} : vector<8x512xbf16>, vector<512x256xbf16>, vector<8x256xf32> -> vector<8x256xf32>
    %c0_9 = arith.constant 0 : index
    %c0_10 = arith.constant 0 : index
    %11 = vector.load %arg6[%c0_9, %c0_10] : memref<1x256xf32, #tpu.memory_space<vmem>>, vector<1x256xf32>
    %12 = vector.broadcast %11 : vector<1x256xf32> to vector<8x256xf32>
    %13 = arith.addf %10, %12 : vector<8x256xf32>
    %14 = vector.extract_strided_slice %13 {offsets = [0, 0], sizes = [8, 128], strides = [1, 1]} : vector<8x256xf32> to vector<8x128xf32>
    %15 = vector.extract_strided_slice %13 {offsets = [0, 128], sizes = [8, 128], strides = [1, 1]} : vector<8x256xf32> to vector<8x128xf32>
    %c0_11 = arith.constant 0 : index
    %c0_12 = arith.constant 0 : index
    %16 = vector.load %arg2[%c0_11, %c0_12] : memref<8x128xf32, #tpu.memory_space<vmem>>, vector<8x128xf32>
    %cst_13 = arith.constant 5.000000e-01 : f32
    %17 = vector.broadcast %cst_13 : f32 to vector<8x128xf32>
    %18 = arith.mulf %17, %15 : vector<8x128xf32>
    %19 = math.exp %18 : vector<8x128xf32>
    %20 = arith.mulf %16, %19 : vector<8x128xf32>
    %21 = arith.addf %20, %14 : vector<8x128xf32>
    %22 = arith.truncf %21 : vector<8x128xf32> to vector<8x128xbf16>
    %c0_14 = arith.constant 0 : index
    %c0_15 = arith.constant 0 : index
    %23 = vector.load %arg7[%c0_14, %c0_15] : memref<128x512xbf16, #tpu.memory_space<vmem>>, vector<128x512xbf16>
    %cst_16 = arith.constant dense<0.000000e+00> : vector<8x512xf32>
    %24 = tpu.matmul %22, %23, %cst_16 {dimension_numbers = #tpu.dot_dimension_numbers<[1], [0], [0], [1], [0, 0, 1, 1], [], []>} : vector<8x128xbf16>, vector<128x512xbf16>, vector<8x512xf32> -> vector<8x512xf32>
    %c0_17 = arith.constant 0 : index
    %c0_18 = arith.constant 0 : index
    %25 = vector.load %arg8[%c0_17, %c0_18] : memref<1x512xf32, #tpu.memory_space<vmem>>, vector<1x512xf32>
    %26 = vector.broadcast %25 : vector<1x512xf32> to vector<8x512xf32>
    %27 = arith.addf %24, %26 : vector<8x512xf32>
    %cst_19 = arith.constant 0.000000e+00 : f32
    %28 = vector.broadcast %cst_19 : f32 to vector<8x512xf32>
    %29 = arith.maximumf %27, %28 : vector<8x512xf32>
    %30 = arith.truncf %29 : vector<8x512xf32> to vector<8x512xbf16>
    %c0_20 = arith.constant 0 : index
    %c0_21 = arith.constant 0 : index
    %31 = vector.load %arg9[%c0_20, %c0_21] : memref<512x896xbf16, #tpu.memory_space<vmem>>, vector<512x896xbf16>
    %cst_22 = arith.constant dense<0.000000e+00> : vector<8x896xf32>
    %32 = tpu.matmul %30, %31, %cst_22 {dimension_numbers = #tpu.dot_dimension_numbers<[1], [0], [0], [1], [0, 0, 1, 1], [], []>} : vector<8x512xbf16>, vector<512x896xbf16>, vector<8x896xf32> -> vector<8x896xf32>
    %c0_23 = arith.constant 0 : index
    %c0_24 = arith.constant 0 : index
    %33 = vector.load %arg10[%c0_23, %c0_24] : memref<1x896xf32, #tpu.memory_space<vmem>>, vector<1x896xf32>
    %34 = vector.broadcast %33 : vector<1x896xf32> to vector<8x896xf32>
    %35 = arith.addf %32, %34 : vector<8x896xf32>
    %36 = arith.negf %35 : vector<8x896xf32>
    %37 = math.exp %36 : vector<8x896xf32>
    %cst_25 = arith.constant 1.000000e+00 : f32
    %38 = vector.broadcast %cst_25 : f32 to vector<8x896xf32>
    %39 = arith.addf %38, %37 : vector<8x896xf32>
    %40 = arith.divf %38, %39 : vector<8x896xf32>
    %c0_26 = arith.constant 0 : index
    %c0_27 = arith.constant 0 : index
    %41 = vector.load %arg11[%c0_26, %c0_27] : memref<8x896xf32, #tpu.memory_space<vmem>>, vector<8x896xf32>
    tpu.vector_store %arg11[%c0_26, %c0_27], %40 {strides = array<i32>} : memref<8x896xf32, #tpu.memory_space<vmem>>, vector<8x896xf32>,
    %c0_28 = arith.constant 0 : index
    %c0_29 = arith.constant 0 : index
    %42 = vector.load %arg12[%c0_28, %c0_29] : memref<8x128xf32, #tpu.memory_space<vmem>>, vector<8x128xf32>
    tpu.vector_store %arg12[%c0_28, %c0_29], %14 {strides = array<i32>} : memref<8x128xf32, #tpu.memory_space<vmem>>, vector<8x128xf32>,
    %c0_30 = arith.constant 0 : index
    %c0_31 = arith.constant 0 : index
    %43 = vector.load %arg13[%c0_30, %c0_31] : memref<8x128xf32, #tpu.memory_space<vmem>>, vector<8x128xf32>
    tpu.vector_store %arg13[%c0_30, %c0_31], %15 {strides = array<i32>} : memref<8x128xf32, #tpu.memory_space<vmem>>, vector<8x128xf32>,
    return
  }
  func.func @transform_0(%arg0: i32) -> (i32, i32) {
    %c0_i32 = arith.constant 0 : i32
    %c0_i32_0 = arith.constant 0 : i32
    return %arg0, %c0_i32 : i32, i32
  }
  func.func @transform_1(%arg0: i32) -> (i32, i32) {
    %c0_i32 = arith.constant 0 : i32
    %c0_i32_0 = arith.constant 0 : i32
    return %arg0, %c0_i32 : i32, i32
  }
  func.func @transform_2(%arg0: i32) -> (i32, i32) {
    %c0_i32 = arith.constant 0 : i32
    %c0_i32_0 = arith.constant 0 : i32
    %c0_i32_1 = arith.constant 0 : i32
    return %c0_i32, %c0_i32_0 : i32, i32
  }
  func.func @transform_3(%arg0: i32) -> (i32, i32) {
    %c0_i32 = arith.constant 0 : i32
    %c0_i32_0 = arith.constant 0 : i32
    %c0_i32_1 = arith.constant 0 : i32
    return %c0_i32, %c0_i32_0 : i32, i32
  }
  func.func @transform_4(%arg0: i32) -> (i32, i32) {
    %c0_i32 = arith.constant 0 : i32
    %c0_i32_0 = arith.constant 0 : i32
    %c0_i32_1 = arith.constant 0 : i32
    return %c0_i32, %c0_i32_0 : i32, i32
  }
  func.func @transform_5(%arg0: i32) -> (i32, i32) {
    %c0_i32 = arith.constant 0 : i32
    %c0_i32_0 = arith.constant 0 : i32
    %c0_i32_1 = arith.constant 0 : i32
    return %c0_i32, %c0_i32_0 : i32, i32
  }
  func.func @transform_6(%arg0: i32) -> (i32, i32) {
    %c0_i32 = arith.constant 0 : i32
    %c0_i32_0 = arith.constant 0 : i32
    %c0_i32_1 = arith.constant 0 : i32
    return %c0_i32, %c0_i32_0 : i32, i32
  }
  func.func @transform_7(%arg0: i32) -> (i32, i32) {
    %c0_i32 = arith.constant 0 : i32
    %c0_i32_0 = arith.constant 0 : i32
    %c0_i32_1 = arith.constant 0 : i32
    return %c0_i32, %c0_i32_0 : i32, i32
  }
  func.func @transform_8(%arg0: i32) -> (i32, i32) {
    %c0_i32 = arith.constant 0 : i32
    %c0_i32_0 = arith.constant 0 : i32
    %c0_i32_1 = arith.constant 0 : i32
    return %c0_i32, %c0_i32_0 : i32, i32
  }
  func.func @transform_9(%arg0: i32) -> (i32, i32) {
    %c0_i32 = arith.constant 0 : i32
    %c0_i32_0 = arith.constant 0 : i32
    %c0_i32_1 = arith.constant 0 : i32
    return %c0_i32, %c0_i32_0 : i32, i32
  }
  func.func @transform_10(%arg0: i32) -> (i32, i32) {
    %c0_i32 = arith.constant 0 : i32
    %c0_i32_0 = arith.constant 0 : i32
    return %arg0, %c0_i32 : i32, i32
  }
  func.func @transform_11(%arg0: i32) -> (i32, i32) {
    %c0_i32 = arith.constant 0 : i32
    %c0_i32_0 = arith.constant 0 : i32
    return %arg0, %c0_i32 : i32, i32
  }
  func.func @transform_12(%arg0: i32) -> (i32, i32) {
    %c0_i32 = arith.constant 0 : i32
    %c0_i32_0 = arith.constant 0 : i32
    return %arg0, %c0_i32 : i32, i32
  }
}

</mosaic_0001>

<llo_original>
// kernel: beta_vae_forward.1
$region0: #{beta_vae_forward.1}
  #allocation0 [shape = 'u32[]', space=smem, size = 0x4, offset = 0x4, fixed_abs, tag = 'smem constant byte address 0x4 - core index']
  #allocation1 [shape = 'u32[72,128]{1,0:T(1,128)}', space=vmem, size = 0x9000, scoped, tag = 'internal scratch']
  %s0 = inlined_call_operand.vmem [shape: bf16[8,896], index: 0, kind: input, shape index: {}]
  %s1 = inlined_call_operand.vmem [shape: f32[8,128], index: 1, kind: input, shape index: {}]
  %s2 = inlined_call_operand.hbm [shape: bf16[896,512], index: 2, kind: input, shape index: {}]
  %s3 = inlined_call_operand.vmem [shape: f32[1,512], index: 3, kind: input, shape index: {}]
  %s4 = inlined_call_operand.hbm [shape: bf16[512,256], index: 4, kind: input, shape index: {}]
  %s5 = inlined_call_operand.vmem [shape: f32[1,256], index: 5, kind: input, shape index: {}]
  %s6 = inlined_call_operand.hbm [shape: bf16[128,512], index: 6, kind: input, shape index: {}]
  %s7 = inlined_call_operand.vmem [shape: f32[1,512], index: 7, kind: input, shape index: {}]
  %s8 = inlined_call_operand.hbm [shape: bf16[512,896], index: 8, kind: input, shape index: {}]
  %s9 = inlined_call_operand.vmem [shape: f32[1,896], index: 9, kind: input, shape index: {}]
  %s10 = inlined_call_operand.vmem [shape: f32[8,896], index: 10, kind: output, shape index: {0}]
  %s11 = inlined_call_operand.vmem [shape: f32[8,128], index: 11, kind: output, shape index: {1}]
  %s12 = inlined_call_operand.vmem [shape: f32[8,128], index: 12, kind: output, shape index: {2}]
  %13 = xla_tuple %s10, %s11, %s12
  %s14 = sld [smem:[#allocation0]]
  $region82: #{beta_vae_forward.1} parent=0
    _
  %s16 = ssub.s32 1, %s14
  %s17 = scalar_select 0, %s16, %s14
  $region1: #{beta_vae_forward.1} parent=0
    #allocation2 [shape = 'u8[917504]{0}', space=vmem, size = 0xe0000, scoped, tag = 'input window, operand 2, single buffered']
    #allocation3 [shape = 's32[1]{0}', space=sflag, size = 0x4, scoped, tag = 'scoped memory for beta_vae_forward.1']
    #allocation4 [shape = 'u8[262144]{0}', space=vmem, size = 0x40000, scoped, tag = 'input window, operand 4, single buffered']
    #allocation5 [shape = 's32[1]{0}', space=sflag, size = 0x4, scoped, tag = 'scoped memory for beta_vae_forward.1']
    #allocation6 [shape = 'u8[131072]{0}', space=vmem, size = 0x20000, scoped, tag = 'input window, operand 6, single buffered']
    #allocation7 [shape = 'u8[917504]{0}', space=vmem, size = 0xe0000, scoped, tag = 'input window, operand 8, single buffered']
    #allocation8 [shape = 's32[1]{0}', space=sflag, size = 0x4, scoped, tag = 'scoped memory for beta_vae_forward.1']
    %18 = vsyncpa [#allocation3], 0
    %19 = vsyncpa [#allocation5], 0
    %20 = vsyncpa [#allocation8], 0
    // Predicated region
    $region2: #{beta_vae_forward.1} parent=1 // pred_check
      _
    $region3: #{beta_vae_forward.1} parent=1 // pred_check_branch
      %22 = sbr.rel (0) target = $region5
    $region4: #{beta_vae_forward.1} parent=1 // pred_region
      _
    $region5: #{beta_vae_forward.1} parent=1 // pred_fallthru
      _
    // Predicated region
    $region6: #{beta_vae_forward.1} parent=1 // pred_check
      _
    $region7: #{beta_vae_forward.1} parent=1 // pred_check_branch
      %24 = sbr.rel (0) target = $region9
    $region8: #{beta_vae_forward.1} parent=1 // pred_region
      _
    $region9: #{beta_vae_forward.1} parent=1 // pred_fallthru
      _
    // Predicated region
    $region10: #{beta_vae_forward.1} parent=1 // pred_check
      _
    $region11: #{beta_vae_forward.1} parent=1 // pred_check_branch
      %26 = sbr.rel (0) target = $region13
    $region12: #{beta_vae_forward.1} parent=1 // pred_region
      %28 = vsyncadd [#allocation3], 0
      %s29 = sshll.u32 %s2, 4
      %s30 = int_to_ptr.hbm [resolvable:$true] %s29
      %s31 = sshll.u32 [#allocation2], 4
      %s32 = int_to_ptr.vmem [resolvable:$true] %s31
      %37 = dma.hbm_to_vmem [thread:$0]  %s30, 28672, %s32, [#allocation3], 256, 256, 16
    $region13: #{beta_vae_forward.1} parent=1 // pred_fallthru
      _
    // Predicated region
    $region14: #{beta_vae_forward.1} parent=1 // pred_check
      _
    $region15: #{beta_vae_forward.1} parent=1 // pred_check_branch
      %39 = sbr.rel (0) target = $region17
    $region16: #{beta_vae_forward.1} parent=1 // pred_region
      _
    $region17: #{beta_vae_forward.1} parent=1 // pred_fallthru
      _
    // Predicated region
    $region18: #{beta_vae_forward.1} parent=1 // pred_check
      _
    $region19: #{beta_vae_forward.1} parent=1 // pred_check_branch
      %41 = sbr.rel (0) target = $region21
    $region20: #{beta_vae_forward.1} parent=1 // pred_region
      %43 = vsyncadd [#allocation5], 0
      %s44 = sshll.u32 %s4, 4
      %s45 = int_to_ptr.hbm [resolvable:$true] %s44
      %s46 = sshll.u32 [#allocation4], 4
      %s47 = int_to_ptr.vmem [resolvable:$true] %s46
      %52 = dma.hbm_to_vmem [thread:$0]  %s45, 8192, %s47, [#allocation5], 128, 128, 8
    $region21: #{beta_vae_forward.1} parent=1 // pred_fallthru
      _
    // Predicated region
    $region22: #{beta_vae_forward.1} parent=1 // pred_check
      _
    $region23: #{beta_vae_forward.1} parent=1 // pred_check_branch
      %54 = sbr.rel (0) target = $region25
    $region24: #{beta_vae_forward.1} parent=1 // pred_region
      _
    $region25: #{beta_vae_forward.1} parent=1 // pred_fallthru
      _
    // Predicated region
    $region26: #{beta_vae_forward.1} parent=1 // pred_check
      _
    $region27: #{beta_vae_forward.1} parent=1 // pred_check_branch
      %56 = sbr.rel (0) target = $region29
    $region28: #{beta_vae_forward.1} parent=1 // pred_region
      %58 = vsyncadd [#allocation5], 0
      %s59 = sshll.u32 %s6, 4
      %s60 = int_to_ptr.hbm [resolvable:$true] %s59
      %s61 = sshll.u32 [#allocation6], 4
      %s62 = int_to_ptr.vmem [resolvable:$true] %s61
      %67 = dma.hbm_to_vmem [thread:$0]  %s60, 4096, %s62, [#allocation5], 256, 256, 16
    $region29: #{beta_vae_forward.1} parent=1 // pred_fallthru
      _
    // Predicated region
    $region30: #{beta_vae_forward.1} parent=1 // pred_check
      _
    $region31: #{beta_vae_forward.1} parent=1 // pred_check_branch
      %69 = sbr.rel (0) target = $region33
    $region32: #{beta_vae_forward.1} parent=1 // pred_region
      _
    $region33: #{beta_vae_forward.1} parent=1 // pred_fallthru
      _
    // Predicated region
    $region34: #{beta_vae_forward.1} parent=1 // pred_check
      _
    $region35: #{beta_vae_forward.1} parent=1 // pred_check_branch
      %71 = sbr.rel (0) target = $region37
    $region36: #{beta_vae_forward.1} parent=1 // pred_region
      %73 = vsyncadd [#allocation8], 0
      %s74 = sshll.u32 %s8, 4
      %s75 = int_to_ptr.hbm [resolvable:$true] %s74
      %s76 = sshll.u32 [#allocation7], 4
      %s77 = int_to_ptr.vmem [resolvable:$true] %s76
      %82 = dma.hbm_to_vmem [thread:$0]  %s75, 28672, %s77, [#allocation8], 448, 448, 28
    $region37: #{beta_vae_forward.1} parent=1 // pred_fallthru
      _
    // Predicated region
    $region38: #{beta_vae_forward.1} parent=1 // pred_check
      _
    $region39: #{beta_vae_forward.1} parent=1 // pred_check_branch
      %84 = sbr.rel (0) target = $region41
    $region40: #{beta_vae_forward.1} parent=1 // pred_region
      _
    $region41: #{beta_vae_forward.1} parent=1 // pred_fallthru
      _
    // Predicated region
    $region42: #{beta_vae_forward.1} parent=1 // pred_check
      _
    $region43: #{beta_vae_forward.1} parent=1 // pred_check_branch
      %86 = sbr.rel (0) target = $region45
    $region44: #{beta_vae_forward.1} parent=1 // pred_region
      %88 = dma.done [#allocation3], 28672
    $region45: #{beta_vae_forward.1} parent=1 // pred_fallthru
      _
    // Predicated region
    $region46: #{beta_vae_forward.1} parent=1 // pred_check
      _
    $region47: #{beta_vae_forward.1} parent=1 // pred_check_branch
      %90 = sbr.rel (0) target = $region49
    $region48: #{beta_vae_forward.1} parent=1 // pred_region
      %92 = dma.done [#allocation5], 8192
    $region49: #{beta_vae_forward.1} parent=1 // pred_fallthru
      _
    // Predicated region
    $region50: #{beta_vae_forward.1} parent=1 // pred_check
      _
    $region51: #{beta_vae_forward.1} parent=1 // pred_check_branch
      %94 = sbr.rel (0) target = $region53
    $region52: #{beta_vae_forward.1} parent=1 // pred_region
      %96 = dma.done [#allocation5], 4096
    $region53: #{beta_vae_forward.1} parent=1 // pred_fallthru
      _
    // Predicated region
    $region54: #{beta_vae_forward.1} parent=1 // pred_check
      _
    $region55: #{beta_vae_forward.1} parent=1 // pred_check_branch
      %98 = sbr.rel (0) target = $region57
    $region56: #{beta_vae_forward.1} parent=1 // pred_region
      %100 = dma.done [#allocation8], 28672
    $region57: #{beta_vae_forward.1} parent=1 // pred_fallthru
      _
    %v101 = vld [vmem:[%s0] sm:$0xff]
    %v102 = vld [vmem:[%s0 + $0x8] sm:$0xff]
    %v103 = vld [vmem:[%s0 + $0x10] sm:$0xff]
    %v104 = vld [vmem:[%s0 + $0x18] sm:$0xf]
    %v105 = vld [vmem:[#allocation2] sm:$0xff]
    %v106 = vld [vmem:[#allocation2 + $0x8] sm:$0xff]
    %v107 = vld [vmem:[#allocation2 + $0x10] sm:$0xff]
    %v108 = vld [vmem:[#allocation2 + $0x18] sm:$0xff]
    %v109 = vld [vmem:[#allocation2 + $0x20] sm:$0xff]
    %v110 = vld [vmem:[#allocation2 + $0x28] sm:$0xff]
    %v111 = vld [vmem:[#allocation2 + $0x30] sm:$0xff]
    %v112 = vld [vmem:[#allocation2 + $0x38] sm:$0xff]
    %v113 = vld [vmem:[#allocation2 + $0x40] sm:$0xff]
    %v114 = vld [vmem:[#allocation2 + $0x48] sm:$0xff]
    %v115 = vld [vmem:[#allocation2 + $0x50] sm:$0xff]
    %v116 = vld [vmem:[#allocation2 + $0x58] sm:$0xff]
    %v117 = vld [vmem:[#allocation2 + $0x60] sm:$0xff]
    %v118 = vld [vmem:[#allocation2 + $0x68] sm:$0xff]
    %v119 = vld [vmem:[#allocation2 + $0x70] sm:$0xff]
    %v120 = vld [vmem:[#allocation2 + $0x78] sm:$0xff]
    %v121 = vld [vmem:[#allocation2 + $0x80] sm:$0xff]
    %v122 = vld [vmem:[#allocation2 + $0x88] sm:$0xff]
    %v123 = vld [vmem:[#allocation2 + $0x90] sm:$0xff]
    %v124 = vld [vmem:[#allocation2 + $0x98] sm:$0xff]
    %v125 = vld [vmem:[#allocation2 + $0xa0] sm:$0xff]
    %v126 = vld [vmem:[#allocation2 + $0xa8] sm:$0xff]
    %v127 = vld [vmem:[#allocation2 + $0xb0] sm:$0xff]
    %v128 = vld [vmem:[#allocation2 + $0xb8] sm:$0xff]
    %v129 = vld [vmem:[#allocation2 + $0xc0] sm:$0xff]
    %v130 = vld [vmem:[#allocation2 + $0xc8] sm:$0xff]
    %v131 = vld [vmem:[#allocation2 + $0xd0] sm:$0xff]
    %v132 = vld [vmem:[#allocation2 + $0xd8] sm:$0xff]
    %v133 = vld [vmem:[#allocation2 + $0xe0] sm:$0xff]
    %v134 = vld [vmem:[#allocation2 + $0xe8] sm:$0xff]
    %v135 = vld [vmem:[#allocation2 + $0xf0] sm:$0xff]
    %v136 = vld [vmem:[#allocation2 + $0xf8] sm:$0xff]
    %v137 = vld [vmem:[#allocation2 + $0x100] sm:$0xff]
    %v138 = vld [vmem:[#allocation2 + $0x108] sm:$0xff]
    %v139 = vld [vmem:[#allocation2 + $0x110] sm:$0xff]
    %v140 = vld [vmem:[#allocation2 + $0x118] sm:$0xff]
    %v141 = vld [vmem:[#allocation2 + $0x120] sm:$0xff]
    %v142 = vld [vmem:[#allocation2 + $0x128] sm:$0xff]
    %v143 = vld [vmem:[#allocation2 + $0x130] sm:$0xff]
    %v144 = vld [vmem:[#allocation2 + $0x138] sm:$0xff]
    %v145 = vld [vmem:[#allocation2 + $0x140] sm:$0xff]
    %v146 = vld [vmem:[#allocation2 + $0x148] sm:$0xff]
    %v147 = vld [vmem:[#allocation2 + $0x150] sm:$0xff]
    %v148 = vld [vmem:[#allocation2 + $0x158] sm:$0xff]
    %v149 = vld [vmem:[#allocation2 + $0x160] sm:$0xff]
    %v150 = vld [vmem:[#allocation2 + $0x168] sm:$0xff]
    %v151 = vld [vmem:[#allocation2 + $0x170] sm:$0xff]
    %v152 = vld [vmem:[#allocation2 + $0x178] sm:$0xff]
    %v153 = vld [vmem:[#allocation2 + $0x180] sm:$0xff]
    %v154 = vld [vmem:[#allocation2 + $0x188] sm:$0xff]
    %v155 = vld [vmem:[#allocation2 + $0x190] sm:$0xff]
    %v156 = vld [vmem:[#allocation2 + $0x198] sm:$0xff]
    %v157 = vld [vmem:[#allocation2 + $0x1a0] sm:$0xff]
    %v158 = vld [vmem:[#allocation2 + $0x1a8] sm:$0xff]
    %v159 = vld [vmem:[#allocation2 + $0x1b0] sm:$0xff]
    %v160 = vld [vmem:[#allocation2 + $0x1b8] sm:$0xff]
    %v161 = vld [vmem:[#allocation2 + $0x1c0] sm:$0xff]
    %v162 = vld [vmem:[#allocation2 + $0x1c8] sm:$0xff]
    %v163 = vld [vmem:[#allocation2 + $0x1d0] sm:$0xff]
    %v164 = vld [vmem:[#allocation2 + $0x1d8] sm:$0xff]
    %v165 = vld [vmem:[#allocation2 + $0x1e0] sm:$0xff]
    %v166 = vld [vmem:[#allocation2 + $0x1e8] sm:$0xff]
    %v167 = vld [vmem:[#allocation2 + $0x1f0] sm:$0xff]
    %v168 = vld [vmem:[#allocation2 + $0x1f8] sm:$0xff]
    %v169 = vld [vmem:[#allocation2 + $0x200] sm:$0xff]
    %v170 = vld [vmem:[#allocation2 + $0x208] sm:$0xff]
    %v171 = vld [vmem:[#allocation2 + $0x210] sm:$0xff]
    %v172 = vld [vmem:[#allocation2 + $0x218] sm:$0xff]
    %v173 = vld [vmem:[#allocation2 + $0x220] sm:$0xff]
    %v174 = vld [vmem:[#allocation2 + $0x228] sm:$0xff]
    %v175 = vld [vmem:[#allocation2 + $0x230] sm:$0xff]
    %v176 = vld [vmem:[#allocation2 + $0x238] sm:$0xff]
    %v177 = vld [vmem:[#allocation2 + $0x240] sm:$0xff]
    %v178 = vld [vmem:[#allocation2 + $0x248] sm:$0xff]
    %v179 = vld [vmem:[#allocation2 + $0x250] sm:$0xff]
    %v180 = vld [vmem:[#allocation2 + $0x258] sm:$0xff]
    %v181 = vld [vmem:[#allocation2 + $0x260] sm:$0xff]
    %v182 = vld [vmem:[#allocation2 + $0x268] sm:$0xff]
    %v183 = vld [vmem:[#allocation2 + $0x270] sm:$0xff]
    %v184 = vld [vmem:[#allocation2 + $0x278] sm:$0xff]
    %v185 = vld [vmem:[#allocation2 + $0x280] sm:$0xff]
    %v186 = vld [vmem:[#allocation2 + $0x288] sm:$0xff]
    %v187 = vld [vmem:[#allocation2 + $0x290] sm:$0xff]
    %v188 = vld [vmem:[#allocation2 + $0x298] sm:$0xff]
    %v189 = vld [vmem:[#allocation2 + $0x2a0] sm:$0xff]
    %v190 = vld [vmem:[#allocation2 + $0x2a8] sm:$0xff]
    %v191 = vld [vmem:[#allocation2 + $0x2b0] sm:$0xff]
    %v192 = vld [vmem:[#allocation2 + $0x2b8] sm:$0xff]
    %v193 = vld [vmem:[#allocation2 + $0x2c0] sm:$0xff]
    %v194 = vld [vmem:[#allocation2 + $0x2c8] sm:$0xff]
    %v195 = vld [vmem:[#allocation2 + $0x2d0] sm:$0xff]
    %v196 = vld [vmem:[#allocation2 + $0x2d8] sm:$0xff]
    %v197 = vld [vmem:[#allocation2 + $0x2e0] sm:$0xff]
    %v198 = vld [vmem:[#allocation2 + $0x2e8] sm:$0xff]
    %v199 = vld [vmem:[#allocation2 + $0x2f0] sm:$0xff]
    %v200 = vld [vmem:[#allocation2 + $0x2f8] sm:$0xff]
    %v201 = vld [vmem:[#allocation2 + $0x300] sm:$0xff]
    %v202 = vld [vmem:[#allocation2 + $0x308] sm:$0xff]
    %v203 = vld [vmem:[#allocation2 + $0x310] sm:$0xff]
    %v204 = vld [vmem:[#allocation2 + $0x318] sm:$0xff]
    %v205 = vld [vmem:[#allocation2 + $0x320] sm:$0xff]
    %v206 = vld [vmem:[#allocation2 + $0x328] sm:$0xff]
    %v207 = vld [vmem:[#allocation2 + $0x330] sm:$0xff]
    %v208 = vld [vmem:[#allocation2 + $0x338] sm:$0xff]
    %v209 = vld [vmem:[#allocation2 + $0x340] sm:$0xff]
    %v210 = vld [vmem:[#allocation2 + $0x348] sm:$0xff]
    %v211 = vld [vmem:[#allocation2 + $0x350] sm:$0xff]
    %v212 = vld [vmem:[#allocation2 + $0x358] sm:$0xff]
    %v213 = vld [vmem:[#allocation2 + $0x360] sm:$0xff]
    %v214 = vld [vmem:[#allocation2 + $0x368] sm:$0xff]
    %v215 = vld [vmem:[#allocation2 + $0x370] sm:$0xff]
    %v216 = vld [vmem:[#allocation2 + $0x378] sm:$0xff]
    %v217 = vld [vmem:[#allocation2 + $0x380] sm:$0xff]
    %v218 = vld [vmem:[#allocation2 + $0x388] sm:$0xff]
    %v219 = vld [vmem:[#allocation2 + $0x390] sm:$0xff]
    %v220 = vld [vmem:[#allocation2 + $0x398] sm:$0xff]
    %v221 = vld [vmem:[#allocation2 + $0x3a0] sm:$0xff]
    %v222 = vld [vmem:[#allocation2 + $0x3a8] sm:$0xff]
    %v223 = vld [vmem:[#allocation2 + $0x3b0] sm:$0xff]
    %v224 = vld [vmem:[#allocation2 + $0x3b8] sm:$0xff]
    %v225 = vld [vmem:[#allocation2 + $0x3c0] sm:$0xff]
    %v226 = vld [vmem:[#allocation2 + $0x3c8] sm:$0xff]
    %v227 = vld [vmem:[#allocation2 + $0x3d0] sm:$0xff]
    %v228 = vld [vmem:[#allocation2 + $0x3d8] sm:$0xff]
    %v229 = vld [vmem:[#allocation2 + $0x3e0] sm:$0xff]
    %v230 = vld [vmem:[#allocation2 + $0x3e8] sm:$0xff]
    %v231 = vld [vmem:[#allocation2 + $0x3f0] sm:$0xff]
    %v232 = vld [vmem:[#allocation2 + $0x3f8] sm:$0xff]
    %v233 = vld [vmem:[#allocation2 + $0x400] sm:$0xff]
    %v234 = vld [vmem:[#allocation2 + $0x408] sm:$0xff]
    %v235 = vld [vmem:[#allocation2 + $0x410] sm:$0xff]
    %v236 = vld [vmem:[#allocation2 + $0x418] sm:$0xff]
    %v237 = vld [vmem:[#allocation2 + $0x420] sm:$0xff]
    %v238 = vld [vmem:[#allocation2 + $0x428] sm:$0xff]
    %v239 = vld [vmem:[#allocation2 + $0x430] sm:$0xff]
    %v240 = vld [vmem:[#allocation2 + $0x438] sm:$0xff]
    %v241 = vld [vmem:[#allocation2 + $0x440] sm:$0xff]
    %v242 = vld [vmem:[#allocation2 + $0x448] sm:$0xff]
    %v243 = vld [vmem:[#allocation2 + $0x450] sm:$0xff]
    %v244 = vld [vmem:[#allocation2 + $0x458] sm:$0xff]
    %v245 = vld [vmem:[#allocation2 + $0x460] sm:$0xff]
    %v246 = vld [vmem:[#allocation2 + $0x468] sm:$0xff]
    %v247 = vld [vmem:[#allocation2 + $0x470] sm:$0xff]
    %v248 = vld [vmem:[#allocation2 + $0x478] sm:$0xff]
    %v249 = vld [vmem:[#allocation2 + $0x480] sm:$0xff]
    %v250 = vld [vmem:[#allocation2 + $0x488] sm:$0xff]
    %v251 = vld [vmem:[#allocation2 + $0x490] sm:$0xff]
    %v252 = vld [vmem:[#allocation2 + $0x498] sm:$0xff]
    %v253 = vld [vmem:[#allocation2 + $0x4a0] sm:$0xff]
    %v254 = vld [vmem:[#allocation2 + $0x4a8] sm:$0xff]
    %v255 = vld [vmem:[#allocation2 + $0x4b0] sm:$0xff]
    %v256 = vld [vmem:[#allocation2 + $0x4b8] sm:$0xff]
    %v257 = vld [vmem:[#allocation2 + $0x4c0] sm:$0xff]
    %v258 = vld [vmem:[#allocation2 + $0x4c8] sm:$0xff]
    %v259 = vld [vmem:[#allocation2 + $0x4d0] sm:$0xff]
    %v260 = vld [vmem:[#allocation2 + $0x4d8] sm:$0xff]
    %v261 = vld [vmem:[#allocation2 + $0x4e0] sm:$0xff]
    %v262 = vld [vmem:[#allocation2 + $0x4e8] sm:$0xff]
    %v263 = vld [vmem:[#allocation2 + $0x4f0] sm:$0xff]
    %v264 = vld [vmem:[#allocation2 + $0x4f8] sm:$0xff]
    %v265 = vld [vmem:[#allocation2 + $0x500] sm:$0xff]
    %v266 = vld [vmem:[#allocation2 + $0x508] sm:$0xff]
    %v267 = vld [vmem:[#allocation2 + $0x510] sm:$0xff]
    %v268 = vld [vmem:[#allocation2 + $0x518] sm:$0xff]
    %v269 = vld [vmem:[#allocation2 + $0x520] sm:$0xff]
    %v270 = vld [vmem:[#allocation2 + $0x528] sm:$0xff]
    %v271 = vld [vmem:[#allocation2 + $0x530] sm:$0xff]
    %v272 = vld [vmem:[#allocation2 + $0x538] sm:$0xff]
    %v273 = vld [vmem:[#allocation2 + $0x540] sm:$0xff]
    %v274 = vld [vmem:[#allocation2 + $0x548] sm:$0xff]
    %v275 = vld [vmem:[#allocation2 + $0x550] sm:$0xff]
    %v276 = vld [vmem:[#allocation2 + $0x558] sm:$0xff]
    %v277 = vld [vmem:[#allocation2 + $0x560] sm:$0xff]
    %v278 = vld [vmem:[#allocation2 + $0x568] sm:$0xff]
    %v279 = vld [vmem:[#allocation2 + $0x570] sm:$0xff]
    %v280 = vld [vmem:[#allocation2 + $0x578] sm:$0xff]
    %v281 = vld [vmem:[#allocation2 + $0x580] sm:$0xff]
    %v282 = vld [vmem:[#allocation2 + $0x588] sm:$0xff]
    %v283 = vld [vmem:[#allocation2 + $0x590] sm:$0xff]
    %v284 = vld [vmem:[#allocation2 + $0x598] sm:$0xff]
    %v285 = vld [vmem:[#allocation2 + $0x5a0] sm:$0xff]
    %v286 = vld [vmem:[#allocation2 + $0x5a8] sm:$0xff]
    %v287 = vld [vmem:[#allocation2 + $0x5b0] sm:$0xff]
    %v288 = vld [vmem:[#allocation2 + $0x5b8] sm:$0xff]
    %v289 = vld [vmem:[#allocation2 + $0x5c0] sm:$0xff]
    %v290 = vld [vmem:[#allocation2 + $0x5c8] sm:$0xff]
    %v291 = vld [vmem:[#allocation2 + $0x5d0] sm:$0xff]
    %v292 = vld [vmem:[#allocation2 + $0x5d8] sm:$0xff]
    %v293 = vld [vmem:[#allocation2 + $0x5e0] sm:$0xff]
    %v294 = vld [vmem:[#allocation2 + $0x5e8] sm:$0xff]
    %v295 = vld [vmem:[#allocation2 + $0x5f0] sm:$0xff]
    %v296 = vld [vmem:[#allocation2 + $0x5f8] sm:$0xff]
    %v297 = vld [vmem:[#allocation2 + $0x600] sm:$0xff]
    %v298 = vld [vmem:[#allocation2 + $0x608] sm:$0xff]
    %v299 = vld [vmem:[#allocation2 + $0x610] sm:$0xff]
    %v300 = vld [vmem:[#allocation2 + $0x618] sm:$0xff]
    %v301 = vld [vmem:[#allocation2 + $0x620] sm:$0xff]
    %v302 = vld [vmem:[#allocation2 + $0x628] sm:$0xff]
    %v303 = vld [vmem:[#allocation2 + $0x630] sm:$0xff]
    %v304 = vld [vmem:[#allocation2 + $0x638] sm:$0xff]
    %v305 = vld [vmem:[#allocation2 + $0x640] sm:$0xff]
    %v306 = vld [vmem:[#allocation2 + $0x648] sm:$0xff]
    %v307 = vld [vmem:[#allocation2 + $0x650] sm:$0xff]
    %v308 = vld [vmem:[#allocation2 + $0x658] sm:$0xff]
    %v309 = vld [vmem:[#allocation2 + $0x660] sm:$0xff]
    %v310 = vld [vmem:[#allocation2 + $0x668] sm:$0xff]
    %v311 = vld [vmem:[#allocation2 + $0x670] sm:$0xff]
    %v312 = vld [vmem:[#allocation2 + $0x678] sm:$0xff]
    %v313 = vld [vmem:[#allocation2 + $0x680] sm:$0xff]
    %v314 = vld [vmem:[#allocation2 + $0x688] sm:$0xff]
    %v315 = vld [vmem:[#allocation2 + $0x690] sm:$0xff]
    %v316 = vld [vmem:[#allocation2 + $0x698] sm:$0xff]
    %v317 = vld [vmem:[#allocation2 + $0x6a0] sm:$0xff]
    %v318 = vld [vmem:[#allocation2 + $0x6a8] sm:$0xff]
    %v319 = vld [vmem:[#allocation2 + $0x6b0] sm:$0xff]
    %v320 = vld [vmem:[#allocation2 + $0x6b8] sm:$0xff]
    %v321 = vld [vmem:[#allocation2 + $0x6c0] sm:$0xff]
    %v322 = vld [vmem:[#allocation2 + $0x6c8] sm:$0xff]
    %v323 = vld [vmem:[#allocation2 + $0x6d0] sm:$0xff]
    %v324 = vld [vmem:[#allocation2 + $0x6d8] sm:$0xff]
    %v325 = vld [vmem:[#allocation2 + $0x6e0] sm:$0xff]
    %v326 = vld [vmem:[#allocation2 + $0x6e8] sm:$0xff]
    %v327 = vld [vmem:[#allocation2 + $0x6f0] sm:$0xff]
    %v328 = vld [vmem:[#allocation2 + $0x6f8] sm:$0xff]
    %v329 = vld [vmem:[%s3] sm:$0xf]
    %v331 = vperm.slane %v329, 0
    %v332 = vperm.slane %v329, 1
    %v333 = vperm.slane %v329, 2
    %v334 = vperm.slane %v329, 3
    %v343 = vunpack.c.l.b16 %v101
    %v344 = vunpack.c.h.b16 %v101
    %v345 = vunpack.c.l.b16 %v102
    %v346 = vunpack.c.h.b16 %v102
    %v347 = vunpack.c.l.b16 %v103
    %v348 = vunpack.c.h.b16 %v103
    %v349 = vunpack.c.l.b16 %v104
    %v350 = vpack.c.b16 %v343, %v343
    %v351 = vpack.c.b16 %v344, %v344
    %v352 = vpack.c.b16 %v345, %v345
    %v353 = vpack.c.b16 %v346, %v346
    %v354 = vpack.c.b16 %v347, %v347
    %v355 = vpack.c.b16 %v348, %v348
    %v356 = vpack.c.b16 %v349, %v349
    %v588 = vunpack.c.l.b16 %v105
    %v589 = vunpack.c.h.b16 %v105
    %v590 = vunpack.c.l.b16 %v106
    %v591 = vunpack.c.h.b16 %v106
    %v592 = vunpack.c.l.b16 %v107
    %v593 = vunpack.c.h.b16 %v107
    %v594 = vunpack.c.l.b16 %v108
    %v595 = vunpack.c.h.b16 %v108
    %v596 = vunpack.c.l.b16 %v109
    %v597 = vunpack.c.h.b16 %v109
    %v598 = vunpack.c.l.b16 %v110
    %v599 = vunpack.c.h.b16 %v110
    %v600 = vunpack.c.l.b16 %v111
    %v601 = vunpack.c.h.b16 %v111
    %v602 = vunpack.c.l.b16 %v112
    %v603 = vunpack.c.h.b16 %v112
    %v604 = vunpack.c.l.b16 %v113
    %v605 = vunpack.c.h.b16 %v113
    %v606 = vunpack.c.l.b16 %v114
    %v607 = vunpack.c.h.b16 %v114
    %v608 = vunpack.c.l.b16 %v115
    %v609 = vunpack.c.h.b16 %v115
    %v610 = vunpack.c.l.b16 %v116
    %v611 = vunpack.c.h.b16 %v116
    %v612 = vunpack.c.l.b16 %v117
    %v613 = vunpack.c.h.b16 %v117
    %v614 = vunpack.c.l.b16 %v118
    %v615 = vunpack.c.h.b16 %v118
    %v616 = vunpack.c.l.b16 %v119
    %v617 = vunpack.c.h.b16 %v119
    %v618 = vunpack.c.l.b16 %v120
    %v619 = vunpack.c.h.b16 %v120
    %v620 = vunpack.c.l.b16 %v121
    %v621 = vunpack.c.h.b16 %v121
    %v622 = vunpack.c.l.b16 %v122
    %v623 = vunpack.c.h.b16 %v122
    %v624 = vunpack.c.l.b16 %v123
    %v625 = vunpack.c.h.b16 %v123
    %v626 = vunpack.c.l.b16 %v124
    %v627 = vunpack.c.h.b16 %v124
    %v628 = vunpack.c.l.b16 %v125
    %v629 = vunpack.c.h.b16 %v125
    %v630 = vunpack.c.l.b16 %v126
    %v631 = vunpack.c.h.b16 %v126
    %v632 = vunpack.c.l.b16 %v127
    %v633 = vunpack.c.h.b16 %v127
    %v634 = vunpack.c.l.b16 %v128
    %v635 = vunpack.c.h.b16 %v128
    %v636 = vunpack.c.l.b16 %v129
    %v637 = vunpack.c.h.b16 %v129
    %v638 = vunpack.c.l.b16 %v130
    %v639 = vunpack.c.h.b16 %v130
    %v640 = vunpack.c.l.b16 %v131
    %v641 = vunpack.c.h.b16 %v131
    %v642 = vunpack.c.l.b16 %v132
    %v643 = vunpack.c.h.b16 %v132
    %v644 = vunpack.c.l.b16 %v133
    %v645 = vunpack.c.h.b16 %v133
    %v646 = vunpack.c.l.b16 %v134
    %v647 = vunpack.c.h.b16 %v134
    %v648 = vunpack.c.l.b16 %v135
    %v649 = vunpack.c.h.b16 %v135
    %v650 = vunpack.c.l.b16 %v136
    %v651 = vunpack.c.h.b16 %v136
    %v652 = vunpack.c.l.b16 %v137
    %v653 = vunpack.c.h.b16 %v137
    %v654 = vunpack.c.l.b16 %v138
    %v655 = vunpack.c.h.b16 %v138
    %v656 = vunpack.c.l.b16 %v139
    %v657 = vunpack.c.h.b16 %v139
    %v658 = vunpack.c.l.b16 %v140
    %v659 = vunpack.c.h.b16 %v140
    %v660 = vunpack.c.l.b16 %v141
    %v661 = vunpack.c.h.b16 %v141
    %v662 = vunpack.c.l.b16 %v142
    %v663 = vunpack.c.h.b16 %v142
    %v664 = vunpack.c.l.b16 %v143
    %v665 = vunpack.c.h.b16 %v143
    %v666 = vunpack.c.l.b16 %v144
    %v667 = vunpack.c.h.b16 %v144
    %v668 = vunpack.c.l.b16 %v145
    %v669 = vunpack.c.h.b16 %v145
    %v670 = vunpack.c.l.b16 %v146
    %v671 = vunpack.c.h.b16 %v146
    %v672 = vunpack.c.l.b16 %v147
    %v673 = vunpack.c.h.b16 %v147
    %v674 = vunpack.c.l.b16 %v148
    %v675 = vunpack.c.h.b16 %v148
    %v676 = vunpack.c.l.b16 %v149
    %v677 = vunpack.c.h.b16 %v149
    %v678 = vunpack.c.l.b16 %v150
    %v679 = vunpack.c.h.b16 %v150
    %v680 = vunpack.c.l.b16 %v151
    %v681 = vunpack.c.h.b16 %v151
    %v682 = vunpack.c.l.b16 %v152
    %v683 = vunpack.c.h.b16 %v152
    %v684 = vunpack.c.l.b16 %v153
    %v685 = vunpack.c.h.b16 %v153
    %v686 = vunpack.c.l.b16 %v154
    %v687 = vunpack.c.h.b16 %v154
    %v688 = vunpack.c.l.b16 %v155
    %v689 = vunpack.c.h.b16 %v155
    %v690 = vunpack.c.l.b16 %v156
    %v691 = vunpack.c.h.b16 %v156
    %v692 = vunpack.c.l.b16 %v157
    %v693 = vunpack.c.h.b16 %v157
    %v694 = vunpack.c.l.b16 %v158
    %v695 = vunpack.c.h.b16 %v158
    %v696 = vunpack.c.l.b16 %v159
    %v697 = vunpack.c.h.b16 %v159
    %v698 = vunpack.c.l.b16 %v160
    %v699 = vunpack.c.h.b16 %v160
    %v700 = vunpack.c.l.b16 %v161
    %v701 = vunpack.c.h.b16 %v161
    %v702 = vunpack.c.l.b16 %v162
    %v703 = vunpack.c.h.b16 %v162
    %v704 = vunpack.c.l.b16 %v163
    %v705 = vunpack.c.h.b16 %v163
    %v706 = vunpack.c.l.b16 %v164
    %v707 = vunpack.c.h.b16 %v164
    %v708 = vunpack.c.l.b16 %v165
    %v709 = vunpack.c.h.b16 %v165
    %v710 = vunpack.c.l.b16 %v166
    %v711 = vunpack.c.h.b16 %v166
    %v712 = vunpack.c.l.b16 %v167
    %v713 = vunpack.c.h.b16 %v167
    %v714 = vunpack.c.l.b16 %v168
    %v715 = vunpack.c.h.b16 %v168
    %v716 = vunpack.c.l.b16 %v169
    %v717 = vunpack.c.h.b16 %v169
    %v718 = vunpack.c.l.b16 %v170
    %v719 = vunpack.c.h.b16 %v170
    %v720 = vunpack.c.l.b16 %v171
    %v721 = vunpack.c.h.b16 %v171
    %v722 = vunpack.c.l.b16 %v172
    %v723 = vunpack.c.h.b16 %v172
    %v724 = vunpack.c.l.b16 %v173
    %v725 = vunpack.c.h.b16 %v173
    %v726 = vunpack.c.l.b16 %v174
    %v727 = vunpack.c.h.b16 %v174
    %v728 = vunpack.c.l.b16 %v175
    %v729 = vunpack.c.h.b16 %v175
    %v730 = vunpack.c.l.b16 %v176
    %v731 = vunpack.c.h.b16 %v176
    %v732 = vunpack.c.l.b16 %v177
    %v733 = vunpack.c.h.b16 %v177
    %v734 = vunpack.c.l.b16 %v178
    %v735 = vunpack.c.h.b16 %v178
    %v736 = vunpack.c.l.b16 %v179
    %v737 = vunpack.c.h.b16 %v179
    %v738 = vunpack.c.l.b16 %v180
    %v739 = vunpack.c.h.b16 %v180
    %v740 = vunpack.c.l.b16 %v181
    %v741 = vunpack.c.h.b16 %v181
    %v742 = vunpack.c.l.b16 %v182
    %v743 = vunpack.c.h.b16 %v182
    %v744 = vunpack.c.l.b16 %v183
    %v745 = vunpack.c.h.b16 %v183
    %v746 = vunpack.c.l.b16 %v184
    %v747 = vunpack.c.h.b16 %v184
    %v748 = vunpack.c.l.b16 %v185
    %v749 = vunpack.c.h.b16 %v185
    %v750 = vunpack.c.l.b16 %v186
    %v751 = vunpack.c.h.b16 %v186
    %v752 = vunpack.c.l.b16 %v187
    %v753 = vunpack.c.h.b16 %v187
    %v754 = vunpack.c.l.b16 %v188
    %v755 = vunpack.c.h.b16 %v188
    %v756 = vunpack.c.l.b16 %v189
    %v757 = vunpack.c.h.b16 %v189
    %v758 = vunpack.c.l.b16 %v190
    %v759 = vunpack.c.h.b16 %v190
    %v760 = vunpack.c.l.b16 %v191
    %v761 = vunpack.c.h.b16 %v191
    %v762 = vunpack.c.l.b16 %v192
    %v763 = vunpack.c.h.b16 %v192
    %v764 = vunpack.c.l.b16 %v193
    %v765 = vunpack.c.h.b16 %v193
    %v766 = vunpack.c.l.b16 %v194
    %v767 = vunpack.c.h.b16 %v194
    %v768 = vunpack.c.l.b16 %v195
    %v769 = vunpack.c.h.b16 %v195
    %v770 = vunpack.c.l.b16 %v196
    %v771 = vunpack.c.h.b16 %v196
    %v772 = vunpack.c.l.b16 %v197
    %v773 = vunpack.c.h.b16 %v197
    %v774 = vunpack.c.l.b16 %v198
    %v775 = vunpack.c.h.b16 %v198
    %v776 = vunpack.c.l.b16 %v199
    %v777 = vunpack.c.h.b16 %v199
    %v778 = vunpack.c.l.b16 %v200
    %v779 = vunpack.c.h.b16 %v200
    %v780 = vunpack.c.l.b16 %v201
    %v781 = vunpack.c.h.b16 %v201
    %v782 = vunpack.c.l.b16 %v202
    %v783 = vunpack.c.h.b16 %v202
    %v784 = vunpack.c.l.b16 %v203
    %v785 = vunpack.c.h.b16 %v203
    %v786 = vunpack.c.l.b16 %v204
    %v787 = vunpack.c.h.b16 %v204
    %v788 = vunpack.c.l.b16 %v205
    %v789 = vunpack.c.h.b16 %v205
    %v790 = vunpack.c.l.b16 %v206
    %v791 = vunpack.c.h.b16 %v206
    %v792 = vunpack.c.l.b16 %v207
    %v793 = vunpack.c.h.b16 %v207
    %v794 = vunpack.c.l.b16 %v208
    %v795 = vunpack.c.h.b16 %v208
    %v796 = vunpack.c.l.b16 %v209
    %v797 = vunpack.c.h.b16 %v209
    %v798 = vunpack.c.l.b16 %v210
    %v799 = vunpack.c.h.b16 %v210
    %v800 = vunpack.c.l.b16 %v211
    %v801 = vunpack.c.h.b16 %v211
    %v802 = vunpack.c.l.b16 %v212
    %v803 = vunpack.c.h.b16 %v212
    %v804 = vunpack.c.l.b16 %v213
    %v805 = vunpack.c.h.b16 %v213
    %v806 = vunpack.c.l.b16 %v214
    %v807 = vunpack.c.h.b16 %v214
    %v808 = vunpack.c.l.b16 %v215
    %v809 = vunpack.c.h.b16 %v215
    %v810 = vunpack.c.l.b16 %v216
    %v811 = vunpack.c.h.b16 %v216
    %v812 = vunpack.c.l.b16 %v217
    %v813 = vunpack.c.h.b16 %v217
    %v814 = vunpack.c.l.b16 %v218
    %v815 = vunpack.c.h.b16 %v218
    %v816 = vunpack.c.l.b16 %v219
    %v817 = vunpack.c.h.b16 %v219
    %v818 = vunpack.c.l.b16 %v220
    %v819 = vunpack.c.h.b16 %v220
    %v820 = vunpack.c.l.b16 %v221
    %v821 = vunpack.c.h.b16 %v221
    %v822 = vunpack.c.l.b16 %v222
    %v823 = vunpack.c.h.b16 %v222
    %v824 = vunpack.c.l.b16 %v223
    %v825 = vunpack.c.h.b16 %v223
    %v826 = vunpack.c.l.b16 %v224
    %v827 = vunpack.c.h.b16 %v224
    %v828 = vunpack.c.l.b16 %v225
    %v829 = vunpack.c.h.b16 %v225
    %v830 = vunpack.c.l.b16 %v226
    %v831 = vunpack.c.h.b16 %v226
    %v832 = vunpack.c.l.b16 %v227
    %v833 = vunpack.c.h.b16 %v227
    %v834 = vunpack.c.l.b16 %v228
    %v835 = vunpack.c.h.b16 %v228
    %v836 = vunpack.c.l.b16 %v229
    %v837 = vunpack.c.h.b16 %v229
    %v838 = vunpack.c.l.b16 %v230
    %v839 = vunpack.c.h.b16 %v230
    %v840 = vunpack.c.l.b16 %v231
    %v841 = vunpack.c.h.b16 %v231
    %v842 = vunpack.c.l.b16 %v232
    %v843 = vunpack.c.h.b16 %v232
    %v844 = vunpack.c.l.b16 %v233
    %v845 = vunpack.c.h.b16 %v233
    %v846 = vunpack.c.l.b16 %v234
    %v847 = vunpack.c.h.b16 %v234
    %v848 = vunpack.c.l.b16 %v235
    %v849 = vunpack.c.h.b16 %v235
    %v850 = vunpack.c.l.b16 %v236
    %v851 = vunpack.c.h.b16 %v236
    %v852 = vunpack.c.l.b16 %v237
    %v853 = vunpack.c.h.b16 %v237
    %v854 = vunpack.c.l.b16 %v238
    %v855 = vunpack.c.h.b16 %v238
    %v856 = vunpack.c.l.b16 %v239
    %v857 = vunpack.c.h.b16 %v239
    %v858 = vunpack.c.l.b16 %v240
    %v859 = vunpack.c.h.b16 %v240
    %v860 = vunpack.c.l.b16 %v241
    %v861 = vunpack.c.h.b16 %v241
    %v862 = vunpack.c.l.b16 %v242
    %v863 = vunpack.c.h.b16 %v242
    %v864 = vunpack.c.l.b16 %v243
    %v865 = vunpack.c.h.b16 %v243
    %v866 = vunpack.c.l.b16 %v244
    %v867 = vunpack.c.h.b16 %v244
    %v868 = vunpack.c.l.b16 %v245
    %v869 = vunpack.c.h.b16 %v245
    %v870 = vunpack.c.l.b16 %v246
    %v871 = vunpack.c.h.b16 %v246
    %v872 = vunpack.c.l.b16 %v247
    %v873 = vunpack.c.h.b16 %v247
    %v874 = vunpack.c.l.b16 %v248
    %v875 = vunpack.c.h.b16 %v248
    %v876 = vunpack.c.l.b16 %v249
    %v877 = vunpack.c.h.b16 %v249
    %v878 = vunpack.c.l.b16 %v250
    %v879 = vunpack.c.h.b16 %v250
    %v880 = vunpack.c.l.b16 %v251
    %v881 = vunpack.c.h.b16 %v251
    %v882 = vunpack.c.l.b16 %v252
    %v883 = vunpack.c.h.b16 %v252
    %v884 = vunpack.c.l.b16 %v253
    %v885 = vunpack.c.h.b16 %v253
    %v886 = vunpack.c.l.b16 %v254
    %v887 = vunpack.c.h.b16 %v254
    %v888 = vunpack.c.l.b16 %v255
    %v889 = vunpack.c.h.b16 %v255
    %v890 = vunpack.c.l.b16 %v256
    %v891 = vunpack.c.h.b16 %v256
    %v892 = vunpack.c.l.b16 %v257
    %v893 = vunpack.c.h.b16 %v257
    %v894 = vunpack.c.l.b16 %v258
    %v895 = vunpack.c.h.b16 %v258
    %v896 = vunpack.c.l.b16 %v259
    %v897 = vunpack.c.h.b16 %v259
    %v898 = vunpack.c.l.b16 %v260
    %v899 = vunpack.c.h.b16 %v260
    %v900 = vunpack.c.l.b16 %v261
    %v901 = vunpack.c.h.b16 %v261
    %v902 = vunpack.c.l.b16 %v262
    %v903 = vunpack.c.h.b16 %v262
    %v904 = vunpack.c.l.b16 %v263
    %v905 = vunpack.c.h.b16 %v263
    %v906 = vunpack.c.l.b16 %v264
    %v907 = vunpack.c.h.b16 %v264
    %v908 = vunpack.c.l.b16 %v265
    %v909 = vunpack.c.h.b16 %v265
    %v910 = vunpack.c.l.b16 %v266
    %v911 = vunpack.c.h.b16 %v266
    %v912 = vunpack.c.l.b16 %v267
    %v913 = vunpack.c.h.b16 %v267
    %v914 = vunpack.c.l.b16 %v268
    %v915 = vunpack.c.h.b16 %v268
    %v916 = vunpack.c.l.b16 %v269
    %v917 = vunpack.c.h.b16 %v269
    %v918 = vunpack.c.l.b16 %v270
    %v919 = vunpack.c.h.b16 %v270
    %v920 = vunpack.c.l.b16 %v271
    %v921 = vunpack.c.h.b16 %v271
    %v922 = vunpack.c.l.b16 %v272
    %v923 = vunpack.c.h.b16 %v272
    %v924 = vunpack.c.l.b16 %v273
    %v925 = vunpack.c.h.b16 %v273
    %v926 = vunpack.c.l.b16 %v274
    %v927 = vunpack.c.h.b16 %v274
    %v928 = vunpack.c.l.b16 %v275
    %v929 = vunpack.c.h.b16 %v275
    %v930 = vunpack.c.l.b16 %v276
    %v931 = vunpack.c.h.b16 %v276
    %v932 = vunpack.c.l.b16 %v277
    %v933 = vunpack.c.h.b16 %v277
    %v934 = vunpack.c.l.b16 %v278
    %v935 = vunpack.c.h.b16 %v278
    %v936 = vunpack.c.l.b16 %v279
    %v937 = vunpack.c.h.b16 %v279
    %v938 = vunpack.c.l.b16 %v280
    %v939 = vunpack.c.h.b16 %v280
    %v940 = vunpack.c.l.b16 %v281
    %v941 = vunpack.c.h.b16 %v281
    %v942 = vunpack.c.l.b16 %v282
    %v943 = vunpack.c.h.b16 %v282
    %v944 = vunpack.c.l.b16 %v283
    %v945 = vunpack.c.h.b16 %v283
    %v946 = vunpack.c.l.b16 %v284
    %v947 = vunpack.c.h.b16 %v284
    %v948 = vunpack.c.l.b16 %v285
    %v949 = vunpack.c.h.b16 %v285
    %v950 = vunpack.c.l.b16 %v286
    %v951 = vunpack.c.h.b16 %v286
    %v952 = vunpack.c.l.b16 %v287
    %v953 = vunpack.c.h.b16 %v287
    %v954 = vunpack.c.l.b16 %v288
    %v955 = vunpack.c.h.b16 %v288
    %v956 = vunpack.c.l.b16 %v289
    %v957 = vunpack.c.h.b16 %v289
    %v958 = vunpack.c.l.b16 %v290
    %v959 = vunpack.c.h.b16 %v290
    %v960 = vunpack.c.l.b16 %v291
    %v961 = vunpack.c.h.b16 %v291
    %v962 = vunpack.c.l.b16 %v292
    %v963 = vunpack.c.h.b16 %v292
    %v964 = vunpack.c.l.b16 %v293
    %v965 = vunpack.c.h.b16 %v293
    %v966 = vunpack.c.l.b16 %v294
    %v967 = vunpack.c.h.b16 %v294
    %v968 = vunpack.c.l.b16 %v295
    %v969 = vunpack.c.h.b16 %v295
    %v970 = vunpack.c.l.b16 %v296
    %v971 = vunpack.c.h.b16 %v296
    %v972 = vunpack.c.l.b16 %v297
    %v973 = vunpack.c.h.b16 %v297
    %v974 = vunpack.c.l.b16 %v298
    %v975 = vunpack.c.h.b16 %v298
    %v976 = vunpack.c.l.b16 %v299
    %v977 = vunpack.c.h.b16 %v299
    %v978 = vunpack.c.l.b16 %v300
    %v979 = vunpack.c.h.b16 %v300
    %v980 = vunpack.c.l.b16 %v301
    %v981 = vunpack.c.h.b16 %v301
    %v982 = vunpack.c.l.b16 %v302
    %v983 = vunpack.c.h.b16 %v302
    %v984 = vunpack.c.l.b16 %v303
    %v985 = vunpack.c.h.b16 %v303
    %v986 = vunpack.c.l.b16 %v304
    %v987 = vunpack.c.h.b16 %v304
    %v988 = vunpack.c.l.b16 %v305
    %v989 = vunpack.c.h.b16 %v305
    %v990 = vunpack.c.l.b16 %v306
    %v991 = vunpack.c.h.b16 %v306
    %v992 = vunpack.c.l.b16 %v307
    %v993 = vunpack.c.h.b16 %v307
    %v994 = vunpack.c.l.b16 %v308
    %v995 = vunpack.c.h.b16 %v308
    %v996 = vunpack.c.l.b16 %v309
    %v997 = vunpack.c.h.b16 %v309
    %v998 = vunpack.c.l.b16 %v310
    %v999 = vunpack.c.h.b16 %v310
    %v1000 = vunpack.c.l.b16 %v311
    %v1001 = vunpack.c.h.b16 %v311
    %v1002 = vunpack.c.l.b16 %v312
    %v1003 = vunpack.c.h.b16 %v312
    %v1004 = vunpack.c.l.b16 %v313
    %v1005 = vunpack.c.h.b16 %v313
    %v1006 = vunpack.c.l.b16 %v314
    %v1007 = vunpack.c.h.b16 %v314
    %v1008 = vunpack.c.l.b16 %v315
    %v1009 = vunpack.c.h.b16 %v315
    %v1010 = vunpack.c.l.b16 %v316
    %v1011 = vunpack.c.h.b16 %v316
    %v1012 = vunpack.c.l.b16 %v317
    %v1013 = vunpack.c.h.b16 %v317
    %v1014 = vunpack.c.l.b16 %v318
    %v1015 = vunpack.c.h.b16 %v318
    %v1016 = vunpack.c.l.b16 %v319
    %v1017 = vunpack.c.h.b16 %v319
    %v1018 = vunpack.c.l.b16 %v320
    %v1019 = vunpack.c.h.b16 %v320
    %v1020 = vunpack.c.l.b16 %v321
    %v1021 = vunpack.c.h.b16 %v321
    %v1022 = vunpack.c.l.b16 %v322
    %v1023 = vunpack.c.h.b16 %v322
    %v1024 = vunpack.c.l.b16 %v323
    %v1025 = vunpack.c.h.b16 %v323
    %v1026 = vunpack.c.l.b16 %v324
    %v1027 = vunpack.c.h.b16 %v324
    %v1028 = vunpack.c.l.b16 %v325
    %v1029 = vunpack.c.h.b16 %v325
    %v1030 = vunpack.c.l.b16 %v326
    %v1031 = vunpack.c.h.b16 %v326
    %v1032 = vunpack.c.l.b16 %v327
    %v1033 = vunpack.c.h.b16 %v327
    %v1034 = vunpack.c.l.b16 %v328
    %v1035 = vunpack.c.h.b16 %v328
    %v1036 = vpack.c.b16 %v592, %v588
    %v1037 = vpack.c.b16 %v593, %v589
    %v1038 = vpack.c.b16 %v594, %v590
    %v1039 = vpack.c.b16 %v595, %v591
    %v1040 = vpack.c.b16 %v600, %v596
    %v1041 = vpack.c.b16 %v601, %v597
    %v1042 = vpack.c.b16 %v602, %v598
    %v1043 = vpack.c.b16 %v603, %v599
    %v1044 = vpack.c.b16 %v608, %v604
    %v1045 = vpack.c.b16 %v609, %v605
    %v1046 = vpack.c.b16 %v610, %v606
    %v1047 = vpack.c.b16 %v611, %v607
    %v1048 = vpack.c.b16 %v616, %v612
    %v1049 = vpack.c.b16 %v617, %v613
    %v1050 = vpack.c.b16 %v618, %v614
    %v1051 = vpack.c.b16 %v619, %v615
    %v1052 = vpack.c.b16 %v624, %v620
    %v1053 = vpack.c.b16 %v625, %v621
    %v1054 = vpack.c.b16 %v626, %v622
    %v1055 = vpack.c.b16 %v627, %v623
    %v1056 = vpack.c.b16 %v632, %v628
    %v1057 = vpack.c.b16 %v633, %v629
    %v1058 = vpack.c.b16 %v634, %v630
    %v1059 = vpack.c.b16 %v635, %v631
    %v1060 = vpack.c.b16 %v640, %v636
    %v1061 = vpack.c.b16 %v641, %v637
    %v1062 = vpack.c.b16 %v642, %v638
    %v1063 = vpack.c.b16 %v643, %v639
    %v1064 = vpack.c.b16 %v648, %v644
    %v1065 = vpack.c.b16 %v649, %v645
    %v1066 = vpack.c.b16 %v650, %v646
    %v1067 = vpack.c.b16 %v651, %v647
    %v1068 = vpack.c.b16 %v656, %v652
    %v1069 = vpack.c.b16 %v657, %v653
    %v1070 = vpack.c.b16 %v658, %v654
    %v1071 = vpack.c.b16 %v659, %v655
    %v1072 = vpack.c.b16 %v664, %v660
    %v1073 = vpack.c.b16 %v665, %v661
    %v1074 = vpack.c.b16 %v666, %v662
    %v1075 = vpack.c.b16 %v667, %v663
    %v1076 = vpack.c.b16 %v672, %v668
    %v1077 = vpack.c.b16 %v673, %v669
    %v1078 = vpack.c.b16 %v674, %v670
    %v1079 = vpack.c.b16 %v675, %v671
    %v1080 = vpack.c.b16 %v680, %v676
    %v1081 = vpack.c.b16 %v681, %v677
    %v1082 = vpack.c.b16 %v682, %v678
    %v1083 = vpack.c.b16 %v683, %v679
    %v1084 = vpack.c.b16 %v688, %v684
    %v1085 = vpack.c.b16 %v689, %v685
    %v1086 = vpack.c.b16 %v690, %v686
    %v1087 = vpack.c.b16 %v691, %v687
    %v1088 = vpack.c.b16 %v696, %v692
    %v1089 = vpack.c.b16 %v697, %v693
    %v1090 = vpack.c.b16 %v698, %v694
    %v1091 = vpack.c.b16 %v699, %v695
    %v1092 = vpack.c.b16 %v704, %v700
    %v1093 = vpack.c.b16 %v705, %v701
    %v1094 = vpack.c.b16 %v706, %v702
    %v1095 = vpack.c.b16 %v707, %v703
    %v1096 = vpack.c.b16 %v712, %v708
    %v1097 = vpack.c.b16 %v713, %v709
    %v1098 = vpack.c.b16 %v714, %v710
    %v1099 = vpack.c.b16 %v715, %v711
    %v1100 = vpack.c.b16 %v720, %v716
    %v1101 = vpack.c.b16 %v721, %v717
    %v1102 = vpack.c.b16 %v722, %v718
    %v1103 = vpack.c.b16 %v723, %v719
    %v1104 = vpack.c.b16 %v728, %v724
    %v1105 = vpack.c.b16 %v729, %v725
    %v1106 = vpack.c.b16 %v730, %v726
    %v1107 = vpack.c.b16 %v731, %v727
    %v1108 = vpack.c.b16 %v736, %v732
    %v1109 = vpack.c.b16 %v737, %v733
    %v1110 = vpack.c.b16 %v738, %v734
    %v1111 = vpack.c.b16 %v739, %v735
    %v1112 = vpack.c.b16 %v744, %v740
    %v1113 = vpack.c.b16 %v745, %v741
    %v1114 = vpack.c.b16 %v746, %v742
    %v1115 = vpack.c.b16 %v747, %v743
    %v1116 = vpack.c.b16 %v752, %v748
    %v1117 = vpack.c.b16 %v753, %v749
    %v1118 = vpack.c.b16 %v754, %v750
    %v1119 = vpack.c.b16 %v755, %v751
    %v1120 = vpack.c.b16 %v760, %v756
    %v1121 = vpack.c.b16 %v761, %v757
    %v1122 = vpack.c.b16 %v762, %v758
    %v1123 = vpack.c.b16 %v763, %v759
    %v1124 = vpack.c.b16 %v768, %v764
    %v1125 = vpack.c.b16 %v769, %v765
    %v1126 = vpack.c.b16 %v770, %v766
    %v1127 = vpack.c.b16 %v771, %v767
    %v1128 = vpack.c.b16 %v776, %v772
    %v1129 = vpack.c.b16 %v777, %v773
    %v1130 = vpack.c.b16 %v778, %v774
    %v1131 = vpack.c.b16 %v779, %v775
    %v1132 = vpack.c.b16 %v784, %v780
    %v1133 = vpack.c.b16 %v785, %v781
    %v1134 = vpack.c.b16 %v786, %v782
    %v1135 = vpack.c.b16 %v787, %v783
    %v1136 = vpack.c.b16 %v792, %v788
    %v1137 = vpack.c.b16 %v793, %v789
    %v1138 = vpack.c.b16 %v794, %v790
    %v1139 = vpack.c.b16 %v795, %v791
    %v1140 = vpack.c.b16 %v800, %v796
    %v1141 = vpack.c.b16 %v801, %v797
    %v1142 = vpack.c.b16 %v802, %v798
    %v1143 = vpack.c.b16 %v803, %v799
    %v1144 = vpack.c.b16 %v808, %v804
    %v1145 = vpack.c.b16 %v809, %v805
    %v1146 = vpack.c.b16 %v810, %v806
    %v1147 = vpack.c.b16 %v811, %v807
    %v1148 = vpack.c.b16 %v816, %v812
    %v1149 = vpack.c.b16 %v817, %v813
    %v1150 = vpack.c.b16 %v818, %v814
    %v1151 = vpack.c.b16 %v819, %v815
    %v1152 = vpack.c.b16 %v824, %v820
    %v1153 = vpack.c.b16 %v825, %v821
    %v1154 = vpack.c.b16 %v826, %v822
    %v1155 = vpack.c.b16 %v827, %v823
    %v1156 = vpack.c.b16 %v832, %v828
    %v1157 = vpack.c.b16 %v833, %v829
    %v1158 = vpack.c.b16 %v834, %v830
    %v1159 = vpack.c.b16 %v835, %v831
    %v1160 = vpack.c.b16 %v840, %v836
    %v1161 = vpack.c.b16 %v841, %v837
    %v1162 = vpack.c.b16 %v842, %v838
    %v1163 = vpack.c.b16 %v843, %v839
    %v1164 = vpack.c.b16 %v848, %v844
    %v1165 = vpack.c.b16 %v849, %v845
    %v1166 = vpack.c.b16 %v850, %v846
    %v1167 = vpack.c.b16 %v851, %v847
    %v1168 = vpack.c.b16 %v856, %v852
    %v1169 = vpack.c.b16 %v857, %v853
    %v1170 = vpack.c.b16 %v858, %v854
    %v1171 = vpack.c.b16 %v859, %v855
    %v1172 = vpack.c.b16 %v864, %v860
    %v1173 = vpack.c.b16 %v865, %v861
    %v1174 = vpack.c.b16 %v866, %v862
    %v1175 = vpack.c.b16 %v867, %v863
    %v1176 = vpack.c.b16 %v872, %v868
    %v1177 = vpack.c.b16 %v873, %v869
    %v1178 = vpack.c.b16 %v874, %v870
    %v1179 = vpack.c.b16 %v875, %v871
    %v1180 = vpack.c.b16 %v880, %v876
    %v1181 = vpack.c.b16 %v881, %v877
    %v1182 = vpack.c.b16 %v882, %v878
    %v1183 = vpack.c.b16 %v883, %v879
    %v1184 = vpack.c.b16 %v888, %v884
    %v1185 = vpack.c.b16 %v889, %v885
    %v1186 = vpack.c.b16 %v890, %v886
    %v1187 = vpack.c.b16 %v891, %v887
    %v1188 = vpack.c.b16 %v896, %v892
    %v1189 = vpack.c.b16 %v897, %v893
    %v1190 = vpack.c.b16 %v898, %v894
    %v1191 = vpack.c.b16 %v899, %v895
    %v1192 = vpack.c.b16 %v904, %v900
    %v1193 = vpack.c.b16 %v905, %v901
    %v1194 = vpack.c.b16 %v906, %v902
    %v1195 = vpack.c.b16 %v907, %v903
    %v1196 = vpack.c.b16 %v912, %v908
    %v1197 = vpack.c.b16 %v913, %v909
    %v1198 = vpack.c.b16 %v914, %v910
    %v1199 = vpack.c.b16 %v915, %v911
    %v1200 = vpack.c.b16 %v920, %v916
    %v1201 = vpack.c.b16 %v921, %v917
    %v1202 = vpack.c.b16 %v922, %v918
    %v1203 = vpack.c.b16 %v923, %v919
    %v1204 = vpack.c.b16 %v928, %v924
    %v1205 = vpack.c.b16 %v929, %v925
    %v1206 = vpack.c.b16 %v930, %v926
    %v1207 = vpack.c.b16 %v931, %v927
    %v1208 = vpack.c.b16 %v936, %v932
    %v1209 = vpack.c.b16 %v937, %v933
    %v1210 = vpack.c.b16 %v938, %v934
    %v1211 = vpack.c.b16 %v939, %v935
    %v1212 = vpack.c.b16 %v944, %v940
    %v1213 = vpack.c.b16 %v945, %v941
    %v1214 = vpack.c.b16 %v946, %v942
    %v1215 = vpack.c.b16 %v947, %v943
    %v1216 = vpack.c.b16 %v952, %v948
    %v1217 = vpack.c.b16 %v953, %v949
    %v1218 = vpack.c.b16 %v954, %v950
    %v1219 = vpack.c.b16 %v955, %v951
    %v1220 = vpack.c.b16 %v960, %v956
    %v1221 = vpack.c.b16 %v961, %v957
    %v1222 = vpack.c.b16 %v962, %v958
    %v1223 = vpack.c.b16 %v963, %v959
    %v1224 = vpack.c.b16 %v968, %v964
    %v1225 = vpack.c.b16 %v969, %v965
    %v1226 = vpack.c.b16 %v970, %v966
    %v1227 = vpack.c.b16 %v971, %v967
    %v1228 = vpack.c.b16 %v976, %v972
    %v1229 = vpack.c.b16 %v977, %v973
    %v1230 = vpack.c.b16 %v978, %v974
    %v1231 = vpack.c.b16 %v979, %v975
    %v1232 = vpack.c.b16 %v984, %v980
    %v1233 = vpack.c.b16 %v985, %v981
    %v1234 = vpack.c.b16 %v986, %v982
    %v1235 = vpack.c.b16 %v987, %v983
    %v1236 = vpack.c.b16 %v992, %v988
    %v1237 = vpack.c.b16 %v993, %v989
    %v1238 = vpack.c.b16 %v994, %v990
    %v1239 = vpack.c.b16 %v995, %v991
    %v1240 = vpack.c.b16 %v1000, %v996
    %v1241 = vpack.c.b16 %v1001, %v997
    %v1242 = vpack.c.b16 %v1002, %v998
    %v1243 = vpack.c.b16 %v1003, %v999
    %v1244 = vpack.c.b16 %v1008, %v1004
    %v1245 = vpack.c.b16 %v1009, %v1005
    %v1246 = vpack.c.b16 %v1010, %v1006
    %v1247 = vpack.c.b16 %v1011, %v1007
    %v1248 = vpack.c.b16 %v1016, %v1012
    %v1249 = vpack.c.b16 %v1017, %v1013
    %v1250 = vpack.c.b16 %v1018, %v1014
    %v1251 = vpack.c.b16 %v1019, %v1015
    %v1252 = vpack.c.b16 %v1024, %v1020
    %v1253 = vpack.c.b16 %v1025, %v1021
    %v1254 = vpack.c.b16 %v1026, %v1022
    %v1255 = vpack.c.b16 %v1027, %v1023
    %v1256 = vpack.c.b16 %v1032, %v1028
    %v1257 = vpack.c.b16 %v1033, %v1029
    %v1258 = vpack.c.b16 %v1034, %v1030
    %v1259 = vpack.c.b16 %v1035, %v1031
    %1484 = vmatpush.bf16.msra.mxu0 %v1064
    %1485 = vmatpush.bf16.msra.mxu0 %v1060
    %1486 = vmatpush.bf16.msra.mxu0 %v1056
    %1487 = vmatpush.bf16.msra.mxu0 %v1052
    %1488 = vmatpush.bf16.msra.mxu0 %v1048
    %1489 = vmatpush.bf16.msra.mxu0 %v1044
    %1490 = vmatpush.bf16.msra.mxu0 %v1040
    %1491 = vmatpush.bf16.msra.mxu0 %v1036
    %1492 = vmatmul.bf16.gmra.mxu0 %v350
    %v1493 = vpop.f32.mrf.mxu0
    %v1494 = vadd.f32 %v331, %v1493
    %v1495 = vpop.f32.mrf.mxu0
    %1496 = vdwg.mxu0
    %1497 = vmatpush.bf16.msra.mxu0 %v1096
    %1498 = vmatpush.bf16.msra.mxu0 %v1092
    %1499 = vmatpush.bf16.msra.mxu0 %v1088
    %1500 = vmatpush.bf16.msra.mxu0 %v1084
    %1501 = vmatpush.bf16.msra.mxu0 %v1080
    %1502 = vmatpush.bf16.msra.mxu0 %v1076
    %1503 = vmatpush.bf16.msra.mxu0 %v1072
    %1504 = vmatpush.bf16.msra.mxu0 %v1068
    %1505 = vmatmul.bf16.gmra.mxu0 %v351
    %v1506 = vpop.f32.mrf.mxu0
    %v1507 = vadd.f32 %v1494, %v1506
    %v1508 = vpop.f32.mrf.mxu0
    %1509 = vdwg.mxu0
    %1510 = vmatpush.bf16.msra.mxu0 %v1128
    %1511 = vmatpush.bf16.msra.mxu0 %v1124
    %1512 = vmatpush.bf16.msra.mxu0 %v1120
    %1513 = vmatpush.bf16.msra.mxu0 %v1116
    %1514 = vmatpush.bf16.msra.mxu0 %v1112
    %1515 = vmatpush.bf16.msra.mxu0 %v1108
    %1516 = vmatpush.bf16.msra.mxu0 %v1104
    %1517 = vmatpush.bf16.msra.mxu0 %v1100
    %1518 = vmatmul.bf16.gmra.mxu0 %v352
    %v1519 = vpop.f32.mrf.mxu0
    %v1520 = vadd.f32 %v1507, %v1519
    %v1521 = vpop.f32.mrf.mxu0
    %1522 = vdwg.mxu0
    %1523 = vmatpush.bf16.msra.mxu0 %v1160
    %1524 = vmatpush.bf16.msra.mxu0 %v1156
    %1525 = vmatpush.bf16.msra.mxu0 %v1152
    %1526 = vmatpush.bf16.msra.mxu0 %v1148
    %1527 = vmatpush.bf16.msra.mxu0 %v1144
    %1528 = vmatpush.bf16.msra.mxu0 %v1140
    %1529 = vmatpush.bf16.msra.mxu0 %v1136
    %1530 = vmatpush.bf16.msra.mxu0 %v1132
    %1531 = vmatmul.bf16.gmra.mxu0 %v353
    %v1532 = vpop.f32.mrf.mxu0
    %v1533 = vadd.f32 %v1520, %v1532
    %v1534 = vpop.f32.mrf.mxu0
    %1535 = vdwg.mxu0
    %1536 = vmatpush.bf16.msra.mxu0 %v1192
    %1537 = vmatpush.bf16.msra.mxu0 %v1188
    %1538 = vmatpush.bf16.msra.mxu0 %v1184
    %1539 = vmatpush.bf16.msra.mxu0 %v1180
    %1540 = vmatpush.bf16.msra.mxu0 %v1176
    %1541 = vmatpush.bf16.msra.mxu0 %v1172
    %1542 = vmatpush.bf16.msra.mxu0 %v1168
    %1543 = vmatpush.bf16.msra.mxu0 %v1164
    %1544 = vmatmul.bf16.gmra.mxu0 %v354
    %v1545 = vpop.f32.mrf.mxu0
    %v1546 = vadd.f32 %v1533, %v1545
    %v1547 = vpop.f32.mrf.mxu0
    %1548 = vdwg.mxu0
    %1549 = vmatpush.bf16.msra.mxu0 %v1224
    %1550 = vmatpush.bf16.msra.mxu0 %v1220
    %1551 = vmatpush.bf16.msra.mxu0 %v1216
    %1552 = vmatpush.bf16.msra.mxu0 %v1212
    %1553 = vmatpush.bf16.msra.mxu0 %v1208
    %1554 = vmatpush.bf16.msra.mxu0 %v1204
    %1555 = vmatpush.bf16.msra.mxu0 %v1200
    %1556 = vmatpush.bf16.msra.mxu0 %v1196
    %1557 = vmatmul.bf16.gmra.mxu0 %v355
    %v1558 = vpop.f32.mrf.mxu0
    %v1559 = vadd.f32 %v1546, %v1558
    %v1560 = vpop.f32.mrf.mxu0
    %1561 = vdwg.mxu0
    %1562 = vmatpush.bf16.msra.mxu0 %v1256
    %1563 = vmatpush.bf16.msra.mxu0 %v1252
    %1564 = vmatpush.bf16.msra.mxu0 %v1248
    %1565 = vmatpush.bf16.msra.mxu0 %v1244
    %1566 = vmatpush.bf16.msra.mxu0 %v1240
    %1567 = vmatpush.bf16.msra.mxu0 %v1236
    %1568 = vmatpush.bf16.msra.mxu0 %v1232
    %1569 = vmatpush.bf16.msra.mxu0 %v1228
    %1570 = vmatmul.bf16.gmra.mxu0 %v356
    %v1571 = vpop.f32.mrf.mxu0
    %v1572 = vadd.f32 %v1559, %v1571
    %v1573 = vpop.f32.mrf.mxu0
    %1574 = vdwg.mxu0
    %1575 = vmatpush.bf16.msra.mxu0 %v1065
    %1576 = vmatpush.bf16.msra.mxu0 %v1061
    %1577 = vmatpush.bf16.msra.mxu0 %v1057
    %1578 = vmatpush.bf16.msra.mxu0 %v1053
    %1579 = vmatpush.bf16.msra.mxu0 %v1049
    %1580 = vmatpush.bf16.msra.mxu0 %v1045
    %1581 = vmatpush.bf16.msra.mxu0 %v1041
    %1582 = vmatpush.bf16.msra.mxu0 %v1037
    %1583 = vmatmul.bf16.gmra.mxu0 %v350
    %v1584 = vpop.f32.mrf.mxu0
    %v1585 = vadd.f32 %v332, %v1584
    %v1586 = vpop.f32.mrf.mxu0
    %1587 = vdwg.mxu0
    %1588 = vmatpush.bf16.msra.mxu0 %v1097
    %1589 = vmatpush.bf16.msra.mxu0 %v1093
    %1590 = vmatpush.bf16.msra.mxu0 %v1089
    %1591 = vmatpush.bf16.msra.mxu0 %v1085
    %1592 = vmatpush.bf16.msra.mxu0 %v1081
    %1593 = vmatpush.bf16.msra.mxu0 %v1077
    %1594 = vmatpush.bf16.msra.mxu0 %v1073
    %1595 = vmatpush.bf16.msra.mxu0 %v1069
    %1596 = vmatmul.bf16.gmra.mxu0 %v351
    %v1597 = vpop.f32.mrf.mxu0
    %v1598 = vadd.f32 %v1585, %v1597
    %v1599 = vpop.f32.mrf.mxu0
    %1600 = vdwg.mxu0
    %1601 = vmatpush.bf16.msra.mxu0 %v1129
    %1602 = vmatpush.bf16.msra.mxu0 %v1125
    %1603 = vmatpush.bf16.msra.mxu0 %v1121
    %1604 = vmatpush.bf16.msra.mxu0 %v1117
    %1605 = vmatpush.bf16.msra.mxu0 %v1113
    %1606 = vmatpush.bf16.msra.mxu0 %v1109
    %1607 = vmatpush.bf16.msra.mxu0 %v1105
    %1608 = vmatpush.bf16.msra.mxu0 %v1101
    %1609 = vmatmul.bf16.gmra.mxu0 %v352
    %v1610 = vpop.f32.mrf.mxu0
    %v1611 = vadd.f32 %v1598, %v1610
    %v1612 = vpop.f32.mrf.mxu0
    %1613 = vdwg.mxu0
    %1614 = vmatpush.bf16.msra.mxu0 %v1161
    %1615 = vmatpush.bf16.msra.mxu0 %v1157
    %1616 = vmatpush.bf16.msra.mxu0 %v1153
    %1617 = vmatpush.bf16.msra.mxu0 %v1149
    %1618 = vmatpush.bf16.msra.mxu0 %v1145
    %1619 = vmatpush.bf16.msra.mxu0 %v1141
    %1620 = vmatpush.bf16.msra.mxu0 %v1137
    %1621 = vmatpush.bf16.msra.mxu0 %v1133
    %1622 = vmatmul.bf16.gmra.mxu0 %v353
    %v1623 = vpop.f32.mrf.mxu0
    %v1624 = vadd.f32 %v1611, %v1623
    %v1625 = vpop.f32.mrf.mxu0
    %1626 = vdwg.mxu0
    %1627 = vmatpush.bf16.msra.mxu0 %v1193
    %1628 = vmatpush.bf16.msra.mxu0 %v1189
    %1629 = vmatpush.bf16.msra.mxu0 %v1185
    %1630 = vmatpush.bf16.msra.mxu0 %v1181
    %1631 = vmatpush.bf16.msra.mxu0 %v1177
    %1632 = vmatpush.bf16.msra.mxu0 %v1173
    %1633 = vmatpush.bf16.msra.mxu0 %v1169
    %1634 = vmatpush.bf16.msra.mxu0 %v1165
    %1635 = vmatmul.bf16.gmra.mxu0 %v354
    %v1636 = vpop.f32.mrf.mxu0
    %v1637 = vadd.f32 %v1624, %v1636
    %v1638 = vpop.f32.mrf.mxu0
    %1639 = vdwg.mxu0
    %1640 = vmatpush.bf16.msra.mxu0 %v1225
    %1641 = vmatpush.bf16.msra.mxu0 %v1221
    %1642 = vmatpush.bf16.msra.mxu0 %v1217
    %1643 = vmatpush.bf16.msra.mxu0 %v1213
    %1644 = vmatpush.bf16.msra.mxu0 %v1209
    %1645 = vmatpush.bf16.msra.mxu0 %v1205
    %1646 = vmatpush.bf16.msra.mxu0 %v1201
    %1647 = vmatpush.bf16.msra.mxu0 %v1197
    %1648 = vmatmul.bf16.gmra.mxu0 %v355
    %v1649 = vpop.f32.mrf.mxu0
    %v1650 = vadd.f32 %v1637, %v1649
    %v1651 = vpop.f32.mrf.mxu0
    %1652 = vdwg.mxu0
    %1653 = vmatpush.bf16.msra.mxu0 %v1257
    %1654 = vmatpush.bf16.msra.mxu0 %v1253
    %1655 = vmatpush.bf16.msra.mxu0 %v1249
    %1656 = vmatpush.bf16.msra.mxu0 %v1245
    %1657 = vmatpush.bf16.msra.mxu0 %v1241
    %1658 = vmatpush.bf16.msra.mxu0 %v1237
    %1659 = vmatpush.bf16.msra.mxu0 %v1233
    %1660 = vmatpush.bf16.msra.mxu0 %v1229
    %1661 = vmatmul.bf16.gmra.mxu0 %v356
    %v1662 = vpop.f32.mrf.mxu0
    %v1663 = vadd.f32 %v1650, %v1662
    %v1664 = vpop.f32.mrf.mxu0
    %1665 = vdwg.mxu0
    %1666 = vmatpush.bf16.msra.mxu0 %v1066
    %1667 = vmatpush.bf16.msra.mxu0 %v1062
    %1668 = vmatpush.bf16.msra.mxu0 %v1058
    %1669 = vmatpush.bf16.msra.mxu0 %v1054
    %1670 = vmatpush.bf16.msra.mxu0 %v1050
    %1671 = vmatpush.bf16.msra.mxu0 %v1046
    %1672 = vmatpush.bf16.msra.mxu0 %v1042
    %1673 = vmatpush.bf16.msra.mxu0 %v1038
    %1674 = vmatmul.bf16.gmra.mxu0 %v350
    %v1675 = vpop.f32.mrf.mxu0
    %v1676 = vadd.f32 %v333, %v1675
    %v1677 = vpop.f32.mrf.mxu0
    %1678 = vdwg.mxu0
    %1679 = vmatpush.bf16.msra.mxu0 %v1098
    %1680 = vmatpush.bf16.msra.mxu0 %v1094
    %1681 = vmatpush.bf16.msra.mxu0 %v1090
    %1682 = vmatpush.bf16.msra.mxu0 %v1086
    %1683 = vmatpush.bf16.msra.mxu0 %v1082
    %1684 = vmatpush.bf16.msra.mxu0 %v1078
    %1685 = vmatpush.bf16.msra.mxu0 %v1074
    %1686 = vmatpush.bf16.msra.mxu0 %v1070
    %1687 = vmatmul.bf16.gmra.mxu0 %v351
    %v1688 = vpop.f32.mrf.mxu0
    %v1689 = vadd.f32 %v1676, %v1688
    %v1690 = vpop.f32.mrf.mxu0
    %1691 = vdwg.mxu0
    %1692 = vmatpush.bf16.msra.mxu0 %v1130
    %1693 = vmatpush.bf16.msra.mxu0 %v1126
    %1694 = vmatpush.bf16.msra.mxu0 %v1122
    %1695 = vmatpush.bf16.msra.mxu0 %v1118
    %1696 = vmatpush.bf16.msra.mxu0 %v1114
    %1697 = vmatpush.bf16.msra.mxu0 %v1110
    %1698 = vmatpush.bf16.msra.mxu0 %v1106
    %1699 = vmatpush.bf16.msra.mxu0 %v1102
    %1700 = vmatmul.bf16.gmra.mxu0 %v352
    %v1701 = vpop.f32.mrf.mxu0
    %v1702 = vadd.f32 %v1689, %v1701
    %v1703 = vpop.f32.mrf.mxu0
    %1704 = vdwg.mxu0
    %1705 = vmatpush.bf16.msra.mxu0 %v1162
    %1706 = vmatpush.bf16.msra.mxu0 %v1158
    %1707 = vmatpush.bf16.msra.mxu0 %v1154
    %1708 = vmatpush.bf16.msra.mxu0 %v1150
    %1709 = vmatpush.bf16.msra.mxu0 %v1146
    %1710 = vmatpush.bf16.msra.mxu0 %v1142
    %1711 = vmatpush.bf16.msra.mxu0 %v1138
    %1712 = vmatpush.bf16.msra.mxu0 %v1134
    %1713 = vmatmul.bf16.gmra.mxu0 %v353
    %v1714 = vpop.f32.mrf.mxu0
    %v1715 = vadd.f32 %v1702, %v1714
    %v1716 = vpop.f32.mrf.mxu0
    %1717 = vdwg.mxu0
    %1718 = vmatpush.bf16.msra.mxu0 %v1194
    %1719 = vmatpush.bf16.msra.mxu0 %v1190
    %1720 = vmatpush.bf16.msra.mxu0 %v1186
    %1721 = vmatpush.bf16.msra.mxu0 %v1182
    %1722 = vmatpush.bf16.msra.mxu0 %v1178
    %1723 = vmatpush.bf16.msra.mxu0 %v1174
    %1724 = vmatpush.bf16.msra.mxu0 %v1170
    %1725 = vmatpush.bf16.msra.mxu0 %v1166
    %1726 = vmatmul.bf16.gmra.mxu0 %v354
    %v1727 = vpop.f32.mrf.mxu0
    %v1728 = vadd.f32 %v1715, %v1727
    %v1729 = vpop.f32.mrf.mxu0
    %1730 = vdwg.mxu0
    %1731 = vmatpush.bf16.msra.mxu0 %v1226
    %1732 = vmatpush.bf16.msra.mxu0 %v1222
    %1733 = vmatpush.bf16.msra.mxu0 %v1218
    %1734 = vmatpush.bf16.msra.mxu0 %v1214
    %1735 = vmatpush.bf16.msra.mxu0 %v1210
    %1736 = vmatpush.bf16.msra.mxu0 %v1206
    %1737 = vmatpush.bf16.msra.mxu0 %v1202
    %1738 = vmatpush.bf16.msra.mxu0 %v1198
    %1739 = vmatmul.bf16.gmra.mxu0 %v355
    %v1740 = vpop.f32.mrf.mxu0
    %v1741 = vadd.f32 %v1728, %v1740
    %v1742 = vpop.f32.mrf.mxu0
    %1743 = vdwg.mxu0
    %1744 = vmatpush.bf16.msra.mxu0 %v1258
    %1745 = vmatpush.bf16.msra.mxu0 %v1254
    %1746 = vmatpush.bf16.msra.mxu0 %v1250
    %1747 = vmatpush.bf16.msra.mxu0 %v1246
    %1748 = vmatpush.bf16.msra.mxu0 %v1242
    %1749 = vmatpush.bf16.msra.mxu0 %v1238
    %1750 = vmatpush.bf16.msra.mxu0 %v1234
    %1751 = vmatpush.bf16.msra.mxu0 %v1230
    %1752 = vmatmul.bf16.gmra.mxu0 %v356
    %v1753 = vpop.f32.mrf.mxu0
    %v1754 = vadd.f32 %v1741, %v1753
    %v1755 = vpop.f32.mrf.mxu0
    %1756 = vdwg.mxu0
    %1757 = vmatpush.bf16.msra.mxu0 %v1067
    %1758 = vmatpush.bf16.msra.mxu0 %v1063
    %1759 = vmatpush.bf16.msra.mxu0 %v1059
    %1760 = vmatpush.bf16.msra.mxu0 %v1055
    %1761 = vmatpush.bf16.msra.mxu0 %v1051
    %1762 = vmatpush.bf16.msra.mxu0 %v1047
    %1763 = vmatpush.bf16.msra.mxu0 %v1043
    %1764 = vmatpush.bf16.msra.mxu0 %v1039
    %1765 = vmatmul.bf16.gmra.mxu0 %v350
    %v1766 = vpop.f32.mrf.mxu0
    %v1767 = vadd.f32 %v334, %v1766
    %v1768 = vpop.f32.mrf.mxu0
    %1769 = vdwg.mxu0
    %1770 = vmatpush.bf16.msra.mxu0 %v1099
    %1771 = vmatpush.bf16.msra.mxu0 %v1095
    %1772 = vmatpush.bf16.msra.mxu0 %v1091
    %1773 = vmatpush.bf16.msra.mxu0 %v1087
    %1774 = vmatpush.bf16.msra.mxu0 %v1083
    %1775 = vmatpush.bf16.msra.mxu0 %v1079
    %1776 = vmatpush.bf16.msra.mxu0 %v1075
    %1777 = vmatpush.bf16.msra.mxu0 %v1071
    %1778 = vmatmul.bf16.gmra.mxu0 %v351
    %v1779 = vpop.f32.mrf.mxu0
    %v1780 = vadd.f32 %v1767, %v1779
    %v1781 = vpop.f32.mrf.mxu0
    %1782 = vdwg.mxu0
    %1783 = vmatpush.bf16.msra.mxu0 %v1131
    %1784 = vmatpush.bf16.msra.mxu0 %v1127
    %1785 = vmatpush.bf16.msra.mxu0 %v1123
    %1786 = vmatpush.bf16.msra.mxu0 %v1119
    %1787 = vmatpush.bf16.msra.mxu0 %v1115
    %1788 = vmatpush.bf16.msra.mxu0 %v1111
    %1789 = vmatpush.bf16.msra.mxu0 %v1107
    %1790 = vmatpush.bf16.msra.mxu0 %v1103
    %1791 = vmatmul.bf16.gmra.mxu0 %v352
    %v1792 = vpop.f32.mrf.mxu0
    %v1793 = vadd.f32 %v1780, %v1792
    %v1794 = vpop.f32.mrf.mxu0
    %1795 = vdwg.mxu0
    %1796 = vmatpush.bf16.msra.mxu0 %v1163
    %1797 = vmatpush.bf16.msra.mxu0 %v1159
    %1798 = vmatpush.bf16.msra.mxu0 %v1155
    %1799 = vmatpush.bf16.msra.mxu0 %v1151
    %1800 = vmatpush.bf16.msra.mxu0 %v1147
    %1801 = vmatpush.bf16.msra.mxu0 %v1143
    %1802 = vmatpush.bf16.msra.mxu0 %v1139
    %1803 = vmatpush.bf16.msra.mxu0 %v1135
    %1804 = vmatmul.bf16.gmra.mxu0 %v353
    %v1805 = vpop.f32.mrf.mxu0
    %v1806 = vadd.f32 %v1793, %v1805
    %v1807 = vpop.f32.mrf.mxu0
    %1808 = vdwg.mxu0
    %1809 = vmatpush.bf16.msra.mxu0 %v1195
    %1810 = vmatpush.bf16.msra.mxu0 %v1191
    %1811 = vmatpush.bf16.msra.mxu0 %v1187
    %1812 = vmatpush.bf16.msra.mxu0 %v1183
    %1813 = vmatpush.bf16.msra.mxu0 %v1179
    %1814 = vmatpush.bf16.msra.mxu0 %v1175
    %1815 = vmatpush.bf16.msra.mxu0 %v1171
    %1816 = vmatpush.bf16.msra.mxu0 %v1167
    %1817 = vmatmul.bf16.gmra.mxu0 %v354
    %v1818 = vpop.f32.mrf.mxu0
    %v1819 = vadd.f32 %v1806, %v1818
    %v1820 = vpop.f32.mrf.mxu0
    %1821 = vdwg.mxu0
    %1822 = vmatpush.bf16.msra.mxu0 %v1227
    %1823 = vmatpush.bf16.msra.mxu0 %v1223
    %1824 = vmatpush.bf16.msra.mxu0 %v1219
    %1825 = vmatpush.bf16.msra.mxu0 %v1215
    %1826 = vmatpush.bf16.msra.mxu0 %v1211
    %1827 = vmatpush.bf16.msra.mxu0 %v1207
    %1828 = vmatpush.bf16.msra.mxu0 %v1203
    %1829 = vmatpush.bf16.msra.mxu0 %v1199
    %1830 = vmatmul.bf16.gmra.mxu0 %v355
    %v1831 = vpop.f32.mrf.mxu0
    %v1832 = vadd.f32 %v1819, %v1831
    %v1833 = vpop.f32.mrf.mxu0
    %1834 = vdwg.mxu0
    %1835 = vmatpush.bf16.msra.mxu0 %v1259
    %1836 = vmatpush.bf16.msra.mxu0 %v1255
    %1837 = vmatpush.bf16.msra.mxu0 %v1251
    %1838 = vmatpush.bf16.msra.mxu0 %v1247
    %1839 = vmatpush.bf16.msra.mxu0 %v1243
    %1840 = vmatpush.bf16.msra.mxu0 %v1239
    %1841 = vmatpush.bf16.msra.mxu0 %v1235
    %1842 = vmatpush.bf16.msra.mxu0 %v1231
    %1843 = vmatmul.bf16.gmra.mxu0 %v356
    %v1844 = vpop.f32.mrf.mxu0
    %v1845 = vadd.f32 %v1832, %v1844
    %v1846 = vpop.f32.mrf.mxu0
    %1847 = vdwg.mxu0
    %v1848 = vmax.f32 %v1572, 0.0
    %v1849 = vmax.f32 %v1663, 0.0
    %v1850 = vmax.f32 %v1754, 0.0
    %v1851 = vmax.f32 %v1845, 0.0
    %v1852 = vpack.c.bf16 %v1848, %v1848
    %v1853 = vpack.c.bf16 %v1849, %v1849
    %v1854 = vpack.c.bf16 %v1850, %v1850
    %v1855 = vpack.c.bf16 %v1851, %v1851
    %v1856 = vld [vmem:[#allocation4] sm:$0xff]
    %v1857 = vld [vmem:[#allocation4 + $0x8] sm:$0xff]
    %v1858 = vld [vmem:[#allocation4 + $0x10] sm:$0xff]
    %v1859 = vld [vmem:[#allocation4 + $0x18] sm:$0xff]
    %v1860 = vld [vmem:[#allocation4 + $0x20] sm:$0xff]
    %v1861 = vld [vmem:[#allocation4 + $0x28] sm:$0xff]
    %v1862 = vld [vmem:[#allocation4 + $0x30] sm:$0xff]
    %v1863 = vld [vmem:[#allocation4 + $0x38] sm:$0xff]
    %v1864 = vld [vmem:[#allocation4 + $0x40] sm:$0xff]
    %v1865 = vld [vmem:[#allocation4 + $0x48] sm:$0xff]
    %v1866 = vld [vmem:[#allocation4 + $0x50] sm:$0xff]
    %v1867 = vld [vmem:[#allocation4 + $0x58] sm:$0xff]
    %v1868 = vld [vmem:[#allocation4 + $0x60] sm:$0xff]
    %v1869 = vld [vmem:[#allocation4 + $0x68] sm:$0xff]
    %v1870 = vld [vmem:[#allocation4 + $0x70] sm:$0xff]
    %v1871 = vld [vmem:[#allocation4 + $0x78] sm:$0xff]
    %v1872 = vld [vmem:[#allocation4 + $0x80] sm:$0xff]
    %v1873 = vld [vmem:[#allocation4 + $0x88] sm:$0xff]
    %v1874 = vld [vmem:[#allocation4 + $0x90] sm:$0xff]
    %v1875 = vld [vmem:[#allocation4 + $0x98] sm:$0xff]
    %v1876 = vld [vmem:[#allocation4 + $0xa0] sm:$0xff]
    %v1877 = vld [vmem:[#allocation4 + $0xa8] sm:$0xff]
    %v1878 = vld [vmem:[#allocation4 + $0xb0] sm:$0xff]
    %v1879 = vld [vmem:[#allocation4 + $0xb8] sm:$0xff]
    %v1880 = vld [vmem:[#allocation4 + $0xc0] sm:$0xff]
    %v1881 = vld [vmem:[#allocation4 + $0xc8] sm:$0xff]
    %v1882 = vld [vmem:[#allocation4 + $0xd0] sm:$0xff]
    %v1883 = vld [vmem:[#allocation4 + $0xd8] sm:$0xff]
    %v1884 = vld [vmem:[#allocation4 + $0xe0] sm:$0xff]
    %v1885 = vld [vmem:[#allocation4 + $0xe8] sm:$0xff]
    %v1886 = vld [vmem:[#allocation4 + $0xf0] sm:$0xff]
    %v1887 = vld [vmem:[#allocation4 + $0xf8] sm:$0xff]
    %v1888 = vld [vmem:[#allocation4 + $0x100] sm:$0xff]
    %v1889 = vld [vmem:[#allocation4 + $0x108] sm:$0xff]
    %v1890 = vld [vmem:[#allocation4 + $0x110] sm:$0xff]
    %v1891 = vld [vmem:[#allocation4 + $0x118] sm:$0xff]
    %v1892 = vld [vmem:[#allocation4 + $0x120] sm:$0xff]
    %v1893 = vld [vmem:[#allocation4 + $0x128] sm:$0xff]
    %v1894 = vld [vmem:[#allocation4 + $0x130] sm:$0xff]
    %v1895 = vld [vmem:[#allocation4 + $0x138] sm:$0xff]
    %v1896 = vld [vmem:[#allocation4 + $0x140] sm:$0xff]
    %v1897 = vld [vmem:[#allocation4 + $0x148] sm:$0xff]
    %v1898 = vld [vmem:[#allocation4 + $0x150] sm:$0xff]
    %v1899 = vld [vmem:[#allocation4 + $0x158] sm:$0xff]
    %v1900 = vld [vmem:[#allocation4 + $0x160] sm:$0xff]
    %v1901 = vld [vmem:[#allocation4 + $0x168] sm:$0xff]
    %v1902 = vld [vmem:[#allocation4 + $0x170] sm:$0xff]
    %v1903 = vld [vmem:[#allocation4 + $0x178] sm:$0xff]
    %v1904 = vld [vmem:[#allocation4 + $0x180] sm:$0xff]
    %v1905 = vld [vmem:[#allocation4 + $0x188] sm:$0xff]
    %v1906 = vld [vmem:[#allocation4 + $0x190] sm:$0xff]
    %v1907 = vld [vmem:[#allocation4 + $0x198] sm:$0xff]
    %v1908 = vld [vmem:[#allocation4 + $0x1a0] sm:$0xff]
    %v1909 = vld [vmem:[#allocation4 + $0x1a8] sm:$0xff]
    %v1910 = vld [vmem:[#allocation4 + $0x1b0] sm:$0xff]
    %v1911 = vld [vmem:[#allocation4 + $0x1b8] sm:$0xff]
    %v1912 = vld [vmem:[#allocation4 + $0x1c0] sm:$0xff]
    %v1913 = vld [vmem:[#allocation4 + $0x1c8] sm:$0xff]
    %v1914 = vld [vmem:[#allocation4 + $0x1d0] sm:$0xff]
    %v1915 = vld [vmem:[#allocation4 + $0x1d8] sm:$0xff]
    %v1916 = vld [vmem:[#allocation4 + $0x1e0] sm:$0xff]
    %v1917 = vld [vmem:[#allocation4 + $0x1e8] sm:$0xff]
    %v1918 = vld [vmem:[#allocation4 + $0x1f0] sm:$0xff]
    %v1919 = vld [vmem:[#allocation4 + $0x1f8] sm:$0xff]
    %v1920 = vld [vmem:[%s5] sm:$0x3]
    %v1922 = vperm.slane %v1920, 0
    %v1923 = vperm.slane %v1920, 1
    %v1990 = vunpack.c.l.b16 %v1856
    %v1991 = vunpack.c.h.b16 %v1856
    %v1992 = vunpack.c.l.b16 %v1857
    %v1993 = vunpack.c.h.b16 %v1857
    %v1994 = vunpack.c.l.b16 %v1858
    %v1995 = vunpack.c.h.b16 %v1858
    %v1996 = vunpack.c.l.b16 %v1859
    %v1997 = vunpack.c.h.b16 %v1859
    %v1998 = vunpack.c.l.b16 %v1860
    %v1999 = vunpack.c.h.b16 %v1860
    %v2000 = vunpack.c.l.b16 %v1861
    %v2001 = vunpack.c.h.b16 %v1861
    %v2002 = vunpack.c.l.b16 %v1862
    %v2003 = vunpack.c.h.b16 %v1862
    %v2004 = vunpack.c.l.b16 %v1863
    %v2005 = vunpack.c.h.b16 %v1863
    %v2006 = vunpack.c.l.b16 %v1864
    %v2007 = vunpack.c.h.b16 %v1864
    %v2008 = vunpack.c.l.b16 %v1865
    %v2009 = vunpack.c.h.b16 %v1865
    %v2010 = vunpack.c.l.b16 %v1866
    %v2011 = vunpack.c.h.b16 %v1866
    %v2012 = vunpack.c.l.b16 %v1867
    %v2013 = vunpack.c.h.b16 %v1867
    %v2014 = vunpack.c.l.b16 %v1868
    %v2015 = vunpack.c.h.b16 %v1868
    %v2016 = vunpack.c.l.b16 %v1869
    %v2017 = vunpack.c.h.b16 %v1869
    %v2018 = vunpack.c.l.b16 %v1870
    %v2019 = vunpack.c.h.b16 %v1870
    %v2020 = vunpack.c.l.b16 %v1871
    %v2021 = vunpack.c.h.b16 %v1871
    %v2022 = vunpack.c.l.b16 %v1872
    %v2023 = vunpack.c.h.b16 %v1872
    %v2024 = vunpack.c.l.b16 %v1873
    %v2025 = vunpack.c.h.b16 %v1873
    %v2026 = vunpack.c.l.b16 %v1874
    %v2027 = vunpack.c.h.b16 %v1874
    %v2028 = vunpack.c.l.b16 %v1875
    %v2029 = vunpack.c.h.b16 %v1875
    %v2030 = vunpack.c.l.b16 %v1876
    %v2031 = vunpack.c.h.b16 %v1876
    %v2032 = vunpack.c.l.b16 %v1877
    %v2033 = vunpack.c.h.b16 %v1877
    %v2034 = vunpack.c.l.b16 %v1878
    %v2035 = vunpack.c.h.b16 %v1878
    %v2036 = vunpack.c.l.b16 %v1879
    %v2037 = vunpack.c.h.b16 %v1879
    %v2038 = vunpack.c.l.b16 %v1880
    %v2039 = vunpack.c.h.b16 %v1880
    %v2040 = vunpack.c.l.b16 %v1881
    %v2041 = vunpack.c.h.b16 %v1881
    %v2042 = vunpack.c.l.b16 %v1882
    %v2043 = vunpack.c.h.b16 %v1882
    %v2044 = vunpack.c.l.b16 %v1883
    %v2045 = vunpack.c.h.b16 %v1883
    %v2046 = vunpack.c.l.b16 %v1884
    %v2047 = vunpack.c.h.b16 %v1884
    %v2048 = vunpack.c.l.b16 %v1885
    %v2049 = vunpack.c.h.b16 %v1885
    %v2050 = vunpack.c.l.b16 %v1886
    %v2051 = vunpack.c.h.b16 %v1886
    %v2052 = vunpack.c.l.b16 %v1887
    %v2053 = vunpack.c.h.b16 %v1887
    %v2054 = vunpack.c.l.b16 %v1888
    %v2055 = vunpack.c.h.b16 %v1888
    %v2056 = vunpack.c.l.b16 %v1889
    %v2057 = vunpack.c.h.b16 %v1889
    %v2058 = vunpack.c.l.b16 %v1890
    %v2059 = vunpack.c.h.b16 %v1890
    %v2060 = vunpack.c.l.b16 %v1891
    %v2061 = vunpack.c.h.b16 %v1891
    %v2062 = vunpack.c.l.b16 %v1892
    %v2063 = vunpack.c.h.b16 %v1892
    %v2064 = vunpack.c.l.b16 %v1893
    %v2065 = vunpack.c.h.b16 %v1893
    %v2066 = vunpack.c.l.b16 %v1894
    %v2067 = vunpack.c.h.b16 %v1894
    %v2068 = vunpack.c.l.b16 %v1895
    %v2069 = vunpack.c.h.b16 %v1895
    %v2070 = vunpack.c.l.b16 %v1896
    %v2071 = vunpack.c.h.b16 %v1896
    %v2072 = vunpack.c.l.b16 %v1897
    %v2073 = vunpack.c.h.b16 %v1897
    %v2074 = vunpack.c.l.b16 %v1898
    %v2075 = vunpack.c.h.b16 %v1898
    %v2076 = vunpack.c.l.b16 %v1899
    %v2077 = vunpack.c.h.b16 %v1899
    %v2078 = vunpack.c.l.b16 %v1900
    %v2079 = vunpack.c.h.b16 %v1900
    %v2080 = vunpack.c.l.b16 %v1901
    %v2081 = vunpack.c.h.b16 %v1901
    %v2082 = vunpack.c.l.b16 %v1902
    %v2083 = vunpack.c.h.b16 %v1902
    %v2084 = vunpack.c.l.b16 %v1903
    %v2085 = vunpack.c.h.b16 %v1903
    %v2086 = vunpack.c.l.b16 %v1904
    %v2087 = vunpack.c.h.b16 %v1904
    %v2088 = vunpack.c.l.b16 %v1905
    %v2089 = vunpack.c.h.b16 %v1905
    %v2090 = vunpack.c.l.b16 %v1906
    %v2091 = vunpack.c.h.b16 %v1906
    %v2092 = vunpack.c.l.b16 %v1907
    %v2093 = vunpack.c.h.b16 %v1907
    %v2094 = vunpack.c.l.b16 %v1908
    %v2095 = vunpack.c.h.b16 %v1908
    %v2096 = vunpack.c.l.b16 %v1909
    %v2097 = vunpack.c.h.b16 %v1909
    %v2098 = vunpack.c.l.b16 %v1910
    %v2099 = vunpack.c.h.b16 %v1910
    %v2100 = vunpack.c.l.b16 %v1911
    %v2101 = vunpack.c.h.b16 %v1911
    %v2102 = vunpack.c.l.b16 %v1912
    %v2103 = vunpack.c.h.b16 %v1912
    %v2104 = vunpack.c.l.b16 %v1913
    %v2105 = vunpack.c.h.b16 %v1913
    %v2106 = vunpack.c.l.b16 %v1914
    %v2107 = vunpack.c.h.b16 %v1914
    %v2108 = vunpack.c.l.b16 %v1915
    %v2109 = vunpack.c.h.b16 %v1915
    %v2110 = vunpack.c.l.b16 %v1916
    %v2111 = vunpack.c.h.b16 %v1916
    %v2112 = vunpack.c.l.b16 %v1917
    %v2113 = vunpack.c.h.b16 %v1917
    %v2114 = vunpack.c.l.b16 %v1918
    %v2115 = vunpack.c.h.b16 %v1918
    %v2116 = vunpack.c.l.b16 %v1919
    %v2117 = vunpack.c.h.b16 %v1919
    %v2118 = vpack.c.b16 %v1992, %v1990
    %v2119 = vpack.c.b16 %v1993, %v1991
    %v2120 = vpack.c.b16 %v1996, %v1994
    %v2121 = vpack.c.b16 %v1997, %v1995
    %v2122 = vpack.c.b16 %v2000, %v1998
    %v2123 = vpack.c.b16 %v2001, %v1999
    %v2124 = vpack.c.b16 %v2004, %v2002
    %v2125 = vpack.c.b16 %v2005, %v2003
    %v2126 = vpack.c.b16 %v2008, %v2006
    %v2127 = vpack.c.b16 %v2009, %v2007
    %v2128 = vpack.c.b16 %v2012, %v2010
    %v2129 = vpack.c.b16 %v2013, %v2011
    %v2130 = vpack.c.b16 %v2016, %v2014
    %v2131 = vpack.c.b16 %v2017, %v2015
    %v2132 = vpack.c.b16 %v2020, %v2018
    %v2133 = vpack.c.b16 %v2021, %v2019
    %v2134 = vpack.c.b16 %v2024, %v2022
    %v2135 = vpack.c.b16 %v2025, %v2023
    %v2136 = vpack.c.b16 %v2028, %v2026
    %v2137 = vpack.c.b16 %v2029, %v2027
    %v2138 = vpack.c.b16 %v2032, %v2030
    %v2139 = vpack.c.b16 %v2033, %v2031
    %v2140 = vpack.c.b16 %v2036, %v2034
    %v2141 = vpack.c.b16 %v2037, %v2035
    %v2142 = vpack.c.b16 %v2040, %v2038
    %v2143 = vpack.c.b16 %v2041, %v2039
    %v2144 = vpack.c.b16 %v2044, %v2042
    %v2145 = vpack.c.b16 %v2045, %v2043
    %v2146 = vpack.c.b16 %v2048, %v2046
    %v2147 = vpack.c.b16 %v2049, %v2047
    %v2148 = vpack.c.b16 %v2052, %v2050
    %v2149 = vpack.c.b16 %v2053, %v2051
    %v2150 = vpack.c.b16 %v2056, %v2054
    %v2151 = vpack.c.b16 %v2057, %v2055
    %v2152 = vpack.c.b16 %v2060, %v2058
    %v2153 = vpack.c.b16 %v2061, %v2059
    %v2154 = vpack.c.b16 %v2064, %v2062
    %v2155 = vpack.c.b16 %v2065, %v2063
    %v2156 = vpack.c.b16 %v2068, %v2066
    %v2157 = vpack.c.b16 %v2069, %v2067
    %v2158 = vpack.c.b16 %v2072, %v2070
    %v2159 = vpack.c.b16 %v2073, %v2071
    %v2160 = vpack.c.b16 %v2076, %v2074
    %v2161 = vpack.c.b16 %v2077, %v2075
    %v2162 = vpack.c.b16 %v2080, %v2078
    %v2163 = vpack.c.b16 %v2081, %v2079
    %v2164 = vpack.c.b16 %v2084, %v2082
    %v2165 = vpack.c.b16 %v2085, %v2083
    %v2166 = vpack.c.b16 %v2088, %v2086
    %v2167 = vpack.c.b16 %v2089, %v2087
    %v2168 = vpack.c.b16 %v2092, %v2090
    %v2169 = vpack.c.b16 %v2093, %v2091
    %v2170 = vpack.c.b16 %v2096, %v2094
    %v2171 = vpack.c.b16 %v2097, %v2095
    %v2172 = vpack.c.b16 %v2100, %v2098
    %v2173 = vpack.c.b16 %v2101, %v2099
    %v2174 = vpack.c.b16 %v2104, %v2102
    %v2175 = vpack.c.b16 %v2105, %v2103
    %v2176 = vpack.c.b16 %v2108, %v2106
    %v2177 = vpack.c.b16 %v2109, %v2107
    %v2178 = vpack.c.b16 %v2112, %v2110
    %v2179 = vpack.c.b16 %v2113, %v2111
    %v2180 = vpack.c.b16 %v2116, %v2114
    %v2181 = vpack.c.b16 %v2117, %v2115
    %2246 = vmatpush.bf16.msra.mxu0 %v2132
    %2247 = vmatpush.bf16.msra.mxu0 %v2130
    %2248 = vmatpush.bf16.msra.mxu0 %v2128
    %2249 = vmatpush.bf16.msra.mxu0 %v2126
    %2250 = vmatpush.bf16.msra.mxu0 %v2124
    %2251 = vmatpush.bf16.msra.mxu0 %v2122
    %2252 = vmatpush.bf16.msra.mxu0 %v2120
    %2253 = vmatpush.bf16.msra.mxu0 %v2118
    %2254 = vmatmul.bf16.gmra.mxu0 %v1852
    %v2255 = vpop.f32.mrf.mxu0
    %v2256 = vadd.f32 %v1922, %v2255
    %v2257 = vpop.f32.mrf.mxu0
    %2258 = vdwg.mxu0
    %2259 = vmatpush.bf16.msra.mxu0 %v2148
    %2260 = vmatpush.bf16.msra.mxu0 %v2146
    %2261 = vmatpush.bf16.msra.mxu0 %v2144
    %2262 = vmatpush.bf16.msra.mxu0 %v2142
    %2263 = vmatpush.bf16.msra.mxu0 %v2140
    %2264 = vmatpush.bf16.msra.mxu0 %v2138
    %2265 = vmatpush.bf16.msra.mxu0 %v2136
    %2266 = vmatpush.bf16.msra.mxu0 %v2134
    %2267 = vmatmul.bf16.gmra.mxu0 %v1853
    %v2268 = vpop.f32.mrf.mxu0
    %v2269 = vadd.f32 %v2256, %v2268
    %v2270 = vpop.f32.mrf.mxu0
    %2271 = vdwg.mxu0
    %2272 = vmatpush.bf16.msra.mxu0 %v2164
    %2273 = vmatpush.bf16.msra.mxu0 %v2162
    %2274 = vmatpush.bf16.msra.mxu0 %v2160
    %2275 = vmatpush.bf16.msra.mxu0 %v2158
    %2276 = vmatpush.bf16.msra.mxu0 %v2156
    %2277 = vmatpush.bf16.msra.mxu0 %v2154
    %2278 = vmatpush.bf16.msra.mxu0 %v2152
    %2279 = vmatpush.bf16.msra.mxu0 %v2150
    %2280 = vmatmul.bf16.gmra.mxu0 %v1854
    %v2281 = vpop.f32.mrf.mxu0
    %v2282 = vadd.f32 %v2269, %v2281
    %v2283 = vpop.f32.mrf.mxu0
    %2284 = vdwg.mxu0
    %2285 = vmatpush.bf16.msra.mxu0 %v2180
    %2286 = vmatpush.bf16.msra.mxu0 %v2178
    %2287 = vmatpush.bf16.msra.mxu0 %v2176
    %2288 = vmatpush.bf16.msra.mxu0 %v2174
    %2289 = vmatpush.bf16.msra.mxu0 %v2172
    %2290 = vmatpush.bf16.msra.mxu0 %v2170
    %2291 = vmatpush.bf16.msra.mxu0 %v2168
    %2292 = vmatpush.bf16.msra.mxu0 %v2166
    %2293 = vmatmul.bf16.gmra.mxu0 %v1855
    %v2294 = vpop.f32.mrf.mxu0
    %v2295 = vadd.f32 %v2282, %v2294
    %v2296 = vpop.f32.mrf.mxu0
    %2297 = vdwg.mxu0
    %2298 = vmatpush.bf16.msra.mxu0 %v2133
    %2299 = vmatpush.bf16.msra.mxu0 %v2131
    %2300 = vmatpush.bf16.msra.mxu0 %v2129
    %2301 = vmatpush.bf16.msra.mxu0 %v2127
    %2302 = vmatpush.bf16.msra.mxu0 %v2125
    %2303 = vmatpush.bf16.msra.mxu0 %v2123
    %2304 = vmatpush.bf16.msra.mxu0 %v2121
    %2305 = vmatpush.bf16.msra.mxu0 %v2119
    %2306 = vmatmul.bf16.gmra.mxu0 %v1852
    %v2307 = vpop.f32.mrf.mxu0
    %v2308 = vadd.f32 %v1923, %v2307
    %v2309 = vpop.f32.mrf.mxu0
    %2310 = vdwg.mxu0
    %2311 = vmatpush.bf16.msra.mxu0 %v2149
    %2312 = vmatpush.bf16.msra.mxu0 %v2147
    %2313 = vmatpush.bf16.msra.mxu0 %v2145
    %2314 = vmatpush.bf16.msra.mxu0 %v2143
    %2315 = vmatpush.bf16.msra.mxu0 %v2141
    %2316 = vmatpush.bf16.msra.mxu0 %v2139
    %2317 = vmatpush.bf16.msra.mxu0 %v2137
    %2318 = vmatpush.bf16.msra.mxu0 %v2135
    %2319 = vmatmul.bf16.gmra.mxu0 %v1853
    %v2320 = vpop.f32.mrf.mxu0
    %v2321 = vadd.f32 %v2308, %v2320
    %v2322 = vpop.f32.mrf.mxu0
    %2323 = vdwg.mxu0
    %2324 = vmatpush.bf16.msra.mxu0 %v2165
    %2325 = vmatpush.bf16.msra.mxu0 %v2163
    %2326 = vmatpush.bf16.msra.mxu0 %v2161
    %2327 = vmatpush.bf16.msra.mxu0 %v2159
    %2328 = vmatpush.bf16.msra.mxu0 %v2157
    %2329 = vmatpush.bf16.msra.mxu0 %v2155
    %2330 = vmatpush.bf16.msra.mxu0 %v2153
    %2331 = vmatpush.bf16.msra.mxu0 %v2151
    %2332 = vmatmul.bf16.gmra.mxu0 %v1854
    %v2333 = vpop.f32.mrf.mxu0
    %v2334 = vadd.f32 %v2321, %v2333
    %v2335 = vpop.f32.mrf.mxu0
    %2336 = vdwg.mxu0
    %2337 = vmatpush.bf16.msra.mxu0 %v2181
    %2338 = vmatpush.bf16.msra.mxu0 %v2179
    %2339 = vmatpush.bf16.msra.mxu0 %v2177
    %2340 = vmatpush.bf16.msra.mxu0 %v2175
    %2341 = vmatpush.bf16.msra.mxu0 %v2173
    %2342 = vmatpush.bf16.msra.mxu0 %v2171
    %2343 = vmatpush.bf16.msra.mxu0 %v2169
    %2344 = vmatpush.bf16.msra.mxu0 %v2167
    %2345 = vmatmul.bf16.gmra.mxu0 %v1855
    %v2346 = vpop.f32.mrf.mxu0
    %v2347 = vadd.f32 %v2334, %v2346
    %v2348 = vpop.f32.mrf.mxu0
    %2349 = vdwg.mxu0
    %v2350 = vld [vmem:[%s1] sm:$0xff]
    %v2351 = vmul.f32 %v2347, 0.5
    %v2352 = vmul.f32 %v2351, 1.442695
    %v2353 = vpow.pop %v2352
    %v2354 = vmul.f32 %v2350, %v2353
    %v2355 = vadd.f32 %v2354, %v2295
    %v2356 = vpack.c.bf16 %v2355, %v2355
    %v2357 = vld [vmem:[#allocation6] sm:$0xff]
    %v2358 = vld [vmem:[#allocation6 + $0x8] sm:$0xff]
    %v2359 = vld [vmem:[#allocation6 + $0x10] sm:$0xff]
    %v2360 = vld [vmem:[#allocation6 + $0x18] sm:$0xff]
    %v2361 = vld [vmem:[#allocation6 + $0x20] sm:$0xff]
    %v2362 = vld [vmem:[#allocation6 + $0x28] sm:$0xff]
    %v2363 = vld [vmem:[#allocation6 + $0x30] sm:$0xff]
    %v2364 = vld [vmem:[#allocation6 + $0x38] sm:$0xff]
    %v2365 = vld [vmem:[#allocation6 + $0x40] sm:$0xff]
    %v2366 = vld [vmem:[#allocation6 + $0x48] sm:$0xff]
    %v2367 = vld [vmem:[#allocation6 + $0x50] sm:$0xff]
    %v2368 = vld [vmem:[#allocation6 + $0x58] sm:$0xff]
    %v2369 = vld [vmem:[#allocation6 + $0x60] sm:$0xff]
    %v2370 = vld [vmem:[#allocation6 + $0x68] sm:$0xff]
    %v2371 = vld [vmem:[#allocation6 + $0x70] sm:$0xff]
    %v2372 = vld [vmem:[#allocation6 + $0x78] sm:$0xff]
    %v2373 = vld [vmem:[#allocation6 + $0x80] sm:$0xff]
    %v2374 = vld [vmem:[#allocation6 + $0x88] sm:$0xff]
    %v2375 = vld [vmem:[#allocation6 + $0x90] sm:$0xff]
    %v2376 = vld [vmem:[#allocation6 + $0x98] sm:$0xff]
    %v2377 = vld [vmem:[#allocation6 + $0xa0] sm:$0xff]
    %v2378 = vld [vmem:[#allocation6 + $0xa8] sm:$0xff]
    %v2379 = vld [vmem:[#allocation6 + $0xb0] sm:$0xff]
    %v2380 = vld [vmem:[#allocation6 + $0xb8] sm:$0xff]
    %v2381 = vld [vmem:[#allocation6 + $0xc0] sm:$0xff]
    %v2382 = vld [vmem:[#allocation6 + $0xc8] sm:$0xff]
    %v2383 = vld [vmem:[#allocation6 + $0xd0] sm:$0xff]
    %v2384 = vld [vmem:[#allocation6 + $0xd8] sm:$0xff]
    %v2385 = vld [vmem:[#allocation6 + $0xe0] sm:$0xff]
    %v2386 = vld [vmem:[#allocation6 + $0xe8] sm:$0xff]
    %v2387 = vld [vmem:[#allocation6 + $0xf0] sm:$0xff]
    %v2388 = vld [vmem:[#allocation6 + $0xf8] sm:$0xff]
    %v2389 = vld [vmem:[%s7] sm:$0xf]
    %v2391 = vperm.slane %v2389, 0
    %v2392 = vperm.slane %v2389, 1
    %v2393 = vperm.slane %v2389, 2
    %v2394 = vperm.slane %v2389, 3
    %v2431 = vunpack.c.l.b16 %v2357
    %v2432 = vunpack.c.h.b16 %v2357
    %v2433 = vunpack.c.l.b16 %v2358
    %v2434 = vunpack.c.h.b16 %v2358
    %v2435 = vunpack.c.l.b16 %v2359
    %v2436 = vunpack.c.h.b16 %v2359
    %v2437 = vunpack.c.l.b16 %v2360
    %v2438 = vunpack.c.h.b16 %v2360
    %v2439 = vunpack.c.l.b16 %v2361
    %v2440 = vunpack.c.h.b16 %v2361
    %v2441 = vunpack.c.l.b16 %v2362
    %v2442 = vunpack.c.h.b16 %v2362
    %v2443 = vunpack.c.l.b16 %v2363
    %v2444 = vunpack.c.h.b16 %v2363
    %v2445 = vunpack.c.l.b16 %v2364
    %v2446 = vunpack.c.h.b16 %v2364
    %v2447 = vunpack.c.l.b16 %v2365
    %v2448 = vunpack.c.h.b16 %v2365
    %v2449 = vunpack.c.l.b16 %v2366
    %v2450 = vunpack.c.h.b16 %v2366
    %v2451 = vunpack.c.l.b16 %v2367
    %v2452 = vunpack.c.h.b16 %v2367
    %v2453 = vunpack.c.l.b16 %v2368
    %v2454 = vunpack.c.h.b16 %v2368
    %v2455 = vunpack.c.l.b16 %v2369
    %v2456 = vunpack.c.h.b16 %v2369
    %v2457 = vunpack.c.l.b16 %v2370
    %v2458 = vunpack.c.h.b16 %v2370
    %v2459 = vunpack.c.l.b16 %v2371
    %v2460 = vunpack.c.h.b16 %v2371
    %v2461 = vunpack.c.l.b16 %v2372
    %v2462 = vunpack.c.h.b16 %v2372
    %v2463 = vunpack.c.l.b16 %v2373
    %v2464 = vunpack.c.h.b16 %v2373
    %v2465 = vunpack.c.l.b16 %v2374
    %v2466 = vunpack.c.h.b16 %v2374
    %v2467 = vunpack.c.l.b16 %v2375
    %v2468 = vunpack.c.h.b16 %v2375
    %v2469 = vunpack.c.l.b16 %v2376
    %v2470 = vunpack.c.h.b16 %v2376
    %v2471 = vunpack.c.l.b16 %v2377
    %v2472 = vunpack.c.h.b16 %v2377
    %v2473 = vunpack.c.l.b16 %v2378
    %v2474 = vunpack.c.h.b16 %v2378
    %v2475 = vunpack.c.l.b16 %v2379
    %v2476 = vunpack.c.h.b16 %v2379
    %v2477 = vunpack.c.l.b16 %v2380
    %v2478 = vunpack.c.h.b16 %v2380
    %v2479 = vunpack.c.l.b16 %v2381
    %v2480 = vunpack.c.h.b16 %v2381
    %v2481 = vunpack.c.l.b16 %v2382
    %v2482 = vunpack.c.h.b16 %v2382
    %v2483 = vunpack.c.l.b16 %v2383
    %v2484 = vunpack.c.h.b16 %v2383
    %v2485 = vunpack.c.l.b16 %v2384
    %v2486 = vunpack.c.h.b16 %v2384
    %v2487 = vunpack.c.l.b16 %v2385
    %v2488 = vunpack.c.h.b16 %v2385
    %v2489 = vunpack.c.l.b16 %v2386
    %v2490 = vunpack.c.h.b16 %v2386
    %v2491 = vunpack.c.l.b16 %v2387
    %v2492 = vunpack.c.h.b16 %v2387
    %v2493 = vunpack.c.l.b16 %v2388
    %v2494 = vunpack.c.h.b16 %v2388
    %v2495 = vpack.c.b16 %v2435, %v2431
    %v2496 = vpack.c.b16 %v2436, %v2432
    %v2497 = vpack.c.b16 %v2437, %v2433
    %v2498 = vpack.c.b16 %v2438, %v2434
    %v2499 = vpack.c.b16 %v2443, %v2439
    %v2500 = vpack.c.b16 %v2444, %v2440
    %v2501 = vpack.c.b16 %v2445, %v2441
    %v2502 = vpack.c.b16 %v2446, %v2442
    %v2503 = vpack.c.b16 %v2451, %v2447
    %v2504 = vpack.c.b16 %v2452, %v2448
    %v2505 = vpack.c.b16 %v2453, %v2449
    %v2506 = vpack.c.b16 %v2454, %v2450
    %v2507 = vpack.c.b16 %v2459, %v2455
    %v2508 = vpack.c.b16 %v2460, %v2456
    %v2509 = vpack.c.b16 %v2461, %v2457
    %v2510 = vpack.c.b16 %v2462, %v2458
    %v2511 = vpack.c.b16 %v2467, %v2463
    %v2512 = vpack.c.b16 %v2468, %v2464
    %v2513 = vpack.c.b16 %v2469, %v2465
    %v2514 = vpack.c.b16 %v2470, %v2466
    %v2515 = vpack.c.b16 %v2475, %v2471
    %v2516 = vpack.c.b16 %v2476, %v2472
    %v2517 = vpack.c.b16 %v2477, %v2473
    %v2518 = vpack.c.b16 %v2478, %v2474
    %v2519 = vpack.c.b16 %v2483, %v2479
    %v2520 = vpack.c.b16 %v2484, %v2480
    %v2521 = vpack.c.b16 %v2485, %v2481
    %v2522 = vpack.c.b16 %v2486, %v2482
    %v2523 = vpack.c.b16 %v2491, %v2487
    %v2524 = vpack.c.b16 %v2492, %v2488
    %v2525 = vpack.c.b16 %v2493, %v2489
    %v2526 = vpack.c.b16 %v2494, %v2490
    %2559 = vmatpush.bf16.msra.mxu0 %v2523
    %2560 = vmatpush.bf16.msra.mxu0 %v2519
    %2561 = vmatpush.bf16.msra.mxu0 %v2515
    %2562 = vmatpush.bf16.msra.mxu0 %v2511
    %2563 = vmatpush.bf16.msra.mxu0 %v2507
    %2564 = vmatpush.bf16.msra.mxu0 %v2503
    %2565 = vmatpush.bf16.msra.mxu0 %v2499
    %2566 = vmatpush.bf16.msra.mxu0 %v2495
    %2567 = vmatmul.bf16.gmra.mxu0 %v2356
    %v2568 = vpop.f32.mrf.mxu0
    %v2569 = vadd.f32 %v2391, %v2568
    %v2570 = vpop.f32.mrf.mxu0
    %2571 = vdwg.mxu0
    %2572 = vmatpush.bf16.msra.mxu0 %v2524
    %2573 = vmatpush.bf16.msra.mxu0 %v2520
    %2574 = vmatpush.bf16.msra.mxu0 %v2516
    %2575 = vmatpush.bf16.msra.mxu0 %v2512
    %2576 = vmatpush.bf16.msra.mxu0 %v2508
    %2577 = vmatpush.bf16.msra.mxu0 %v2504
    %2578 = vmatpush.bf16.msra.mxu0 %v2500
    %2579 = vmatpush.bf16.msra.mxu0 %v2496
    %2580 = vmatmul.bf16.gmra.mxu0 %v2356
    %v2581 = vpop.f32.mrf.mxu0
    %v2582 = vadd.f32 %v2392, %v2581
    %v2583 = vpop.f32.mrf.mxu0
    %2584 = vdwg.mxu0
    %2585 = vmatpush.bf16.msra.mxu0 %v2525
    %2586 = vmatpush.bf16.msra.mxu0 %v2521
    %2587 = vmatpush.bf16.msra.mxu0 %v2517
    %2588 = vmatpush.bf16.msra.mxu0 %v2513
    %2589 = vmatpush.bf16.msra.mxu0 %v2509
    %2590 = vmatpush.bf16.msra.mxu0 %v2505
    %2591 = vmatpush.bf16.msra.mxu0 %v2501
    %2592 = vmatpush.bf16.msra.mxu0 %v2497
    %2593 = vmatmul.bf16.gmra.mxu0 %v2356
    %v2594 = vpop.f32.mrf.mxu0
    %v2595 = vadd.f32 %v2393, %v2594
    %v2596 = vpop.f32.mrf.mxu0
    %2597 = vdwg.mxu0
    %2598 = vmatpush.bf16.msra.mxu0 %v2526
    %2599 = vmatpush.bf16.msra.mxu0 %v2522
    %2600 = vmatpush.bf16.msra.mxu0 %v2518
    %2601 = vmatpush.bf16.msra.mxu0 %v2514
    %2602 = vmatpush.bf16.msra.mxu0 %v2510
    %2603 = vmatpush.bf16.msra.mxu0 %v2506
    %2604 = vmatpush.bf16.msra.mxu0 %v2502
    %2605 = vmatpush.bf16.msra.mxu0 %v2498
    %2606 = vmatmul.bf16.gmra.mxu0 %v2356
    %v2607 = vpop.f32.mrf.mxu0
    %v2608 = vadd.f32 %v2394, %v2607
    %v2609 = vpop.f32.mrf.mxu0
    %2610 = vdwg.mxu0
    %v2611 = vmax.f32 %v2569, 0.0
    %v2612 = vmax.f32 %v2582, 0.0
    %v2613 = vmax.f32 %v2595, 0.0
    %v2614 = vmax.f32 %v2608, 0.0
    %v2615 = vpack.c.bf16 %v2611, %v2611
    %v2616 = vpack.c.bf16 %v2612, %v2612
    %v2617 = vpack.c.bf16 %v2613, %v2613
    %v2618 = vpack.c.bf16 %v2614, %v2614
    %v2619 = vld [vmem:[#allocation7] sm:$0xff]
    %v2620 = vld [vmem:[#allocation7 + $0x8] sm:$0xff]
    %v2621 = vld [vmem:[#allocation7 + $0x10] sm:$0xff]
    %v2622 = vld [vmem:[#allocation7 + $0x18] sm:$0xf]
    %v2623 = vld [vmem:[#allocation7 + $0x1c] sm:$0xff]
    %v2624 = vld [vmem:[#allocation7 + $0x24] sm:$0xff]
    %v2625 = vld [vmem:[#allocation7 + $0x2c] sm:$0xff]
    %v2626 = vld [vmem:[#allocation7 + $0x34] sm:$0xf]
    %v2627 = vld [vmem:[#allocation7 + $0x38] sm:$0xff]
    %v2628 = vld [vmem:[#allocation7 + $0x40] sm:$0xff]
    %v2629 = vld [vmem:[#allocation7 + $0x48] sm:$0xff]
    %v2630 = vld [vmem:[#allocation7 + $0x50] sm:$0xf]
    %v2631 = vld [vmem:[#allocation7 + $0x54] sm:$0xff]
    %v2632 = vld [vmem:[#allocation7 + $0x5c] sm:$0xff]
    %v2633 = vld [vmem:[#allocation7 + $0x64] sm:$0xff]
    %v2634 = vld [vmem:[#allocation7 + $0x6c] sm:$0xf]
    %v2635 = vld [vmem:[#allocation7 + $0x70] sm:$0xff]
    %v2636 = vld [vmem:[#allocation7 + $0x78] sm:$0xff]
    %v2637 = vld [vmem:[#allocation7 + $0x80] sm:$0xff]
    %v2638 = vld [vmem:[#allocation7 + $0x88] sm:$0xf]
    %v2639 = vld [vmem:[#allocation7 + $0x8c] sm:$0xff]
    %v2640 = vld [vmem:[#allocation7 + $0x94] sm:$0xff]
    %v2641 = vld [vmem:[#allocation7 + $0x9c] sm:$0xff]
    %v2642 = vld [vmem:[#allocation7 + $0xa4] sm:$0xf]
    %v2643 = vld [vmem:[#allocation7 + $0xa8] sm:$0xff]
    %v2644 = vld [vmem:[#allocation7 + $0xb0] sm:$0xff]
    %v2645 = vld [vmem:[#allocation7 + $0xb8] sm:$0xff]
    %v2646 = vld [vmem:[#allocation7 + $0xc0] sm:$0xf]
    %v2647 = vld [vmem:[#allocation7 + $0xc4] sm:$0xff]
    %v2648 = vld [vmem:[#allocation7 + $0xcc] sm:$0xff]
    %v2649 = vld [vmem:[#allocation7 + $0xd4] sm:$0xff]
    %v2650 = vld [vmem:[#allocation7 + $0xdc] sm:$0xf]
    %v2651 = vld [vmem:[#allocation7 + $0xe0] sm:$0xff]
    %v2652 = vld [vmem:[#allocation7 + $0xe8] sm:$0xff]
    %v2653 = vld [vmem:[#allocation7 + $0xf0] sm:$0xff]
    %v2654 = vld [vmem:[#allocation7 + $0xf8] sm:$0xf]
    %v2655 = vld [vmem:[#allocation7 + $0xfc] sm:$0xff]
    %v2656 = vld [vmem:[#allocation7 + $0x104] sm:$0xff]
    %v2657 = vld [vmem:[#allocation7 + $0x10c] sm:$0xff]
    %v2658 = vld [vmem:[#allocation7 + $0x114] sm:$0xf]
    %v2659 = vld [vmem:[#allocation7 + $0x118] sm:$0xff]
    %v2660 = vld [vmem:[#allocation7 + $0x120] sm:$0xff]
    %v2661 = vld [vmem:[#allocation7 + $0x128] sm:$0xff]
    %v2662 = vld [vmem:[#allocation7 + $0x130] sm:$0xf]
    %v2663 = vld [vmem:[#allocation7 + $0x134] sm:$0xff]
    %v2664 = vld [vmem:[#allocation7 + $0x13c] sm:$0xff]
    %v2665 = vld [vmem:[#allocation7 + $0x144] sm:$0xff]
    %v2666 = vld [vmem:[#allocation7 + $0x14c] sm:$0xf]
    %v2667 = vld [vmem:[#allocation7 + $0x150] sm:$0xff]
    %v2668 = vld [vmem:[#allocation7 + $0x158] sm:$0xff]
    %v2669 = vld [vmem:[#allocation7 + $0x160] sm:$0xff]
    %v2670 = vld [vmem:[#allocation7 + $0x168] sm:$0xf]
    %v2671 = vld [vmem:[#allocation7 + $0x16c] sm:$0xff]
    %v2672 = vld [vmem:[#allocation7 + $0x174] sm:$0xff]
    %v2673 = vld [vmem:[#allocation7 + $0x17c] sm:$0xff]
    %v2674 = vld [vmem:[#allocation7 + $0x184] sm:$0xf]
    %v2675 = vld [vmem:[#allocation7 + $0x188] sm:$0xff]
    %v2676 = vld [vmem:[#allocation7 + $0x190] sm:$0xff]
    %v2677 = vld [vmem:[#allocation7 + $0x198] sm:$0xff]
    %v2678 = vld [vmem:[#allocation7 + $0x1a0] sm:$0xf]
    %v2679 = vld [vmem:[#allocation7 + $0x1a4] sm:$0xff]
    %v2680 = vld [vmem:[#allocation7 + $0x1ac] sm:$0xff]
    %v2681 = vld [vmem:[#allocation7 + $0x1b4] sm:$0xff]
    %v2682 = vld [vmem:[#allocation7 + $0x1bc] sm:$0xf]
    %v2683 = vld [vmem:[#allocation7 + $0x1c0] sm:$0xff]
    %v2684 = vld [vmem:[#allocation7 + $0x1c8] sm:$0xff]
    %v2685 = vld [vmem:[#allocation7 + $0x1d0] sm:$0xff]
    %v2686 = vld [vmem:[#allocation7 + $0x1d8] sm:$0xf]
    %v2687 = vld [vmem:[#allocation7 + $0x1dc] sm:$0xff]
    %v2688 = vld [vmem:[#allocation7 + $0x1e4] sm:$0xff]
    %v2689 = vld [vmem:[#allocation7 + $0x1ec] sm:$0xff]
    %v2690 = vld [vmem:[#allocation7 + $0x1f4] sm:$0xf]
    %v2691 = vld [vmem:[#allocation7 + $0x1f8] sm:$0xff]
    %v2692 = vld [vmem:[#allocation7 + $0x200] sm:$0xff]
    %v2693 = vld [vmem:[#allocation7 + $0x208] sm:$0xff]
    %v2694 = vld [vmem:[#allocation7 + $0x210] sm:$0xf]
    %v2695 = vld [vmem:[#allocation7 + $0x214] sm:$0xff]
    %v2696 = vld [vmem:[#allocation7 + $0x21c] sm:$0xff]
    %v2697 = vld [vmem:[#allocation7 + $0x224] sm:$0xff]
    %v2698 = vld [vmem:[#allocation7 + $0x22c] sm:$0xf]
    %v2699 = vld [vmem:[#allocation7 + $0x230] sm:$0xff]
    %v2700 = vld [vmem:[#allocation7 + $0x238] sm:$0xff]
    %v2701 = vld [vmem:[#allocation7 + $0x240] sm:$0xff]
    %v2702 = vld [vmem:[#allocation7 + $0x248] sm:$0xf]
    %v2703 = vld [vmem:[#allocation7 + $0x24c] sm:$0xff]
    %v2704 = vld [vmem:[#allocation7 + $0x254] sm:$0xff]
    %v2705 = vld [vmem:[#allocation7 + $0x25c] sm:$0xff]
    %v2706 = vld [vmem:[#allocation7 + $0x264] sm:$0xf]
    %v2707 = vld [vmem:[#allocation7 + $0x268] sm:$0xff]
    %v2708 = vld [vmem:[#allocation7 + $0x270] sm:$0xff]
    %v2709 = vld [vmem:[#allocation7 + $0x278] sm:$0xff]
    %v2710 = vld [vmem:[#allocation7 + $0x280] sm:$0xf]
    %v2711 = vld [vmem:[#allocation7 + $0x284] sm:$0xff]
    %v2712 = vld [vmem:[#allocation7 + $0x28c] sm:$0xff]
    %v2713 = vld [vmem:[#allocation7 + $0x294] sm:$0xff]
    %v2714 = vld [vmem:[#allocation7 + $0x29c] sm:$0xf]
    %v2715 = vld [vmem:[#allocation7 + $0x2a0] sm:$0xff]
    %v2716 = vld [vmem:[#allocation7 + $0x2a8] sm:$0xff]
    %v2717 = vld [vmem:[#allocation7 + $0x2b0] sm:$0xff]
    %v2718 = vld [vmem:[#allocation7 + $0x2b8] sm:$0xf]
    %v2719 = vld [vmem:[#allocation7 + $0x2bc] sm:$0xff]
    %v2720 = vld [vmem:[#allocation7 + $0x2c4] sm:$0xff]
    %v2721 = vld [vmem:[#allocation7 + $0x2cc] sm:$0xff]
    %v2722 = vld [vmem:[#allocation7 + $0x2d4] sm:$0xf]
    %v2723 = vld [vmem:[#allocation7 + $0x2d8] sm:$0xff]
    %v2724 = vld [vmem:[#allocation7 + $0x2e0] sm:$0xff]
    %v2725 = vld [vmem:[#allocation7 + $0x2e8] sm:$0xff]
    %v2726 = vld [vmem:[#allocation7 + $0x2f0] sm:$0xf]
    %v2727 = vld [vmem:[#allocation7 + $0x2f4] sm:$0xff]
    %v2728 = vld [vmem:[#allocation7 + $0x2fc] sm:$0xff]
    %v2729 = vld [vmem:[#allocation7 + $0x304] sm:$0xff]
    %v2730 = vld [vmem:[#allocation7 + $0x30c] sm:$0xf]
    %v2731 = vld [vmem:[#allocation7 + $0x310] sm:$0xff]
    %v2732 = vld [vmem:[#allocation7 + $0x318] sm:$0xff]
    %v2733 = vld [vmem:[#allocation7 + $0x320] sm:$0xff]
    %v2734 = vld [vmem:[#allocation7 + $0x328] sm:$0xf]
    %v2735 = vld [vmem:[#allocation7 + $0x32c] sm:$0xff]
    %v2736 = vld [vmem:[#allocation7 + $0x334] sm:$0xff]
    %v2737 = vld [vmem:[#allocation7 + $0x33c] sm:$0xff]
    %v2738 = vld [vmem:[#allocation7 + $0x344] sm:$0xf]
    %v2739 = vld [vmem:[#allocation7 + $0x348] sm:$0xff]
    %v2740 = vld [vmem:[#allocation7 + $0x350] sm:$0xff]
    %v2741 = vld [vmem:[#allocation7 + $0x358] sm:$0xff]
    %v2742 = vld [vmem:[#allocation7 + $0x360] sm:$0xf]
    %v2743 = vld [vmem:[#allocation7 + $0x364] sm:$0xff]
    %v2744 = vld [vmem:[#allocation7 + $0x36c] sm:$0xff]
    %v2745 = vld [vmem:[#allocation7 + $0x374] sm:$0xff]
    %v2746 = vld [vmem:[#allocation7 + $0x37c] sm:$0xf]
    %v2747 = vld [vmem:[#allocation7 + $0x380] sm:$0xff]
    %v2748 = vld [vmem:[#allocation7 + $0x388] sm:$0xff]
    %v2749 = vld [vmem:[#allocation7 + $0x390] sm:$0xff]
    %v2750 = vld [vmem:[#allocation7 + $0x398] sm:$0xf]
    %v2751 = vld [vmem:[#allocation7 + $0x39c] sm:$0xff]
    %v2752 = vld [vmem:[#allocation7 + $0x3a4] sm:$0xff]
    %v2753 = vld [vmem:[#allocation7 + $0x3ac] sm:$0xff]
    %v2754 = vld [vmem:[#allocation7 + $0x3b4] sm:$0xf]
    %v2755 = vld [vmem:[#allocation7 + $0x3b8] sm:$0xff]
    %v2756 = vld [vmem:[#allocation7 + $0x3c0] sm:$0xff]
    %v2757 = vld [vmem:[#allocation7 + $0x3c8] sm:$0xff]
    %v2758 = vld [vmem:[#allocation7 + $0x3d0] sm:$0xf]
    %v2759 = vld [vmem:[#allocation7 + $0x3d4] sm:$0xff]
    %v2760 = vld [vmem:[#allocation7 + $0x3dc] sm:$0xff]
    %v2761 = vld [vmem:[#allocation7 + $0x3e4] sm:$0xff]
    %v2762 = vld [vmem:[#allocation7 + $0x3ec] sm:$0xf]
    %v2763 = vld [vmem:[#allocation7 + $0x3f0] sm:$0xff]
    %v2764 = vld [vmem:[#allocation7 + $0x3f8] sm:$0xff]
    %v2765 = vld [vmem:[#allocation7 + $0x400] sm:$0xff]
    %v2766 = vld [vmem:[#allocation7 + $0x408] sm:$0xf]
    %v2767 = vld [vmem:[#allocation7 + $0x40c] sm:$0xff]
    %v2768 = vld [vmem:[#allocation7 + $0x414] sm:$0xff]
    %v2769 = vld [vmem:[#allocation7 + $0x41c] sm:$0xff]
    %v2770 = vld [vmem:[#allocation7 + $0x424] sm:$0xf]
    %v2771 = vld [vmem:[#allocation7 + $0x428] sm:$0xff]
    %v2772 = vld [vmem:[#allocation7 + $0x430] sm:$0xff]
    %v2773 = vld [vmem:[#allocation7 + $0x438] sm:$0xff]
    %v2774 = vld [vmem:[#allocation7 + $0x440] sm:$0xf]
    %v2775 = vld [vmem:[#allocation7 + $0x444] sm:$0xff]
    %v2776 = vld [vmem:[#allocation7 + $0x44c] sm:$0xff]
    %v2777 = vld [vmem:[#allocation7 + $0x454] sm:$0xff]
    %v2778 = vld [vmem:[#allocation7 + $0x45c] sm:$0xf]
    %v2779 = vld [vmem:[#allocation7 + $0x460] sm:$0xff]
    %v2780 = vld [vmem:[#allocation7 + $0x468] sm:$0xff]
    %v2781 = vld [vmem:[#allocation7 + $0x470] sm:$0xff]
    %v2782 = vld [vmem:[#allocation7 + $0x478] sm:$0xf]
    %v2783 = vld [vmem:[#allocation7 + $0x47c] sm:$0xff]
    %v2784 = vld [vmem:[#allocation7 + $0x484] sm:$0xff]
    %v2785 = vld [vmem:[#allocation7 + $0x48c] sm:$0xff]
    %v2786 = vld [vmem:[#allocation7 + $0x494] sm:$0xf]
    %v2787 = vld [vmem:[#allocation7 + $0x498] sm:$0xff]
    %v2788 = vld [vmem:[#allocation7 + $0x4a0] sm:$0xff]
    %v2789 = vld [vmem:[#allocation7 + $0x4a8] sm:$0xff]
    %v2790 = vld [vmem:[#allocation7 + $0x4b0] sm:$0xf]
    %v2791 = vld [vmem:[#allocation7 + $0x4b4] sm:$0xff]
    %v2792 = vld [vmem:[#allocation7 + $0x4bc] sm:$0xff]
    %v2793 = vld [vmem:[#allocation7 + $0x4c4] sm:$0xff]
    %v2794 = vld [vmem:[#allocation7 + $0x4cc] sm:$0xf]
    %v2795 = vld [vmem:[#allocation7 + $0x4d0] sm:$0xff]
    %v2796 = vld [vmem:[#allocation7 + $0x4d8] sm:$0xff]
    %v2797 = vld [vmem:[#allocation7 + $0x4e0] sm:$0xff]
    %v2798 = vld [vmem:[#allocation7 + $0x4e8] sm:$0xf]
    %v2799 = vld [vmem:[#allocation7 + $0x4ec] sm:$0xff]
    %v2800 = vld [vmem:[#allocation7 + $0x4f4] sm:$0xff]
    %v2801 = vld [vmem:[#allocation7 + $0x4fc] sm:$0xff]
    %v2802 = vld [vmem:[#allocation7 + $0x504] sm:$0xf]
    %v2803 = vld [vmem:[#allocation7 + $0x508] sm:$0xff]
    %v2804 = vld [vmem:[#allocation7 + $0x510] sm:$0xff]
    %v2805 = vld [vmem:[#allocation7 + $0x518] sm:$0xff]
    %v2806 = vld [vmem:[#allocation7 + $0x520] sm:$0xf]
    %v2807 = vld [vmem:[#allocation7 + $0x524] sm:$0xff]
    %v2808 = vld [vmem:[#allocation7 + $0x52c] sm:$0xff]
    %v2809 = vld [vmem:[#allocation7 + $0x534] sm:$0xff]
    %v2810 = vld [vmem:[#allocation7 + $0x53c] sm:$0xf]
    %v2811 = vld [vmem:[#allocation7 + $0x540] sm:$0xff]
    %v2812 = vld [vmem:[#allocation7 + $0x548] sm:$0xff]
    %v2813 = vld [vmem:[#allocation7 + $0x550] sm:$0xff]
    %v2814 = vld [vmem:[#allocation7 + $0x558] sm:$0xf]
    %v2815 = vld [vmem:[#allocation7 + $0x55c] sm:$0xff]
    %v2816 = vld [vmem:[#allocation7 + $0x564] sm:$0xff]
    %v2817 = vld [vmem:[#allocation7 + $0x56c] sm:$0xff]
    %v2818 = vld [vmem:[#allocation7 + $0x574] sm:$0xf]
    %v2819 = vld [vmem:[#allocation7 + $0x578] sm:$0xff]
    %v2820 = vld [vmem:[#allocation7 + $0x580] sm:$0xff]
    %v2821 = vld [vmem:[#allocation7 + $0x588] sm:$0xff]
    %v2822 = vld [vmem:[#allocation7 + $0x590] sm:$0xf]
    %v2823 = vld [vmem:[#allocation7 + $0x594] sm:$0xff]
    %v2824 = vld [vmem:[#allocation7 + $0x59c] sm:$0xff]
    %v2825 = vld [vmem:[#allocation7 + $0x5a4] sm:$0xff]
    %v2826 = vld [vmem:[#allocation7 + $0x5ac] sm:$0xf]
    %v2827 = vld [vmem:[#allocation7 + $0x5b0] sm:$0xff]
    %v2828 = vld [vmem:[#allocation7 + $0x5b8] sm:$0xff]
    %v2829 = vld [vmem:[#allocation7 + $0x5c0] sm:$0xff]
    %v2830 = vld [vmem:[#allocation7 + $0x5c8] sm:$0xf]
    %v2831 = vld [vmem:[#allocation7 + $0x5cc] sm:$0xff]
    %v2832 = vld [vmem:[#allocation7 + $0x5d4] sm:$0xff]
    %v2833 = vld [vmem:[#allocation7 + $0x5dc] sm:$0xff]
    %v2834 = vld [vmem:[#allocation7 + $0x5e4] sm:$0xf]
    %v2835 = vld [vmem:[#allocation7 + $0x5e8] sm:$0xff]
    %v2836 = vld [vmem:[#allocation7 + $0x5f0] sm:$0xff]
    %v2837 = vld [vmem:[#allocation7 + $0x5f8] sm:$0xff]
    %v2838 = vld [vmem:[#allocation7 + $0x600] sm:$0xf]
    %v2839 = vld [vmem:[#allocation7 + $0x604] sm:$0xff]
    %v2840 = vld [vmem:[#allocation7 + $0x60c] sm:$0xff]
    %v2841 = vld [vmem:[#allocation7 + $0x614] sm:$0xff]
    %v2842 = vld [vmem:[#allocation7 + $0x61c] sm:$0xf]
    %v2843 = vld [vmem:[#allocation7 + $0x620] sm:$0xff]
    %v2844 = vld [vmem:[#allocation7 + $0x628] sm:$0xff]
    %v2845 = vld [vmem:[#allocation7 + $0x630] sm:$0xff]
    %v2846 = vld [vmem:[#allocation7 + $0x638] sm:$0xf]
    %v2847 = vld [vmem:[#allocation7 + $0x63c] sm:$0xff]
    %v2848 = vld [vmem:[#allocation7 + $0x644] sm:$0xff]
    %v2849 = vld [vmem:[#allocation7 + $0x64c] sm:$0xff]
    %v2850 = vld [vmem:[#allocation7 + $0x654] sm:$0xf]
    %v2851 = vld [vmem:[#allocation7 + $0x658] sm:$0xff]
    %v2852 = vld [vmem:[#allocation7 + $0x660] sm:$0xff]
    %v2853 = vld [vmem:[#allocation7 + $0x668] sm:$0xff]
    %v2854 = vld [vmem:[#allocation7 + $0x670] sm:$0xf]
    %v2855 = vld [vmem:[#allocation7 + $0x674] sm:$0xff]
    %v2856 = vld [vmem:[#allocation7 + $0x67c] sm:$0xff]
    %v2857 = vld [vmem:[#allocation7 + $0x684] sm:$0xff]
    %v2858 = vld [vmem:[#allocation7 + $0x68c] sm:$0xf]
    %v2859 = vld [vmem:[#allocation7 + $0x690] sm:$0xff]
    %v2860 = vld [vmem:[#allocation7 + $0x698] sm:$0xff]
    %v2861 = vld [vmem:[#allocation7 + $0x6a0] sm:$0xff]
    %v2862 = vld [vmem:[#allocation7 + $0x6a8] sm:$0xf]
    %v2863 = vld [vmem:[#allocation7 + $0x6ac] sm:$0xff]
    %v2864 = vld [vmem:[#allocation7 + $0x6b4] sm:$0xff]
    %v2865 = vld [vmem:[#allocation7 + $0x6bc] sm:$0xff]
    %v2866 = vld [vmem:[#allocation7 + $0x6c4] sm:$0xf]
    %v2867 = vld [vmem:[#allocation7 + $0x6c8] sm:$0xff]
    %v2868 = vld [vmem:[#allocation7 + $0x6d0] sm:$0xff]
    %v2869 = vld [vmem:[#allocation7 + $0x6d8] sm:$0xff]
    %v2870 = vld [vmem:[#allocation7 + $0x6e0] sm:$0xf]
    %v2871 = vld [vmem:[#allocation7 + $0x6e4] sm:$0xff]
    %v2872 = vld [vmem:[#allocation7 + $0x6ec] sm:$0xff]
    %v2873 = vld [vmem:[#allocation7 + $0x6f4] sm:$0xff]
    %v2874 = vld [vmem:[#allocation7 + $0x6fc] sm:$0xf]
    %v2875 = vld [vmem:[%s9] sm:$0xff]
    %v2877 = vperm.slane %v2875, 0
    %v2878 = vperm.slane %v2875, 1
    %v2879 = vperm.slane %v2875, 2
    %v2880 = vperm.slane %v2875, 3
    %v2881 = vperm.slane %v2875, 4
    %v2882 = vperm.slane %v2875, 5
    %v2883 = vperm.slane %v2875, 6
    %v3147 = vunpack.c.l.b16 %v2619
    %v3148 = vunpack.c.h.b16 %v2619
    %v3149 = vunpack.c.l.b16 %v2620
    %v3150 = vunpack.c.h.b16 %v2620
    %v3151 = vunpack.c.l.b16 %v2621
    %v3152 = vunpack.c.h.b16 %v2621
    %v3153 = vunpack.c.l.b16 %v2622
    %v3154 = vunpack.c.l.b16 %v2623
    %v3155 = vunpack.c.h.b16 %v2623
    %v3156 = vunpack.c.l.b16 %v2624
    %v3157 = vunpack.c.h.b16 %v2624
    %v3158 = vunpack.c.l.b16 %v2625
    %v3159 = vunpack.c.h.b16 %v2625
    %v3160 = vunpack.c.l.b16 %v2626
    %v3161 = vunpack.c.l.b16 %v2627
    %v3162 = vunpack.c.h.b16 %v2627
    %v3163 = vunpack.c.l.b16 %v2628
    %v3164 = vunpack.c.h.b16 %v2628
    %v3165 = vunpack.c.l.b16 %v2629
    %v3166 = vunpack.c.h.b16 %v2629
    %v3167 = vunpack.c.l.b16 %v2630
    %v3168 = vunpack.c.l.b16 %v2631
    %v3169 = vunpack.c.h.b16 %v2631
    %v3170 = vunpack.c.l.b16 %v2632
    %v3171 = vunpack.c.h.b16 %v2632
    %v3172 = vunpack.c.l.b16 %v2633
    %v3173 = vunpack.c.h.b16 %v2633
    %v3174 = vunpack.c.l.b16 %v2634
    %v3175 = vunpack.c.l.b16 %v2635
    %v3176 = vunpack.c.h.b16 %v2635
    %v3177 = vunpack.c.l.b16 %v2636
    %v3178 = vunpack.c.h.b16 %v2636
    %v3179 = vunpack.c.l.b16 %v2637
    %v3180 = vunpack.c.h.b16 %v2637
    %v3181 = vunpack.c.l.b16 %v2638
    %v3182 = vunpack.c.l.b16 %v2639
    %v3183 = vunpack.c.h.b16 %v2639
    %v3184 = vunpack.c.l.b16 %v2640
    %v3185 = vunpack.c.h.b16 %v2640
    %v3186 = vunpack.c.l.b16 %v2641
    %v3187 = vunpack.c.h.b16 %v2641
    %v3188 = vunpack.c.l.b16 %v2642
    %v3189 = vunpack.c.l.b16 %v2643
    %v3190 = vunpack.c.h.b16 %v2643
    %v3191 = vunpack.c.l.b16 %v2644
    %v3192 = vunpack.c.h.b16 %v2644
    %v3193 = vunpack.c.l.b16 %v2645
    %v3194 = vunpack.c.h.b16 %v2645
    %v3195 = vunpack.c.l.b16 %v2646
    %v3196 = vunpack.c.l.b16 %v2647
    %v3197 = vunpack.c.h.b16 %v2647
    %v3198 = vunpack.c.l.b16 %v2648
    %v3199 = vunpack.c.h.b16 %v2648
    %v3200 = vunpack.c.l.b16 %v2649
    %v3201 = vunpack.c.h.b16 %v2649
    %v3202 = vunpack.c.l.b16 %v2650
    %v3203 = vunpack.c.l.b16 %v2651
    %v3204 = vunpack.c.h.b16 %v2651
    %v3205 = vunpack.c.l.b16 %v2652
    %v3206 = vunpack.c.h.b16 %v2652
    %v3207 = vunpack.c.l.b16 %v2653
    %v3208 = vunpack.c.h.b16 %v2653
    %v3209 = vunpack.c.l.b16 %v2654
    %v3210 = vunpack.c.l.b16 %v2655
    %v3211 = vunpack.c.h.b16 %v2655
    %v3212 = vunpack.c.l.b16 %v2656
    %v3213 = vunpack.c.h.b16 %v2656
    %v3214 = vunpack.c.l.b16 %v2657
    %v3215 = vunpack.c.h.b16 %v2657
    %v3216 = vunpack.c.l.b16 %v2658
    %v3217 = vunpack.c.l.b16 %v2659
    %v3218 = vunpack.c.h.b16 %v2659
    %v3219 = vunpack.c.l.b16 %v2660
    %v3220 = vunpack.c.h.b16 %v2660
    %v3221 = vunpack.c.l.b16 %v2661
    %v3222 = vunpack.c.h.b16 %v2661
    %v3223 = vunpack.c.l.b16 %v2662
    %v3224 = vunpack.c.l.b16 %v2663
    %v3225 = vunpack.c.h.b16 %v2663
    %v3226 = vunpack.c.l.b16 %v2664
    %v3227 = vunpack.c.h.b16 %v2664
    %v3228 = vunpack.c.l.b16 %v2665
    %v3229 = vunpack.c.h.b16 %v2665
    %v3230 = vunpack.c.l.b16 %v2666
    %v3231 = vunpack.c.l.b16 %v2667
    %v3232 = vunpack.c.h.b16 %v2667
    %v3233 = vunpack.c.l.b16 %v2668
    %v3234 = vunpack.c.h.b16 %v2668
    %v3235 = vunpack.c.l.b16 %v2669
    %v3236 = vunpack.c.h.b16 %v2669
    %v3237 = vunpack.c.l.b16 %v2670
    %v3238 = vunpack.c.l.b16 %v2671
    %v3239 = vunpack.c.h.b16 %v2671
    %v3240 = vunpack.c.l.b16 %v2672
    %v3241 = vunpack.c.h.b16 %v2672
    %v3242 = vunpack.c.l.b16 %v2673
    %v3243 = vunpack.c.h.b16 %v2673
    %v3244 = vunpack.c.l.b16 %v2674
    %v3245 = vunpack.c.l.b16 %v2675
    %v3246 = vunpack.c.h.b16 %v2675
    %v3247 = vunpack.c.l.b16 %v2676
    %v3248 = vunpack.c.h.b16 %v2676
    %v3249 = vunpack.c.l.b16 %v2677
    %v3250 = vunpack.c.h.b16 %v2677
    %v3251 = vunpack.c.l.b16 %v2678
    %v3252 = vunpack.c.l.b16 %v2679
    %v3253 = vunpack.c.h.b16 %v2679
    %v3254 = vunpack.c.l.b16 %v2680
    %v3255 = vunpack.c.h.b16 %v2680
    %v3256 = vunpack.c.l.b16 %v2681
    %v3257 = vunpack.c.h.b16 %v2681
    %v3258 = vunpack.c.l.b16 %v2682
    %v3259 = vunpack.c.l.b16 %v2683
    %v3260 = vunpack.c.h.b16 %v2683
    %v3261 = vunpack.c.l.b16 %v2684
    %v3262 = vunpack.c.h.b16 %v2684
    %v3263 = vunpack.c.l.b16 %v2685
    %v3264 = vunpack.c.h.b16 %v2685
    %v3265 = vunpack.c.l.b16 %v2686
    %v3266 = vunpack.c.l.b16 %v2687
    %v3267 = vunpack.c.h.b16 %v2687
    %v3268 = vunpack.c.l.b16 %v2688
    %v3269 = vunpack.c.h.b16 %v2688
    %v3270 = vunpack.c.l.b16 %v2689
    %v3271 = vunpack.c.h.b16 %v2689
    %v3272 = vunpack.c.l.b16 %v2690
    %v3273 = vunpack.c.l.b16 %v2691
    %v3274 = vunpack.c.h.b16 %v2691
    %v3275 = vunpack.c.l.b16 %v2692
    %v3276 = vunpack.c.h.b16 %v2692
    %v3277 = vunpack.c.l.b16 %v2693
    %v3278 = vunpack.c.h.b16 %v2693
    %v3279 = vunpack.c.l.b16 %v2694
    %v3280 = vunpack.c.l.b16 %v2695
    %v3281 = vunpack.c.h.b16 %v2695
    %v3282 = vunpack.c.l.b16 %v2696
    %v3283 = vunpack.c.h.b16 %v2696
    %v3284 = vunpack.c.l.b16 %v2697
    %v3285 = vunpack.c.h.b16 %v2697
    %v3286 = vunpack.c.l.b16 %v2698
    %v3287 = vunpack.c.l.b16 %v2699
    %v3288 = vunpack.c.h.b16 %v2699
    %v3289 = vunpack.c.l.b16 %v2700
    %v3290 = vunpack.c.h.b16 %v2700
    %v3291 = vunpack.c.l.b16 %v2701
    %v3292 = vunpack.c.h.b16 %v2701
    %v3293 = vunpack.c.l.b16 %v2702
    %v3294 = vunpack.c.l.b16 %v2703
    %v3295 = vunpack.c.h.b16 %v2703
    %v3296 = vunpack.c.l.b16 %v2704
    %v3297 = vunpack.c.h.b16 %v2704
    %v3298 = vunpack.c.l.b16 %v2705
    %v3299 = vunpack.c.h.b16 %v2705
    %v3300 = vunpack.c.l.b16 %v2706
    %v3301 = vunpack.c.l.b16 %v2707
    %v3302 = vunpack.c.h.b16 %v2707
    %v3303 = vunpack.c.l.b16 %v2708
    %v3304 = vunpack.c.h.b16 %v2708
    %v3305 = vunpack.c.l.b16 %v2709
    %v3306 = vunpack.c.h.b16 %v2709
    %v3307 = vunpack.c.l.b16 %v2710
    %v3308 = vunpack.c.l.b16 %v2711
    %v3309 = vunpack.c.h.b16 %v2711
    %v3310 = vunpack.c.l.b16 %v2712
    %v3311 = vunpack.c.h.b16 %v2712
    %v3312 = vunpack.c.l.b16 %v2713
    %v3313 = vunpack.c.h.b16 %v2713
    %v3314 = vunpack.c.l.b16 %v2714
    %v3315 = vunpack.c.l.b16 %v2715
    %v3316 = vunpack.c.h.b16 %v2715
    %v3317 = vunpack.c.l.b16 %v2716
    %v3318 = vunpack.c.h.b16 %v2716
    %v3319 = vunpack.c.l.b16 %v2717
    %v3320 = vunpack.c.h.b16 %v2717
    %v3321 = vunpack.c.l.b16 %v2718
    %v3322 = vunpack.c.l.b16 %v2719
    %v3323 = vunpack.c.h.b16 %v2719
    %v3324 = vunpack.c.l.b16 %v2720
    %v3325 = vunpack.c.h.b16 %v2720
    %v3326 = vunpack.c.l.b16 %v2721
    %v3327 = vunpack.c.h.b16 %v2721
    %v3328 = vunpack.c.l.b16 %v2722
    %v3329 = vunpack.c.l.b16 %v2723
    %v3330 = vunpack.c.h.b16 %v2723
    %v3331 = vunpack.c.l.b16 %v2724
    %v3332 = vunpack.c.h.b16 %v2724
    %v3333 = vunpack.c.l.b16 %v2725
    %v3334 = vunpack.c.h.b16 %v2725
    %v3335 = vunpack.c.l.b16 %v2726
    %v3336 = vunpack.c.l.b16 %v2727
    %v3337 = vunpack.c.h.b16 %v2727
    %v3338 = vunpack.c.l.b16 %v2728
    %v3339 = vunpack.c.h.b16 %v2728
    %v3340 = vunpack.c.l.b16 %v2729
    %v3341 = vunpack.c.h.b16 %v2729
    %v3342 = vunpack.c.l.b16 %v2730
    %v3343 = vunpack.c.l.b16 %v2731
    %v3344 = vunpack.c.h.b16 %v2731
    %v3345 = vunpack.c.l.b16 %v2732
    %v3346 = vunpack.c.h.b16 %v2732
    %v3347 = vunpack.c.l.b16 %v2733
    %v3348 = vunpack.c.h.b16 %v2733
    %v3349 = vunpack.c.l.b16 %v2734
    %v3350 = vunpack.c.l.b16 %v2735
    %v3351 = vunpack.c.h.b16 %v2735
    %v3352 = vunpack.c.l.b16 %v2736
    %v3353 = vunpack.c.h.b16 %v2736
    %v3354 = vunpack.c.l.b16 %v2737
    %v3355 = vunpack.c.h.b16 %v2737
    %v3356 = vunpack.c.l.b16 %v2738
    %v3357 = vunpack.c.l.b16 %v2739
    %v3358 = vunpack.c.h.b16 %v2739
    %v3359 = vunpack.c.l.b16 %v2740
    %v3360 = vunpack.c.h.b16 %v2740
    %v3361 = vunpack.c.l.b16 %v2741
    %v3362 = vunpack.c.h.b16 %v2741
    %v3363 = vunpack.c.l.b16 %v2742
    %v3364 = vunpack.c.l.b16 %v2743
    %v3365 = vunpack.c.h.b16 %v2743
    %v3366 = vunpack.c.l.b16 %v2744
    %v3367 = vunpack.c.h.b16 %v2744
    %v3368 = vunpack.c.l.b16 %v2745
    %v3369 = vunpack.c.h.b16 %v2745
    %v3370 = vunpack.c.l.b16 %v2746
    %v3371 = vunpack.c.l.b16 %v2747
    %v3372 = vunpack.c.h.b16 %v2747
    %v3373 = vunpack.c.l.b16 %v2748
    %v3374 = vunpack.c.h.b16 %v2748
    %v3375 = vunpack.c.l.b16 %v2749
    %v3376 = vunpack.c.h.b16 %v2749
    %v3377 = vunpack.c.l.b16 %v2750
    %v3378 = vunpack.c.l.b16 %v2751
    %v3379 = vunpack.c.h.b16 %v2751
    %v3380 = vunpack.c.l.b16 %v2752
    %v3381 = vunpack.c.h.b16 %v2752
    %v3382 = vunpack.c.l.b16 %v2753
    %v3383 = vunpack.c.h.b16 %v2753
    %v3384 = vunpack.c.l.b16 %v2754
    %v3385 = vunpack.c.l.b16 %v2755
    %v3386 = vunpack.c.h.b16 %v2755
    %v3387 = vunpack.c.l.b16 %v2756
    %v3388 = vunpack.c.h.b16 %v2756
    %v3389 = vunpack.c.l.b16 %v2757
    %v3390 = vunpack.c.h.b16 %v2757
    %v3391 = vunpack.c.l.b16 %v2758
    %v3392 = vunpack.c.l.b16 %v2759
    %v3393 = vunpack.c.h.b16 %v2759
    %v3394 = vunpack.c.l.b16 %v2760
    %v3395 = vunpack.c.h.b16 %v2760
    %v3396 = vunpack.c.l.b16 %v2761
    %v3397 = vunpack.c.h.b16 %v2761
    %v3398 = vunpack.c.l.b16 %v2762
    %v3399 = vunpack.c.l.b16 %v2763
    %v3400 = vunpack.c.h.b16 %v2763
    %v3401 = vunpack.c.l.b16 %v2764
    %v3402 = vunpack.c.h.b16 %v2764
    %v3403 = vunpack.c.l.b16 %v2765
    %v3404 = vunpack.c.h.b16 %v2765
    %v3405 = vunpack.c.l.b16 %v2766
    %v3406 = vunpack.c.l.b16 %v2767
    %v3407 = vunpack.c.h.b16 %v2767
    %v3408 = vunpack.c.l.b16 %v2768
    %v3409 = vunpack.c.h.b16 %v2768
    %v3410 = vunpack.c.l.b16 %v2769
    %v3411 = vunpack.c.h.b16 %v2769
    %v3412 = vunpack.c.l.b16 %v2770
    %v3413 = vunpack.c.l.b16 %v2771
    %v3414 = vunpack.c.h.b16 %v2771
    %v3415 = vunpack.c.l.b16 %v2772
    %v3416 = vunpack.c.h.b16 %v2772
    %v3417 = vunpack.c.l.b16 %v2773
    %v3418 = vunpack.c.h.b16 %v2773
    %v3419 = vunpack.c.l.b16 %v2774
    %v3420 = vunpack.c.l.b16 %v2775
    %v3421 = vunpack.c.h.b16 %v2775
    %v3422 = vunpack.c.l.b16 %v2776
    %v3423 = vunpack.c.h.b16 %v2776
    %v3424 = vunpack.c.l.b16 %v2777
    %v3425 = vunpack.c.h.b16 %v2777
    %v3426 = vunpack.c.l.b16 %v2778
    %v3427 = vunpack.c.l.b16 %v2779
    %v3428 = vunpack.c.h.b16 %v2779
    %v3429 = vunpack.c.l.b16 %v2780
    %v3430 = vunpack.c.h.b16 %v2780
    %v3431 = vunpack.c.l.b16 %v2781
    %v3432 = vunpack.c.h.b16 %v2781
    %v3433 = vunpack.c.l.b16 %v2782
    %v3434 = vunpack.c.l.b16 %v2783
    %v3435 = vunpack.c.h.b16 %v2783
    %v3436 = vunpack.c.l.b16 %v2784
    %v3437 = vunpack.c.h.b16 %v2784
    %v3438 = vunpack.c.l.b16 %v2785
    %v3439 = vunpack.c.h.b16 %v2785
    %v3440 = vunpack.c.l.b16 %v2786
    %v3441 = vunpack.c.l.b16 %v2787
    %v3442 = vunpack.c.h.b16 %v2787
    %v3443 = vunpack.c.l.b16 %v2788
    %v3444 = vunpack.c.h.b16 %v2788
    %v3445 = vunpack.c.l.b16 %v2789
    %v3446 = vunpack.c.h.b16 %v2789
    %v3447 = vunpack.c.l.b16 %v2790
    %v3448 = vunpack.c.l.b16 %v2791
    %v3449 = vunpack.c.h.b16 %v2791
    %v3450 = vunpack.c.l.b16 %v2792
    %v3451 = vunpack.c.h.b16 %v2792
    %v3452 = vunpack.c.l.b16 %v2793
    %v3453 = vunpack.c.h.b16 %v2793
    %v3454 = vunpack.c.l.b16 %v2794
    %v3455 = vunpack.c.l.b16 %v2795
    %v3456 = vunpack.c.h.b16 %v2795
    %v3457 = vunpack.c.l.b16 %v2796
    %v3458 = vunpack.c.h.b16 %v2796
    %v3459 = vunpack.c.l.b16 %v2797
    %v3460 = vunpack.c.h.b16 %v2797
    %v3461 = vunpack.c.l.b16 %v2798
    %v3462 = vunpack.c.l.b16 %v2799
    %v3463 = vunpack.c.h.b16 %v2799
    %v3464 = vunpack.c.l.b16 %v2800
    %v3465 = vunpack.c.h.b16 %v2800
    %v3466 = vunpack.c.l.b16 %v2801
    %v3467 = vunpack.c.h.b16 %v2801
    %v3468 = vunpack.c.l.b16 %v2802
    %v3469 = vunpack.c.l.b16 %v2803
    %v3470 = vunpack.c.h.b16 %v2803
    %v3471 = vunpack.c.l.b16 %v2804
    %v3472 = vunpack.c.h.b16 %v2804
    %v3473 = vunpack.c.l.b16 %v2805
    %v3474 = vunpack.c.h.b16 %v2805
    %v3475 = vunpack.c.l.b16 %v2806
    %v3476 = vunpack.c.l.b16 %v2807
    %v3477 = vunpack.c.h.b16 %v2807
    %v3478 = vunpack.c.l.b16 %v2808
    %v3479 = vunpack.c.h.b16 %v2808
    %v3480 = vunpack.c.l.b16 %v2809
    %v3481 = vunpack.c.h.b16 %v2809
    %v3482 = vunpack.c.l.b16 %v2810
    %v3483 = vunpack.c.l.b16 %v2811
    %v3484 = vunpack.c.h.b16 %v2811
    %v3485 = vunpack.c.l.b16 %v2812
    %v3486 = vunpack.c.h.b16 %v2812
    %v3487 = vunpack.c.l.b16 %v2813
    %v3488 = vunpack.c.h.b16 %v2813
    %v3489 = vunpack.c.l.b16 %v2814
    %v3490 = vunpack.c.l.b16 %v2815
    %v3491 = vunpack.c.h.b16 %v2815
    %v3492 = vunpack.c.l.b16 %v2816
    %v3493 = vunpack.c.h.b16 %v2816
    %v3494 = vunpack.c.l.b16 %v2817
    %v3495 = vunpack.c.h.b16 %v2817
    %v3496 = vunpack.c.l.b16 %v2818
    %v3497 = vunpack.c.l.b16 %v2819
    %v3498 = vunpack.c.h.b16 %v2819
    %v3499 = vunpack.c.l.b16 %v2820
    %v3500 = vunpack.c.h.b16 %v2820
    %v3501 = vunpack.c.l.b16 %v2821
    %v3502 = vunpack.c.h.b16 %v2821
    %v3503 = vunpack.c.l.b16 %v2822
    %v3504 = vunpack.c.l.b16 %v2823
    %v3505 = vunpack.c.h.b16 %v2823
    %v3506 = vunpack.c.l.b16 %v2824
    %v3507 = vunpack.c.h.b16 %v2824
    %v3508 = vunpack.c.l.b16 %v2825
    %v3509 = vunpack.c.h.b16 %v2825
    %v3510 = vunpack.c.l.b16 %v2826
    %v3511 = vunpack.c.l.b16 %v2827
    %v3512 = vunpack.c.h.b16 %v2827
    %v3513 = vunpack.c.l.b16 %v2828
    %v3514 = vunpack.c.h.b16 %v2828
    %v3515 = vunpack.c.l.b16 %v2829
    %v3516 = vunpack.c.h.b16 %v2829
    %v3517 = vunpack.c.l.b16 %v2830
    %v3518 = vunpack.c.l.b16 %v2831
    %v3519 = vunpack.c.h.b16 %v2831
    %v3520 = vunpack.c.l.b16 %v2832
    %v3521 = vunpack.c.h.b16 %v2832
    %v3522 = vunpack.c.l.b16 %v2833
    %v3523 = vunpack.c.h.b16 %v2833
    %v3524 = vunpack.c.l.b16 %v2834
    %v3525 = vunpack.c.l.b16 %v2835
    %v3526 = vunpack.c.h.b16 %v2835
    %v3527 = vunpack.c.l.b16 %v2836
    %v3528 = vunpack.c.h.b16 %v2836
    %v3529 = vunpack.c.l.b16 %v2837
    %v3530 = vunpack.c.h.b16 %v2837
    %v3531 = vunpack.c.l.b16 %v2838
    %v3532 = vunpack.c.l.b16 %v2839
    %v3533 = vunpack.c.h.b16 %v2839
    %v3534 = vunpack.c.l.b16 %v2840
    %v3535 = vunpack.c.h.b16 %v2840
    %v3536 = vunpack.c.l.b16 %v2841
    %v3537 = vunpack.c.h.b16 %v2841
    %v3538 = vunpack.c.l.b16 %v2842
    %v3539 = vunpack.c.l.b16 %v2843
    %v3540 = vunpack.c.h.b16 %v2843
    %v3541 = vunpack.c.l.b16 %v2844
    %v3542 = vunpack.c.h.b16 %v2844
    %v3543 = vunpack.c.l.b16 %v2845
    %v3544 = vunpack.c.h.b16 %v2845
    %v3545 = vunpack.c.l.b16 %v2846
    %v3546 = vunpack.c.l.b16 %v2847
    %v3547 = vunpack.c.h.b16 %v2847
    %v3548 = vunpack.c.l.b16 %v2848
    %v3549 = vunpack.c.h.b16 %v2848
    %v3550 = vunpack.c.l.b16 %v2849
    %v3551 = vunpack.c.h.b16 %v2849
    %v3552 = vunpack.c.l.b16 %v2850
    %v3553 = vunpack.c.l.b16 %v2851
    %v3554 = vunpack.c.h.b16 %v2851
    %v3555 = vunpack.c.l.b16 %v2852
    %v3556 = vunpack.c.h.b16 %v2852
    %v3557 = vunpack.c.l.b16 %v2853
    %v3558 = vunpack.c.h.b16 %v2853
    %v3559 = vunpack.c.l.b16 %v2854
    %v3560 = vunpack.c.l.b16 %v2855
    %v3561 = vunpack.c.h.b16 %v2855
    %v3562 = vunpack.c.l.b16 %v2856
    %v3563 = vunpack.c.h.b16 %v2856
    %v3564 = vunpack.c.l.b16 %v2857
    %v3565 = vunpack.c.h.b16 %v2857
    %v3566 = vunpack.c.l.b16 %v2858
    %v3567 = vunpack.c.l.b16 %v2859
    %v3568 = vunpack.c.h.b16 %v2859
    %v3569 = vunpack.c.l.b16 %v2860
    %v3570 = vunpack.c.h.b16 %v2860
    %v3571 = vunpack.c.l.b16 %v2861
    %v3572 = vunpack.c.h.b16 %v2861
    %v3573 = vunpack.c.l.b16 %v2862
    %v3574 = vunpack.c.l.b16 %v2863
    %v3575 = vunpack.c.h.b16 %v2863
    %v3576 = vunpack.c.l.b16 %v2864
    %v3577 = vunpack.c.h.b16 %v2864
    %v3578 = vunpack.c.l.b16 %v2865
    %v3579 = vunpack.c.h.b16 %v2865
    %v3580 = vunpack.c.l.b16 %v2866
    %v3581 = vunpack.c.l.b16 %v2867
    %v3582 = vunpack.c.h.b16 %v2867
    %v3583 = vunpack.c.l.b16 %v2868
    %v3584 = vunpack.c.h.b16 %v2868
    %v3585 = vunpack.c.l.b16 %v2869
    %v3586 = vunpack.c.h.b16 %v2869
    %v3587 = vunpack.c.l.b16 %v2870
    %v3588 = vunpack.c.l.b16 %v2871
    %v3589 = vunpack.c.h.b16 %v2871
    %v3590 = vunpack.c.l.b16 %v2872
    %v3591 = vunpack.c.h.b16 %v2872
    %v3592 = vunpack.c.l.b16 %v2873
    %v3593 = vunpack.c.h.b16 %v2873
    %v3594 = vunpack.c.l.b16 %v2874
    %v3595 = vpack.c.b16 %v3154, %v3147
    %v3596 = vpack.c.b16 %v3155, %v3148
    %v3597 = vpack.c.b16 %v3156, %v3149
    %v3598 = vpack.c.b16 %v3157, %v3150
    %v3599 = vpack.c.b16 %v3158, %v3151
    %v3600 = vpack.c.b16 %v3159, %v3152
    %v3601 = vpack.c.b16 %v3160, %v3153
    %v3602 = vpack.c.b16 %v3168, %v3161
    %v3603 = vpack.c.b16 %v3169, %v3162
    %v3604 = vpack.c.b16 %v3170, %v3163
    %v3605 = vpack.c.b16 %v3171, %v3164
    %v3606 = vpack.c.b16 %v3172, %v3165
    %v3607 = vpack.c.b16 %v3173, %v3166
    %v3608 = vpack.c.b16 %v3174, %v3167
    %v3609 = vpack.c.b16 %v3182, %v3175
    %v3610 = vpack.c.b16 %v3183, %v3176
    %v3611 = vpack.c.b16 %v3184, %v3177
    %v3612 = vpack.c.b16 %v3185, %v3178
    %v3613 = vpack.c.b16 %v3186, %v3179
    %v3614 = vpack.c.b16 %v3187, %v3180
    %v3615 = vpack.c.b16 %v3188, %v3181
    %v3616 = vpack.c.b16 %v3196, %v3189
    %v3617 = vpack.c.b16 %v3197, %v3190
    %v3618 = vpack.c.b16 %v3198, %v3191
    %v3619 = vpack.c.b16 %v3199, %v3192
    %v3620 = vpack.c.b16 %v3200, %v3193
    %v3621 = vpack.c.b16 %v3201, %v3194
    %v3622 = vpack.c.b16 %v3202, %v3195
    %v3623 = vpack.c.b16 %v3210, %v3203
    %v3624 = vpack.c.b16 %v3211, %v3204
    %v3625 = vpack.c.b16 %v3212, %v3205
    %v3626 = vpack.c.b16 %v3213, %v3206
    %v3627 = vpack.c.b16 %v3214, %v3207
    %v3628 = vpack.c.b16 %v3215, %v3208
    %v3629 = vpack.c.b16 %v3216, %v3209
    %v3630 = vpack.c.b16 %v3224, %v3217
    %v3631 = vpack.c.b16 %v3225, %v3218
    %v3632 = vpack.c.b16 %v3226, %v3219
    %v3633 = vpack.c.b16 %v3227, %v3220
    %v3634 = vpack.c.b16 %v3228, %v3221
    %v3635 = vpack.c.b16 %v3229, %v3222
    %v3636 = vpack.c.b16 %v3230, %v3223
    %v3637 = vpack.c.b16 %v3238, %v3231
    %v3638 = vpack.c.b16 %v3239, %v3232
    %v3639 = vpack.c.b16 %v3240, %v3233
    %v3640 = vpack.c.b16 %v3241, %v3234
    %v3641 = vpack.c.b16 %v3242, %v3235
    %v3642 = vpack.c.b16 %v3243, %v3236
    %v3643 = vpack.c.b16 %v3244, %v3237
    %v3644 = vpack.c.b16 %v3252, %v3245
    %v3645 = vpack.c.b16 %v3253, %v3246
    %v3646 = vpack.c.b16 %v3254, %v3247
    %v3647 = vpack.c.b16 %v3255, %v3248
    %v3648 = vpack.c.b16 %v3256, %v3249
    %v3649 = vpack.c.b16 %v3257, %v3250
    %v3650 = vpack.c.b16 %v3258, %v3251
    %v3651 = vpack.c.b16 %v3266, %v3259
    %v3652 = vpack.c.b16 %v3267, %v3260
    %v3653 = vpack.c.b16 %v3268, %v3261
    %v3654 = vpack.c.b16 %v3269, %v3262
    %v3655 = vpack.c.b16 %v3270, %v3263
    %v3656 = vpack.c.b16 %v3271, %v3264
    %v3657 = vpack.c.b16 %v3272, %v3265
    %v3658 = vpack.c.b16 %v3280, %v3273
    %v3659 = vpack.c.b16 %v3281, %v3274
    %v3660 = vpack.c.b16 %v3282, %v3275
    %v3661 = vpack.c.b16 %v3283, %v3276
    %v3662 = vpack.c.b16 %v3284, %v3277
    %v3663 = vpack.c.b16 %v3285, %v3278
    %v3664 = vpack.c.b16 %v3286, %v3279
    %v3665 = vpack.c.b16 %v3294, %v3287
    %v3666 = vpack.c.b16 %v3295, %v3288
    %v3667 = vpack.c.b16 %v3296, %v3289
    %v3668 = vpack.c.b16 %v3297, %v3290
    %v3669 = vpack.c.b16 %v3298, %v3291
    %v3670 = vpack.c.b16 %v3299, %v3292
    %v3671 = vpack.c.b16 %v3300, %v3293
    %v3672 = vpack.c.b16 %v3308, %v3301
    %v3673 = vpack.c.b16 %v3309, %v3302
    %v3674 = vpack.c.b16 %v3310, %v3303
    %v3675 = vpack.c.b16 %v3311, %v3304
    %v3676 = vpack.c.b16 %v3312, %v3305
    %v3677 = vpack.c.b16 %v3313, %v3306
    %v3678 = vpack.c.b16 %v3314, %v3307
    %v3679 = vpack.c.b16 %v3322, %v3315
    %v3680 = vpack.c.b16 %v3323, %v3316
    %v3681 = vpack.c.b16 %v3324, %v3317
    %v3682 = vpack.c.b16 %v3325, %v3318
    %v3683 = vpack.c.b16 %v3326, %v3319
    %v3684 = vpack.c.b16 %v3327, %v3320
    %v3685 = vpack.c.b16 %v3328, %v3321
    %v3686 = vpack.c.b16 %v3336, %v3329
    %v3687 = vpack.c.b16 %v3337, %v3330
    %v3688 = vpack.c.b16 %v3338, %v3331
    %v3689 = vpack.c.b16 %v3339, %v3332
    %v3690 = vpack.c.b16 %v3340, %v3333
    %v3691 = vpack.c.b16 %v3341, %v3334
    %v3692 = vpack.c.b16 %v3342, %v3335
    %v3693 = vpack.c.b16 %v3350, %v3343
    %v3694 = vpack.c.b16 %v3351, %v3344
    %v3695 = vpack.c.b16 %v3352, %v3345
    %v3696 = vpack.c.b16 %v3353, %v3346
    %v3697 = vpack.c.b16 %v3354, %v3347
    %v3698 = vpack.c.b16 %v3355, %v3348
    %v3699 = vpack.c.b16 %v3356, %v3349
    %v3700 = vpack.c.b16 %v3364, %v3357
    %v3701 = vpack.c.b16 %v3365, %v3358
    %v3702 = vpack.c.b16 %v3366, %v3359
    %v3703 = vpack.c.b16 %v3367, %v3360
    %v3704 = vpack.c.b16 %v3368, %v3361
    %v3705 = vpack.c.b16 %v3369, %v3362
    %v3706 = vpack.c.b16 %v3370, %v3363
    %v3707 = vpack.c.b16 %v3378, %v3371
    %v3708 = vpack.c.b16 %v3379, %v3372
    %v3709 = vpack.c.b16 %v3380, %v3373
    %v3710 = vpack.c.b16 %v3381, %v3374
    %v3711 = vpack.c.b16 %v3382, %v3375
    %v3712 = vpack.c.b16 %v3383, %v3376
    %v3713 = vpack.c.b16 %v3384, %v3377
    %v3714 = vpack.c.b16 %v3392, %v3385
    %v3715 = vpack.c.b16 %v3393, %v3386
    %v3716 = vpack.c.b16 %v3394, %v3387
    %v3717 = vpack.c.b16 %v3395, %v3388
    %v3718 = vpack.c.b16 %v3396, %v3389
    %v3719 = vpack.c.b16 %v3397, %v3390
    %v3720 = vpack.c.b16 %v3398, %v3391
    %v3721 = vpack.c.b16 %v3406, %v3399
    %v3722 = vpack.c.b16 %v3407, %v3400
    %v3723 = vpack.c.b16 %v3408, %v3401
    %v3724 = vpack.c.b16 %v3409, %v3402
    %v3725 = vpack.c.b16 %v3410, %v3403
    %v3726 = vpack.c.b16 %v3411, %v3404
    %v3727 = vpack.c.b16 %v3412, %v3405
    %v3728 = vpack.c.b16 %v3420, %v3413
    %v3729 = vpack.c.b16 %v3421, %v3414
    %v3730 = vpack.c.b16 %v3422, %v3415
    %v3731 = vpack.c.b16 %v3423, %v3416
    %v3732 = vpack.c.b16 %v3424, %v3417
    %v3733 = vpack.c.b16 %v3425, %v3418
    %v3734 = vpack.c.b16 %v3426, %v3419
    %v3735 = vpack.c.b16 %v3434, %v3427
    %v3736 = vpack.c.b16 %v3435, %v3428
    %v3737 = vpack.c.b16 %v3436, %v3429
    %v3738 = vpack.c.b16 %v3437, %v3430
    %v3739 = vpack.c.b16 %v3438, %v3431
    %v3740 = vpack.c.b16 %v3439, %v3432
    %v3741 = vpack.c.b16 %v3440, %v3433
    %v3742 = vpack.c.b16 %v3448, %v3441
    %v3743 = vpack.c.b16 %v3449, %v3442
    %v3744 = vpack.c.b16 %v3450, %v3443
    %v3745 = vpack.c.b16 %v3451, %v3444
    %v3746 = vpack.c.b16 %v3452, %v3445
    %v3747 = vpack.c.b16 %v3453, %v3446
    %v3748 = vpack.c.b16 %v3454, %v3447
    %v3749 = vpack.c.b16 %v3462, %v3455
    %v3750 = vpack.c.b16 %v3463, %v3456
    %v3751 = vpack.c.b16 %v3464, %v3457
    %v3752 = vpack.c.b16 %v3465, %v3458
    %v3753 = vpack.c.b16 %v3466, %v3459
    %v3754 = vpack.c.b16 %v3467, %v3460
    %v3755 = vpack.c.b16 %v3468, %v3461
    %v3756 = vpack.c.b16 %v3476, %v3469
    %v3757 = vpack.c.b16 %v3477, %v3470
    %v3758 = vpack.c.b16 %v3478, %v3471
    %v3759 = vpack.c.b16 %v3479, %v3472
    %v3760 = vpack.c.b16 %v3480, %v3473
    %v3761 = vpack.c.b16 %v3481, %v3474
    %v3762 = vpack.c.b16 %v3482, %v3475
    %v3763 = vpack.c.b16 %v3490, %v3483
    %v3764 = vpack.c.b16 %v3491, %v3484
    %v3765 = vpack.c.b16 %v3492, %v3485
    %v3766 = vpack.c.b16 %v3493, %v3486
    %v3767 = vpack.c.b16 %v3494, %v3487
    %v3768 = vpack.c.b16 %v3495, %v3488
    %v3769 = vpack.c.b16 %v3496, %v3489
    %v3770 = vpack.c.b16 %v3504, %v3497
    %v3771 = vpack.c.b16 %v3505, %v3498
    %v3772 = vpack.c.b16 %v3506, %v3499
    %v3773 = vpack.c.b16 %v3507, %v3500
    %v3774 = vpack.c.b16 %v3508, %v3501
    %v3775 = vpack.c.b16 %v3509, %v3502
    %v3776 = vpack.c.b16 %v3510, %v3503
    %v3777 = vpack.c.b16 %v3518, %v3511
    %v3778 = vpack.c.b16 %v3519, %v3512
    %v3779 = vpack.c.b16 %v3520, %v3513
    %v3780 = vpack.c.b16 %v3521, %v3514
    %v3781 = vpack.c.b16 %v3522, %v3515
    %v3782 = vpack.c.b16 %v3523, %v3516
    %v3783 = vpack.c.b16 %v3524, %v3517
    %v3784 = vpack.c.b16 %v3532, %v3525
    %v3785 = vpack.c.b16 %v3533, %v3526
    %v3786 = vpack.c.b16 %v3534, %v3527
    %v3787 = vpack.c.b16 %v3535, %v3528
    %v3788 = vpack.c.b16 %v3536, %v3529
    %v3789 = vpack.c.b16 %v3537, %v3530
    %v3790 = vpack.c.b16 %v3538, %v3531
    %v3791 = vpack.c.b16 %v3546, %v3539
    %v3792 = vpack.c.b16 %v3547, %v3540
    %v3793 = vpack.c.b16 %v3548, %v3541
    %v3794 = vpack.c.b16 %v3549, %v3542
    %v3795 = vpack.c.b16 %v3550, %v3543
    %v3796 = vpack.c.b16 %v3551, %v3544
    %v3797 = vpack.c.b16 %v3552, %v3545
    %v3798 = vpack.c.b16 %v3560, %v3553
    %v3799 = vpack.c.b16 %v3561, %v3554
    %v3800 = vpack.c.b16 %v3562, %v3555
    %v3801 = vpack.c.b16 %v3563, %v3556
    %v3802 = vpack.c.b16 %v3564, %v3557
    %v3803 = vpack.c.b16 %v3565, %v3558
    %v3804 = vpack.c.b16 %v3566, %v3559
    %v3805 = vpack.c.b16 %v3574, %v3567
    %v3806 = vpack.c.b16 %v3575, %v3568
    %v3807 = vpack.c.b16 %v3576, %v3569
    %v3808 = vpack.c.b16 %v3577, %v3570
    %v3809 = vpack.c.b16 %v3578, %v3571
    %v3810 = vpack.c.b16 %v3579, %v3572
    %v3811 = vpack.c.b16 %v3580, %v3573
    %v3812 = vpack.c.b16 %v3588, %v3581
    %v3813 = vpack.c.b16 %v3589, %v3582
    %v3814 = vpack.c.b16 %v3590, %v3583
    %v3815 = vpack.c.b16 %v3591, %v3584
    %v3816 = vpack.c.b16 %v3592, %v3585
    %v3817 = vpack.c.b16 %v3593, %v3586
    %v3818 = vpack.c.b16 %v3594, %v3587
    %4043 = vmatpush.bf16.msra.mxu0 %v3644
    %4044 = vmatpush.bf16.msra.mxu0 %v3637
    %4045 = vmatpush.bf16.msra.mxu0 %v3630
    %4046 = vmatpush.bf16.msra.mxu0 %v3623
    %4047 = vmatpush.bf16.msra.mxu0 %v3616
    %4048 = vmatpush.bf16.msra.mxu0 %v3609
    %4049 = vmatpush.bf16.msra.mxu0 %v3602
    %4050 = vmatpush.bf16.msra.mxu0 %v3595
    %4051 = vmatmul.bf16.gmra.mxu0 %v2615
    %v4052 = vpop.f32.mrf.mxu0
    %v4053 = vadd.f32 %v2877, %v4052
    %v4054 = vpop.f32.mrf.mxu0
    %4055 = vdwg.mxu0
    %4056 = vmatpush.bf16.msra.mxu0 %v3700
    %4057 = vmatpush.bf16.msra.mxu0 %v3693
    %4058 = vmatpush.bf16.msra.mxu0 %v3686
    %4059 = vmatpush.bf16.msra.mxu0 %v3679
    %4060 = vmatpush.bf16.msra.mxu0 %v3672
    %4061 = vmatpush.bf16.msra.mxu0 %v3665
    %4062 = vmatpush.bf16.msra.mxu0 %v3658
    %4063 = vmatpush.bf16.msra.mxu0 %v3651
    %4064 = vmatmul.bf16.gmra.mxu0 %v2616
    %v4065 = vpop.f32.mrf.mxu0
    %v4066 = vadd.f32 %v4053, %v4065
    %v4067 = vpop.f32.mrf.mxu0
    %4068 = vdwg.mxu0
    %4069 = vmatpush.bf16.msra.mxu0 %v3756
    %4070 = vmatpush.bf16.msra.mxu0 %v3749
    %4071 = vmatpush.bf16.msra.mxu0 %v3742
    %4072 = vmatpush.bf16.msra.mxu0 %v3735
    %4073 = vmatpush.bf16.msra.mxu0 %v3728
    %4074 = vmatpush.bf16.msra.mxu0 %v3721
    %4075 = vmatpush.bf16.msra.mxu0 %v3714
    %4076 = vmatpush.bf16.msra.mxu0 %v3707
    %4077 = vmatmul.bf16.gmra.mxu0 %v2617
    %v4078 = vpop.f32.mrf.mxu0
    %v4079 = vadd.f32 %v4066, %v4078
    %v4080 = vpop.f32.mrf.mxu0
    %4081 = vdwg.mxu0
    %4082 = vmatpush.bf16.msra.mxu0 %v3812
    %4083 = vmatpush.bf16.msra.mxu0 %v3805
    %4084 = vmatpush.bf16.msra.mxu0 %v3798
    %4085 = vmatpush.bf16.msra.mxu0 %v3791
    %4086 = vmatpush.bf16.msra.mxu0 %v3784
    %4087 = vmatpush.bf16.msra.mxu0 %v3777
    %4088 = vmatpush.bf16.msra.mxu0 %v3770
    %4089 = vmatpush.bf16.msra.mxu0 %v3763
    %4090 = vmatmul.bf16.gmra.mxu0 %v2618
    %v4091 = vpop.f32.mrf.mxu0
    %v4092 = vadd.f32 %v4079, %v4091
    %v4093 = vpop.f32.mrf.mxu0
    %4094 = vdwg.mxu0
    %4095 = vmatpush.bf16.msra.mxu0 %v3645
    %4096 = vmatpush.bf16.msra.mxu0 %v3638
    %4097 = vmatpush.bf16.msra.mxu0 %v3631
    %4098 = vmatpush.bf16.msra.mxu0 %v3624
    %4099 = vmatpush.bf16.msra.mxu0 %v3617
    %4100 = vmatpush.bf16.msra.mxu0 %v3610
    %4101 = vmatpush.bf16.msra.mxu0 %v3603
    %4102 = vmatpush.bf16.msra.mxu0 %v3596
    %4103 = vmatmul.bf16.gmra.mxu0 %v2615
    %v4104 = vpop.f32.mrf.mxu0
    %v4105 = vadd.f32 %v2878, %v4104
    %v4106 = vpop.f32.mrf.mxu0
    %4107 = vdwg.mxu0
    %4108 = vmatpush.bf16.msra.mxu0 %v3701
    %4109 = vmatpush.bf16.msra.mxu0 %v3694
    %4110 = vmatpush.bf16.msra.mxu0 %v3687
    %4111 = vmatpush.bf16.msra.mxu0 %v3680
    %4112 = vmatpush.bf16.msra.mxu0 %v3673
    %4113 = vmatpush.bf16.msra.mxu0 %v3666
    %4114 = vmatpush.bf16.msra.mxu0 %v3659
    %4115 = vmatpush.bf16.msra.mxu0 %v3652
    %4116 = vmatmul.bf16.gmra.mxu0 %v2616
    %v4117 = vpop.f32.mrf.mxu0
    %v4118 = vadd.f32 %v4105, %v4117
    %v4119 = vpop.f32.mrf.mxu0
    %4120 = vdwg.mxu0
    %4121 = vmatpush.bf16.msra.mxu0 %v3757
    %4122 = vmatpush.bf16.msra.mxu0 %v3750
    %4123 = vmatpush.bf16.msra.mxu0 %v3743
    %4124 = vmatpush.bf16.msra.mxu0 %v3736
    %4125 = vmatpush.bf16.msra.mxu0 %v3729
    %4126 = vmatpush.bf16.msra.mxu0 %v3722
    %4127 = vmatpush.bf16.msra.mxu0 %v3715
    %4128 = vmatpush.bf16.msra.mxu0 %v3708
    %4129 = vmatmul.bf16.gmra.mxu0 %v2617
    %v4130 = vpop.f32.mrf.mxu0
    %v4131 = vadd.f32 %v4118, %v4130
    %v4132 = vpop.f32.mrf.mxu0
    %4133 = vdwg.mxu0
    %4134 = vmatpush.bf16.msra.mxu0 %v3813
    %4135 = vmatpush.bf16.msra.mxu0 %v3806
    %4136 = vmatpush.bf16.msra.mxu0 %v3799
    %4137 = vmatpush.bf16.msra.mxu0 %v3792
    %4138 = vmatpush.bf16.msra.mxu0 %v3785
    %4139 = vmatpush.bf16.msra.mxu0 %v3778
    %4140 = vmatpush.bf16.msra.mxu0 %v3771
    %4141 = vmatpush.bf16.msra.mxu0 %v3764
    %4142 = vmatmul.bf16.gmra.mxu0 %v2618
    %v4143 = vpop.f32.mrf.mxu0
    %v4144 = vadd.f32 %v4131, %v4143
    %v4145 = vpop.f32.mrf.mxu0
    %4146 = vdwg.mxu0
    %4147 = vmatpush.bf16.msra.mxu0 %v3646
    %4148 = vmatpush.bf16.msra.mxu0 %v3639
    %4149 = vmatpush.bf16.msra.mxu0 %v3632
    %4150 = vmatpush.bf16.msra.mxu0 %v3625
    %4151 = vmatpush.bf16.msra.mxu0 %v3618
    %4152 = vmatpush.bf16.msra.mxu0 %v3611
    %4153 = vmatpush.bf16.msra.mxu0 %v3604
    %4154 = vmatpush.bf16.msra.mxu0 %v3597
    %4155 = vmatmul.bf16.gmra.mxu0 %v2615
    %v4156 = vpop.f32.mrf.mxu0
    %v4157 = vadd.f32 %v2879, %v4156
    %v4158 = vpop.f32.mrf.mxu0
    %4159 = vdwg.mxu0
    %4160 = vmatpush.bf16.msra.mxu0 %v3702
    %4161 = vmatpush.bf16.msra.mxu0 %v3695
    %4162 = vmatpush.bf16.msra.mxu0 %v3688
    %4163 = vmatpush.bf16.msra.mxu0 %v3681
    %4164 = vmatpush.bf16.msra.mxu0 %v3674
    %4165 = vmatpush.bf16.msra.mxu0 %v3667
    %4166 = vmatpush.bf16.msra.mxu0 %v3660
    %4167 = vmatpush.bf16.msra.mxu0 %v3653
    %4168 = vmatmul.bf16.gmra.mxu0 %v2616
    %v4169 = vpop.f32.mrf.mxu0
    %v4170 = vadd.f32 %v4157, %v4169
    %v4171 = vpop.f32.mrf.mxu0
    %4172 = vdwg.mxu0
    %4173 = vmatpush.bf16.msra.mxu0 %v3758
    %4174 = vmatpush.bf16.msra.mxu0 %v3751
    %4175 = vmatpush.bf16.msra.mxu0 %v3744
    %4176 = vmatpush.bf16.msra.mxu0 %v3737
    %4177 = vmatpush.bf16.msra.mxu0 %v3730
    %4178 = vmatpush.bf16.msra.mxu0 %v3723
    %4179 = vmatpush.bf16.msra.mxu0 %v3716
    %4180 = vmatpush.bf16.msra.mxu0 %v3709
    %4181 = vmatmul.bf16.gmra.mxu0 %v2617
    %v4182 = vpop.f32.mrf.mxu0
    %v4183 = vadd.f32 %v4170, %v4182
    %v4184 = vpop.f32.mrf.mxu0
    %4185 = vdwg.mxu0
    %4186 = vmatpush.bf16.msra.mxu0 %v3814
    %4187 = vmatpush.bf16.msra.mxu0 %v3807
    %4188 = vmatpush.bf16.msra.mxu0 %v3800
    %4189 = vmatpush.bf16.msra.mxu0 %v3793
    %4190 = vmatpush.bf16.msra.mxu0 %v3786
    %4191 = vmatpush.bf16.msra.mxu0 %v3779
    %4192 = vmatpush.bf16.msra.mxu0 %v3772
    %4193 = vmatpush.bf16.msra.mxu0 %v3765
    %4194 = vmatmul.bf16.gmra.mxu0 %v2618
    %v4195 = vpop.f32.mrf.mxu0
    %v4196 = vadd.f32 %v4183, %v4195
    %v4197 = vpop.f32.mrf.mxu0
    %4198 = vdwg.mxu0
    %4199 = vmatpush.bf16.msra.mxu0 %v3647
    %4200 = vmatpush.bf16.msra.mxu0 %v3640
    %4201 = vmatpush.bf16.msra.mxu0 %v3633
    %4202 = vmatpush.bf16.msra.mxu0 %v3626
    %4203 = vmatpush.bf16.msra.mxu0 %v3619
    %4204 = vmatpush.bf16.msra.mxu0 %v3612
    %4205 = vmatpush.bf16.msra.mxu0 %v3605
    %4206 = vmatpush.bf16.msra.mxu0 %v3598
    %4207 = vmatmul.bf16.gmra.mxu0 %v2615
    %v4208 = vpop.f32.mrf.mxu0
    %v4209 = vadd.f32 %v2880, %v4208
    %v4210 = vpop.f32.mrf.mxu0
    %4211 = vdwg.mxu0
    %4212 = vmatpush.bf16.msra.mxu0 %v3703
    %4213 = vmatpush.bf16.msra.mxu0 %v3696
    %4214 = vmatpush.bf16.msra.mxu0 %v3689
    %4215 = vmatpush.bf16.msra.mxu0 %v3682
    %4216 = vmatpush.bf16.msra.mxu0 %v3675
    %4217 = vmatpush.bf16.msra.mxu0 %v3668
    %4218 = vmatpush.bf16.msra.mxu0 %v3661
    %4219 = vmatpush.bf16.msra.mxu0 %v3654
    %4220 = vmatmul.bf16.gmra.mxu0 %v2616
    %v4221 = vpop.f32.mrf.mxu0
    %v4222 = vadd.f32 %v4209, %v4221
    %v4223 = vpop.f32.mrf.mxu0
    %4224 = vdwg.mxu0
    %4225 = vmatpush.bf16.msra.mxu0 %v3759
    %4226 = vmatpush.bf16.msra.mxu0 %v3752
    %4227 = vmatpush.bf16.msra.mxu0 %v3745
    %4228 = vmatpush.bf16.msra.mxu0 %v3738
    %4229 = vmatpush.bf16.msra.mxu0 %v3731
    %4230 = vmatpush.bf16.msra.mxu0 %v3724
    %4231 = vmatpush.bf16.msra.mxu0 %v3717
    %4232 = vmatpush.bf16.msra.mxu0 %v3710
    %4233 = vmatmul.bf16.gmra.mxu0 %v2617
    %v4234 = vpop.f32.mrf.mxu0
    %v4235 = vadd.f32 %v4222, %v4234
    %v4236 = vpop.f32.mrf.mxu0
    %4237 = vdwg.mxu0
    %4238 = vmatpush.bf16.msra.mxu0 %v3815
    %4239 = vmatpush.bf16.msra.mxu0 %v3808
    %4240 = vmatpush.bf16.msra.mxu0 %v3801
    %4241 = vmatpush.bf16.msra.mxu0 %v3794
    %4242 = vmatpush.bf16.msra.mxu0 %v3787
    %4243 = vmatpush.bf16.msra.mxu0 %v3780
    %4244 = vmatpush.bf16.msra.mxu0 %v3773
    %4245 = vmatpush.bf16.msra.mxu0 %v3766
    %4246 = vmatmul.bf16.gmra.mxu0 %v2618
    %v4247 = vpop.f32.mrf.mxu0
    %v4248 = vadd.f32 %v4235, %v4247
    %v4249 = vpop.f32.mrf.mxu0
    %4250 = vdwg.mxu0
    %4251 = vmatpush.bf16.msra.mxu0 %v3648
    %4252 = vmatpush.bf16.msra.mxu0 %v3641
    %4253 = vmatpush.bf16.msra.mxu0 %v3634
    %4254 = vmatpush.bf16.msra.mxu0 %v3627
    %4255 = vmatpush.bf16.msra.mxu0 %v3620
    %4256 = vmatpush.bf16.msra.mxu0 %v3613
    %4257 = vmatpush.bf16.msra.mxu0 %v3606
    %4258 = vmatpush.bf16.msra.mxu0 %v3599
    %4259 = vmatmul.bf16.gmra.mxu0 %v2615
    %v4260 = vpop.f32.mrf.mxu0
    %v4261 = vadd.f32 %v2881, %v4260
    %v4262 = vpop.f32.mrf.mxu0
    %4263 = vdwg.mxu0
    %4264 = vmatpush.bf16.msra.mxu0 %v3704
    %4265 = vmatpush.bf16.msra.mxu0 %v3697
    %4266 = vmatpush.bf16.msra.mxu0 %v3690
    %4267 = vmatpush.bf16.msra.mxu0 %v3683
    %4268 = vmatpush.bf16.msra.mxu0 %v3676
    %4269 = vmatpush.bf16.msra.mxu0 %v3669
    %4270 = vmatpush.bf16.msra.mxu0 %v3662
    %4271 = vmatpush.bf16.msra.mxu0 %v3655
    %4272 = vmatmul.bf16.gmra.mxu0 %v2616
    %v4273 = vpop.f32.mrf.mxu0
    %v4274 = vadd.f32 %v4261, %v4273
    %v4275 = vpop.f32.mrf.mxu0
    %4276 = vdwg.mxu0
    %4277 = vmatpush.bf16.msra.mxu0 %v3760
    %4278 = vmatpush.bf16.msra.mxu0 %v3753
    %4279 = vmatpush.bf16.msra.mxu0 %v3746
    %4280 = vmatpush.bf16.msra.mxu0 %v3739
    %4281 = vmatpush.bf16.msra.mxu0 %v3732
    %4282 = vmatpush.bf16.msra.mxu0 %v3725
    %4283 = vmatpush.bf16.msra.mxu0 %v3718
    %4284 = vmatpush.bf16.msra.mxu0 %v3711
    %4285 = vmatmul.bf16.gmra.mxu0 %v2617
    %v4286 = vpop.f32.mrf.mxu0
    %v4287 = vadd.f32 %v4274, %v4286
    %v4288 = vpop.f32.mrf.mxu0
    %4289 = vdwg.mxu0
    %4290 = vmatpush.bf16.msra.mxu0 %v3816
    %4291 = vmatpush.bf16.msra.mxu0 %v3809
    %4292 = vmatpush.bf16.msra.mxu0 %v3802
    %4293 = vmatpush.bf16.msra.mxu0 %v3795
    %4294 = vmatpush.bf16.msra.mxu0 %v3788
    %4295 = vmatpush.bf16.msra.mxu0 %v3781
    %4296 = vmatpush.bf16.msra.mxu0 %v3774
    %4297 = vmatpush.bf16.msra.mxu0 %v3767
    %4298 = vmatmul.bf16.gmra.mxu0 %v2618
    %v4299 = vpop.f32.mrf.mxu0
    %v4300 = vadd.f32 %v4287, %v4299
    %v4301 = vpop.f32.mrf.mxu0
    %4302 = vdwg.mxu0
    %4303 = vmatpush.bf16.msra.mxu0 %v3649
    %4304 = vmatpush.bf16.msra.mxu0 %v3642
    %4305 = vmatpush.bf16.msra.mxu0 %v3635
    %4306 = vmatpush.bf16.msra.mxu0 %v3628
    %4307 = vmatpush.bf16.msra.mxu0 %v3621
    %4308 = vmatpush.bf16.msra.mxu0 %v3614
    %4309 = vmatpush.bf16.msra.mxu0 %v3607
    %4310 = vmatpush.bf16.msra.mxu0 %v3600
    %4311 = vmatmul.bf16.gmra.mxu0 %v2615
    %v4312 = vpop.f32.mrf.mxu0
    %v4313 = vadd.f32 %v2882, %v4312
    %v4314 = vpop.f32.mrf.mxu0
    %4315 = vdwg.mxu0
    %4316 = vmatpush.bf16.msra.mxu0 %v3705
    %4317 = vmatpush.bf16.msra.mxu0 %v3698
    %4318 = vmatpush.bf16.msra.mxu0 %v3691
    %4319 = vmatpush.bf16.msra.mxu0 %v3684
    %4320 = vmatpush.bf16.msra.mxu0 %v3677
    %4321 = vmatpush.bf16.msra.mxu0 %v3670
    %4322 = vmatpush.bf16.msra.mxu0 %v3663
    %4323 = vmatpush.bf16.msra.mxu0 %v3656
    %4324 = vmatmul.bf16.gmra.mxu0 %v2616
    %v4325 = vpop.f32.mrf.mxu0
    %v4326 = vadd.f32 %v4313, %v4325
    %v4327 = vpop.f32.mrf.mxu0
    %4328 = vdwg.mxu0
    %4329 = vmatpush.bf16.msra.mxu0 %v3761
    %4330 = vmatpush.bf16.msra.mxu0 %v3754
    %4331 = vmatpush.bf16.msra.mxu0 %v3747
    %4332 = vmatpush.bf16.msra.mxu0 %v3740
    %4333 = vmatpush.bf16.msra.mxu0 %v3733
    %4334 = vmatpush.bf16.msra.mxu0 %v3726
    %4335 = vmatpush.bf16.msra.mxu0 %v3719
    %4336 = vmatpush.bf16.msra.mxu0 %v3712
    %4337 = vmatmul.bf16.gmra.mxu0 %v2617
    %v4338 = vpop.f32.mrf.mxu0
    %v4339 = vadd.f32 %v4326, %v4338
    %v4340 = vpop.f32.mrf.mxu0
    %4341 = vdwg.mxu0
    %4342 = vmatpush.bf16.msra.mxu0 %v3817
    %4343 = vmatpush.bf16.msra.mxu0 %v3810
    %4344 = vmatpush.bf16.msra.mxu0 %v3803
    %4345 = vmatpush.bf16.msra.mxu0 %v3796
    %4346 = vmatpush.bf16.msra.mxu0 %v3789
    %4347 = vmatpush.bf16.msra.mxu0 %v3782
    %4348 = vmatpush.bf16.msra.mxu0 %v3775
    %4349 = vmatpush.bf16.msra.mxu0 %v3768
    %4350 = vmatmul.bf16.gmra.mxu0 %v2618
    %v4351 = vpop.f32.mrf.mxu0
    %v4352 = vadd.f32 %v4339, %v4351
    %v4353 = vpop.f32.mrf.mxu0
    %4354 = vdwg.mxu0
    %4355 = vmatpush.bf16.msra.mxu0 %v3650
    %4356 = vmatpush.bf16.msra.mxu0 %v3643
    %4357 = vmatpush.bf16.msra.mxu0 %v3636
    %4358 = vmatpush.bf16.msra.mxu0 %v3629
    %4359 = vmatpush.bf16.msra.mxu0 %v3622
    %4360 = vmatpush.bf16.msra.mxu0 %v3615
    %4361 = vmatpush.bf16.msra.mxu0 %v3608
    %4362 = vmatpush.bf16.msra.mxu0 %v3601
    %4363 = vmatmul.bf16.gmra.mxu0 %v2615
    %v4364 = vpop.f32.mrf.mxu0
    %v4365 = vadd.f32 %v2883, %v4364
    %v4366 = vpop.f32.mrf.mxu0
    %4367 = vdwg.mxu0
    %4368 = vmatpush.bf16.msra.mxu0 %v3706
    %4369 = vmatpush.bf16.msra.mxu0 %v3699
    %4370 = vmatpush.bf16.msra.mxu0 %v3692
    %4371 = vmatpush.bf16.msra.mxu0 %v3685
    %4372 = vmatpush.bf16.msra.mxu0 %v3678
    %4373 = vmatpush.bf16.msra.mxu0 %v3671
    %4374 = vmatpush.bf16.msra.mxu0 %v3664
    %4375 = vmatpush.bf16.msra.mxu0 %v3657
    %4376 = vmatmul.bf16.gmra.mxu0 %v2616
    %v4377 = vpop.f32.mrf.mxu0
    %v4378 = vadd.f32 %v4365, %v4377
    %v4379 = vpop.f32.mrf.mxu0
    %4380 = vdwg.mxu0
    %4381 = vmatpush.bf16.msra.mxu0 %v3762
    %4382 = vmatpush.bf16.msra.mxu0 %v3755
    %4383 = vmatpush.bf16.msra.mxu0 %v3748
    %4384 = vmatpush.bf16.msra.mxu0 %v3741
    %4385 = vmatpush.bf16.msra.mxu0 %v3734
    %4386 = vmatpush.bf16.msra.mxu0 %v3727
    %4387 = vmatpush.bf16.msra.mxu0 %v3720
    %4388 = vmatpush.bf16.msra.mxu0 %v3713
    %4389 = vmatmul.bf16.gmra.mxu0 %v2617
    %v4390 = vpop.f32.mrf.mxu0
    %v4391 = vadd.f32 %v4378, %v4390
    %v4392 = vpop.f32.mrf.mxu0
    %4393 = vdwg.mxu0
    %4394 = vmatpush.bf16.msra.mxu0 %v3818
    %4395 = vmatpush.bf16.msra.mxu0 %v3811
    %4396 = vmatpush.bf16.msra.mxu0 %v3804
    %4397 = vmatpush.bf16.msra.mxu0 %v3797
    %4398 = vmatpush.bf16.msra.mxu0 %v3790
    %4399 = vmatpush.bf16.msra.mxu0 %v3783
    %4400 = vmatpush.bf16.msra.mxu0 %v3776
    %4401 = vmatpush.bf16.msra.mxu0 %v3769
    %4402 = vmatmul.bf16.gmra.mxu0 %v2618
    %v4403 = vpop.f32.mrf.mxu0
    %v4404 = vadd.f32 %v4391, %v4403
    %v4405 = vpop.f32.mrf.mxu0
    %4406 = vdwg.mxu0
    %v4407 = vxor.u32 %v4092, 2147483648
    %v4408 = vxor.u32 %v4144, 2147483648
    %v4409 = vxor.u32 %v4196, 2147483648
    %v4410 = vxor.u32 %v4248, 2147483648
    %v4411 = vxor.u32 %v4300, 2147483648
    %v4412 = vxor.u32 %v4352, 2147483648
    %v4413 = vxor.u32 %v4404, 2147483648
    %v4414 = vmul.f32 %v4407, 1.442695
    %v4415 = vpow.pop %v4414
    %v4416 = vmul.f32 %v4408, 1.442695
    %v4417 = vpow.pop %v4416
    %v4418 = vmul.f32 %v4409, 1.442695
    %v4419 = vpow.pop %v4418
    %v4420 = vmul.f32 %v4410, 1.442695
    %v4421 = vpow.pop %v4420
    %v4422 = vmul.f32 %v4411, 1.442695
    %v4423 = vpow.pop %v4422
    %v4424 = vmul.f32 %v4412, 1.442695
    %v4425 = vpow.pop %v4424
    %v4426 = vmul.f32 %v4413, 1.442695
    %v4427 = vpow.pop %v4426
    %v4428 = vadd.f32 %v4415, 1.0
    %v4429 = vadd.f32 %v4417, 1.0
    %v4430 = vadd.f32 %v4419, 1.0
    %v4431 = vadd.f32 %v4421, 1.0
    %v4432 = vadd.f32 %v4423, 1.0
    %v4433 = vadd.f32 %v4425, 1.0
    %v4434 = vadd.f32 %v4427, 1.0
    %v4435 = vrcp.pop %v4428
    %v4436 = vmul.f32 %v4428, %v4435
    %v4437 = vsub.f32 1.0, %v4436
    %v4438 = vmul.f32 %v4435, %v4437
    %v4439 = vadd.f32 %v4435, %v4438
    %vm4440 = vweird.f32 %v4428
    %vm4441 = vweird.f32 %v4435
    %vm4442 = vmor %vm4440, %vm4441
    %v4443 = vsel %vm4442, %v4435, %v4439
    %v4444 = vand.u32 2147483647, %v4428
    %vm4445 = vcmp.eq.f32.partialorder %v4444, 8.507059e+37
    %v4446 = vand.u32 %v4428, 2147483648
    %v4447 = vor.u32 1.1754944e-38, %v4446
    %v4448 = vsel %vm4445, %v4447, %v4443
    %v4449 = vmul.f32 1.0, %v4448
    %v4450 = vrcp.pop %v4429
    %v4451 = vmul.f32 %v4429, %v4450
    %v4452 = vsub.f32 1.0, %v4451
    %v4453 = vmul.f32 %v4450, %v4452
    %v4454 = vadd.f32 %v4450, %v4453
    %vm4455 = vweird.f32 %v4429
    %vm4456 = vweird.f32 %v4450
    %vm4457 = vmor %vm4455, %vm4456
    %v4458 = vsel %vm4457, %v4450, %v4454
    %v4459 = vand.u32 2147483647, %v4429
    %vm4460 = vcmp.eq.f32.partialorder %v4459, 8.507059e+37
    %v4461 = vand.u32 %v4429, 2147483648
    %v4462 = vor.u32 1.1754944e-38, %v4461
    %v4463 = vsel %vm4460, %v4462, %v4458
    %v4464 = vmul.f32 1.0, %v4463
    %v4465 = vrcp.pop %v4430
    %v4466 = vmul.f32 %v4430, %v4465
    %v4467 = vsub.f32 1.0, %v4466
    %v4468 = vmul.f32 %v4465, %v4467
    %v4469 = vadd.f32 %v4465, %v4468
    %vm4470 = vweird.f32 %v4430
    %vm4471 = vweird.f32 %v4465
    %vm4472 = vmor %vm4470, %vm4471
    %v4473 = vsel %vm4472, %v4465, %v4469
    %v4474 = vand.u32 2147483647, %v4430
    %vm4475 = vcmp.eq.f32.partialorder %v4474, 8.507059e+37
    %v4476 = vand.u32 %v4430, 2147483648
    %v4477 = vor.u32 1.1754944e-38, %v4476
    %v4478 = vsel %vm4475, %v4477, %v4473
    %v4479 = vmul.f32 1.0, %v4478
    %v4480 = vrcp.pop %v4431
    %v4481 = vmul.f32 %v4431, %v4480
    %v4482 = vsub.f32 1.0, %v4481
    %v4483 = vmul.f32 %v4480, %v4482
    %v4484 = vadd.f32 %v4480, %v4483
    %vm4485 = vweird.f32 %v4431
    %vm4486 = vweird.f32 %v4480
    %vm4487 = vmor %vm4485, %vm4486
    %v4488 = vsel %vm4487, %v4480, %v4484
    %v4489 = vand.u32 2147483647, %v4431
    %vm4490 = vcmp.eq.f32.partialorder %v4489, 8.507059e+37
    %v4491 = vand.u32 %v4431, 2147483648
    %v4492 = vor.u32 1.1754944e-38, %v4491
    %v4493 = vsel %vm4490, %v4492, %v4488
    %v4494 = vmul.f32 1.0, %v4493
    %v4495 = vrcp.pop %v4432
    %v4496 = vmul.f32 %v4432, %v4495
    %v4497 = vsub.f32 1.0, %v4496
    %v4498 = vmul.f32 %v4495, %v4497
    %v4499 = vadd.f32 %v4495, %v4498
    %vm4500 = vweird.f32 %v4432
    %vm4501 = vweird.f32 %v4495
    %vm4502 = vmor %vm4500, %vm4501
    %v4503 = vsel %vm4502, %v4495, %v4499
    %v4504 = vand.u32 2147483647, %v4432
    %vm4505 = vcmp.eq.f32.partialorder %v4504, 8.507059e+37
    %v4506 = vand.u32 %v4432, 2147483648
    %v4507 = vor.u32 1.1754944e-38, %v4506
    %v4508 = vsel %vm4505, %v4507, %v4503
    %v4509 = vmul.f32 1.0, %v4508
    %v4510 = vrcp.pop %v4433
    %v4511 = vmul.f32 %v4433, %v4510
    %v4512 = vsub.f32 1.0, %v4511
    %v4513 = vmul.f32 %v4510, %v4512
    %v4514 = vadd.f32 %v4510, %v4513
    %vm4515 = vweird.f32 %v4433
    %vm4516 = vweird.f32 %v4510
    %vm4517 = vmor %vm4515, %vm4516
    %v4518 = vsel %vm4517, %v4510, %v4514
    %v4519 = vand.u32 2147483647, %v4433
    %vm4520 = vcmp.eq.f32.partialorder %v4519, 8.507059e+37
    %v4521 = vand.u32 %v4433, 2147483648
    %v4522 = vor.u32 1.1754944e-38, %v4521
    %v4523 = vsel %vm4520, %v4522, %v4518
    %v4524 = vmul.f32 1.0, %v4523
    %v4525 = vrcp.pop %v4434
    %v4526 = vmul.f32 %v4434, %v4525
    %v4527 = vsub.f32 1.0, %v4526
    %v4528 = vmul.f32 %v4525, %v4527
    %v4529 = vadd.f32 %v4525, %v4528
    %vm4530 = vweird.f32 %v4434
    %vm4531 = vweird.f32 %v4525
    %vm4532 = vmor %vm4530, %vm4531
    %v4533 = vsel %vm4532, %v4525, %v4529
    %v4534 = vand.u32 2147483647, %v4434
    %vm4535 = vcmp.eq.f32.partialorder %v4534, 8.507059e+37
    %v4536 = vand.u32 %v4434, 2147483648
    %v4537 = vor.u32 1.1754944e-38, %v4536
    %v4538 = vsel %vm4535, %v4537, %v4533
    %v4539 = vmul.f32 1.0, %v4538
    %4540 = vst [vmem:[%s10] sm:$0xff] %v4449
    %4541 = vst [vmem:[%s10 + $0x8] sm:$0xff] %v4464
    %4542 = vst [vmem:[%s10 + $0x10] sm:$0xff] %v4479
    %4543 = vst [vmem:[%s10 + $0x18] sm:$0xff] %v4494
    %4544 = vst [vmem:[%s10 + $0x20] sm:$0xff] %v4509
    %4545 = vst [vmem:[%s10 + $0x28] sm:$0xff] %v4524
    %4546 = vst [vmem:[%s10 + $0x30] sm:$0xff] %v4539
    %4547 = vst [vmem:[%s11] sm:$0xff] %v2295
    %4548 = vst [vmem:[%s12] sm:$0xff] %v2347
    // Predicated region
    $region58: #{beta_vae_forward.1} parent=1 // pred_check
      _
    $region59: #{beta_vae_forward.1} parent=1 // pred_check_branch
      %4550 = sbr.rel (0) target = $region61
    $region60: #{beta_vae_forward.1} parent=1 // pred_region
      _
    $region61: #{beta_vae_forward.1} parent=1 // pred_fallthru
      _
    // Predicated region
    $region62: #{beta_vae_forward.1} parent=1 // pred_check
      _
    $region63: #{beta_vae_forward.1} parent=1 // pred_check_branch
      %4552 = sbr.rel (0) target = $region65
    $region64: #{beta_vae_forward.1} parent=1 // pred_region
      _
    $region65: #{beta_vae_forward.1} parent=1 // pred_fallthru
      _
    // Predicated region
    $region66: #{beta_vae_forward.1} parent=1 // pred_check
      _
    $region67: #{beta_vae_forward.1} parent=1 // pred_check_branch
      %4554 = sbr.rel (0) target = $region69
    $region68: #{beta_vae_forward.1} parent=1 // pred_region
      _
    $region69: #{beta_vae_forward.1} parent=1 // pred_fallthru
      _
    // Predicated region
    $region70: #{beta_vae_forward.1} parent=1 // pred_check
      _
    $region71: #{beta_vae_forward.1} parent=1 // pred_check_branch
      %4556 = sbr.rel (0) target = $region73
    $region72: #{beta_vae_forward.1} parent=1 // pred_region
      _
    $region73: #{beta_vae_forward.1} parent=1 // pred_fallthru
      _
    // Predicated region
    $region74: #{beta_vae_forward.1} parent=1 // pred_check
      _
    $region75: #{beta_vae_forward.1} parent=1 // pred_check_branch
      %4558 = sbr.rel (0) target = $region77
    $region76: #{beta_vae_forward.1} parent=1 // pred_region
      _
    $region77: #{beta_vae_forward.1} parent=1 // pred_fallthru
      _
    // Predicated region
    $region78: #{beta_vae_forward.1} parent=1 // pred_check
      _
    $region79: #{beta_vae_forward.1} parent=1 // pred_check_branch
      %4560 = sbr.rel (0) target = $region81
    $region80: #{beta_vae_forward.1} parent=1 // pred_region
      _
    $region81: #{beta_vae_forward.1} parent=1 // pred_fallthru
      _
    %4561 = vsyncpa [#allocation3], 1
    %4562 = vsyncpa [#allocation5], 1
    %4563 = vsyncpa [#allocation8], 1

</llo_original>
